<compile_context>
chip_gen: v5e
topology: v5e:2x2
jax: 0.10.0
libtpu: 0.0.40
codegen_flags: <defaults>
</compile_context>

<pallas_src>
import math

import jax
import jax.numpy as jnp
from jax.experimental import pallas as pl
from jax.experimental.pallas import tpu as pltpu

_MEXHAT_C = 2.0 / (math.sqrt(3.0) * math.pi ** 0.25)
_BN_EPS = 1e-5


def _mexhat_kan_kernel(x_ref, scale_ref, bias_ref, weight_ref, gamma_ref, beta_ref,
                       o_ref, acc_ref):
    """Grid: axis 0 = out_features tiles ("parallel"), axis 1 = in_features reduction
    ("arbitrary", innermost).  acc_ref is a (B, to) f32 accumulator resident across axis 1."""
    k = pl.program_id(1)

    @pl.when(k == 0)
    def _():
        acc_ref[...] = jnp.zeros_like(acc_ref)

    x = x_ref[...].astype(jnp.float32)            # (B, ti)
    s = scale_ref[...].astype(jnp.float32)        # (to, ti)
    t = bias_ref[...].astype(jnp.float32)         # (to, ti)
    w = weight_ref[...].astype(jnp.float32)       # (to, ti)

    # Exact reciprocal on the small 2D tile only (O*ti divides, not B*O*ti).
    inv_s = 1.0 / s                                               # (to, ti)

    xs = (x[:, None, :] - t[None, :, :]) * inv_s[None, :, :]      # (B, to, ti)
    xs2 = xs * xs
    # Mexican-hat constant C hoisted to the finalize step (distributes over the i-sum).
    psi = (xs2 - 1.0) * jnp.exp(-0.5 * xs2)                       # (B, to, ti)
    acc_ref[...] += jnp.sum(psi * w[None, :, :], axis=-1)         # (B, to)

    @pl.when(k == pl.num_programs(1) - 1)
    def _():
        # BatchNorm1d in training mode: batch mean / biased batch variance, per feature.
        y = _MEXHAT_C * acc_ref[...]                              # (B, to) f32
        mean = jnp.mean(y, axis=0, keepdims=True)                 # (1, to)
        var = jnp.mean((y - mean) ** 2, axis=0, keepdims=True)    # (1, to)
        yhat = (y - mean) * jax.lax.rsqrt(var + _BN_EPS)
        out = yhat * gamma_ref[...] + beta_ref[...]               # broadcast (1, to)
        o_ref[...] = out.astype(o_ref.dtype)


def _pick_in_tile(I):
    """Largest (8,128)-legal reduction tile dividing I, capped at 512."""
    if I % 128 != 0:
        return I                      # full-extent block (always legal)
    for cand in (512, 384, 256, 128):
        if I % cand == 0:
            return cand
    return 128


def mexhat_wavelet_kan_layer(x, scale, bias, weight, gamma, beta, *, ti=None, to=128):
    """x: (B, I); scale/bias/weight: (O, I); gamma/beta: (O,).  Returns (B, O)."""
    B, I = x.shape
    O, I2 = scale.shape
    assert I == I2 and bias.shape == (O, I) and weight.shape == (O, I)
    assert gamma.shape == (O,) and beta.shape == (O,)
    assert to % 128 == 0, "out_features tile must be lane-dense (multiple of 128)"
    if ti is None:
        ti = _pick_in_tile(I)
    if I % ti != 0:
        ti = I                        # fall back to a single full-width reduction block

    # Pad out_features up to a multiple of the (lane-dense) O tile.  Padded features use
    # scale=1, bias=0, weight=0, gamma=1, beta=0 -> their output is exactly 0 and they do
    # not interact with real features (BN stats are per-feature).  Sliced off at the end.
    o_pad = pl.cdiv(O, to) * to
    pad = o_pad - O
    if pad:
        scale_p = jnp.concatenate([scale, jnp.ones((pad, I), scale.dtype)], axis=0)
        bias_p = jnp.concatenate([bias, jnp.zeros((pad, I), bias.dtype)], axis=0)
        weight_p = jnp.concatenate([weight, jnp.zeros((pad, I), weight.dtype)], axis=0)
        gamma_p = jnp.concatenate([gamma, jnp.ones((pad,), gamma.dtype)], axis=0)
        beta_p = jnp.concatenate([beta, jnp.zeros((pad,), beta.dtype)], axis=0)
    else:
        scale_p, bias_p, weight_p, gamma_p, beta_p = scale, bias, weight, gamma, beta

    gamma2 = gamma_p.reshape(1, o_pad)
    beta2 = beta_p.reshape(1, o_pad)

    grid = (o_pad // to, I // ti)

    out = pl.pallas_call(
        _mexhat_kan_kernel,
        out_shape=jax.ShapeDtypeStruct((B, o_pad), x.dtype),
        grid_spec=pltpu.PrefetchScalarGridSpec(
            num_scalar_prefetch=0,
            grid=grid,
            in_specs=[
                pl.BlockSpec((B, ti), lambda oi, k: (0, k)),     # x       (batch not tiled)
                pl.BlockSpec((to, ti), lambda oi, k: (oi, k)),   # scale
                pl.BlockSpec((to, ti), lambda oi, k: (oi, k)),   # bias
                pl.BlockSpec((to, ti), lambda oi, k: (oi, k)),   # weight
                pl.BlockSpec((1, to), lambda oi, k: (0, oi)),    # bn gamma
                pl.BlockSpec((1, to), lambda oi, k: (0, oi)),    # bn beta
            ],
            out_specs=pl.BlockSpec((B, to), lambda oi, k: (0, oi)),
            scratch_shapes=[pltpu.VMEM((B, to), jnp.float32)],
        ),
        compiler_params=pltpu.CompilerParams(
            # O tiles independent (megacore-shardable on v7x); I reduction sequential.
            dimension_semantics=("parallel", "arbitrary"),
            vmem_limit_bytes=48 * 1024 * 1024,
        ),
    )(x, scale_p, bias_p, weight_p, gamma2, beta2)

    return out[:, :O] if pad else out


def _reference(x, scale, bias, weight, gamma, beta):
    """Pure-JAX reference mirroring the PyTorch forward (training-mode BN)."""
    x32 = x.astype(jnp.float32)
    xs = (x32[:, None, :] - bias[None, :, :]) / scale[None, :, :]
    psi = _MEXHAT_C * (xs * xs - 1.0) * jnp.exp(-0.5 * xs * xs)
    y = jnp.sum(psi * weight[None, :, :], axis=-1)
    mean = jnp.mean(y, axis=0, keepdims=True)
    var = jnp.mean((y - mean) ** 2, axis=0, keepdims=True)
    yhat = (y - mean) * jax.lax.rsqrt(var + _BN_EPS)
    return yhat * gamma[None, :] + beta[None, :]


def _make_params(key, in_features, out_features):
    """Deterministic parameter init matching the module's __init__."""
    scale = jnp.ones((out_features, in_features), dtype=jnp.float32)
    bias = jnp.zeros((out_features, in_features), dtype=jnp.float32)
    # kaiming_uniform_(a=sqrt(5)) -> Uniform(-1/sqrt(fan_in), 1/sqrt(fan_in)), fan_in = in_features
    bound = 1.0 / math.sqrt(in_features)
    weight = jax.random.uniform(
        key, (out_features, in_features), dtype=jnp.float32, minval=-bound, maxval=bound
    )
    bn_gamma = jnp.ones((out_features,), dtype=jnp.float32)
    bn_beta = jnp.zeros((out_features,), dtype=jnp.float32)
    return scale, bias, weight, bn_gamma, bn_beta


if __name__ == "__main__":
    key = jax.random.PRNGKey(0)

    # Case 1: small dense KAN layer (single reduction step, O padded to one 128-lane tile).
    k1x, k1w, k2x, k2w = jax.random.split(key, 4)
    batch, in_features, out_features = 8, 256, 32
    x = jax.random.normal(k1x, (batch, in_features), dtype=jnp.float32)
    # perturb scale/bias away from identity so the wavelet argument is nontrivial
    scale, bias, weight, g, b = _make_params(k1w, in_features, out_features)
    scale = scale + 0.1 * jax.random.normal(k1w, scale.shape, dtype=jnp.float32)
    bias = bias + 0.1 * jax.random.normal(k2w, bias.shape, dtype=jnp.float32)
    out = jax.block_until_ready(mexhat_wavelet_kan_layer(x, scale, bias, weight, g, b))
    ref = _reference(x, scale, bias, weight, g, b)
    assert out.shape == (batch, out_features)
    assert jnp.allclose(out, ref, rtol=1e-4, atol=1e-4), "case 1 mismatch vs reference"

    # Case 2: exercises multi-step i-reduction (ti=128, 5 steps) and multi O-tile padding.
    batch2, in2, out2 = 8, 640, 200
    x2 = jax.random.normal(k2x, (batch2, in2), dtype=jnp.float32)
    scale2, bias2, weight2, g2, b2 = _make_params(k2w, in2, out2)
    out_b = jax.block_until_ready(mexhat_wavelet_kan_layer(x2, scale2, bias2, weight2, g2, b2))
    ref_b = _reference(x2, scale2, bias2, weight2, g2, b2)
    assert out_b.shape == (batch2, out2)
    assert jnp.allclose(out_b, ref_b, rtol=1e-4, atol=1e-4), "case 2 mismatch vs reference"

    print("KERNEL_OK")
</pallas_src>

<mosaic_0001>
module attributes {stable_mosaic.version = 11 : i64} {
  func.func @_mexhat_kan_kernel(%arg0: i32, %arg1: i32, %arg2: memref<8x256xf32, #tpu.memory_space<vmem>>, %arg3: memref<128x256xf32, #tpu.memory_space<vmem>>, %arg4: memref<128x256xf32, #tpu.memory_space<vmem>>, %arg5: memref<128x256xf32, #tpu.memory_space<vmem>>, %arg6: memref<1x128xf32, #tpu.memory_space<vmem>>, %arg7: memref<1x128xf32, #tpu.memory_space<vmem>>, %arg8: memref<8x128xf32, #tpu.memory_space<vmem>>, %arg9: memref<8x128xf32, #tpu.memory_space<vmem>>) attributes {dimension_semantics = [#tpu.dimension_semantics<parallel>, #tpu.dimension_semantics<arbitrary>], iteration_bounds = array<i64: 1, 1>, scalar_prefetch = 0 : i64, scratch_operands = 1 : i64, tpu.core_type = #tpu.core_type<tc>, window_params = [{transform_indices = @transform_0, window_bounds = array<i64: 8, 256>}, {transform_indices = @transform_1, window_bounds = array<i64: 128, 256>}, {transform_indices = @transform_2, window_bounds = array<i64: 128, 256>}, {transform_indices = @transform_3, window_bounds = array<i64: 128, 256>}, {transform_indices = @transform_4, window_bounds = array<i64: 1, 128>}, {transform_indices = @transform_5, window_bounds = array<i64: 1, 128>}, {transform_indices = @transform_6, window_bounds = array<i64: 8, 128>}]} {
    %c0_i32 = arith.constant 0 : i32
    %0 = arith.cmpi eq, %arg1, %c0_i32 : i32
    %1 = arith.extui %0 : i1 to i32
    %c0_i32_0 = arith.constant 0 : i32
    %2 = arith.cmpi ne, %1, %c0_i32_0 : i32
    scf.if %2 {
      %cst_17 = arith.constant 0.000000e+00 : f32
      %34 = vector.broadcast %cst_17 : f32 to vector<8x128xf32>
      %c0_18 = arith.constant 0 : index
      %c0_19 = arith.constant 0 : index
      %35 = vector.load %arg9[%c0_18, %c0_19] : memref<8x128xf32, #tpu.memory_space<vmem>>, vector<8x128xf32>
      tpu.vector_store %arg9[%c0_18, %c0_19], %34 {strides = array<i32>} : memref<8x128xf32, #tpu.memory_space<vmem>>, vector<8x128xf32>,
    } else {
    }
    %c0 = arith.constant 0 : index
    %c0_1 = arith.constant 0 : index
    %3 = vector.load %arg2[%c0, %c0_1] : memref<8x256xf32, #tpu.memory_space<vmem>>, vector<8x256xf32>
    %c0_2 = arith.constant 0 : index
    %c0_3 = arith.constant 0 : index
    %4 = vector.load %arg3[%c0_2, %c0_3] : memref<128x256xf32, #tpu.memory_space<vmem>>, vector<128x256xf32>
    %c0_4 = arith.constant 0 : index
    %c0_5 = arith.constant 0 : index
    %5 = vector.load %arg4[%c0_4, %c0_5] : memref<128x256xf32, #tpu.memory_space<vmem>>, vector<128x256xf32>
    %c0_6 = arith.constant 0 : index
    %c0_7 = arith.constant 0 : index
    %6 = vector.load %arg5[%c0_6, %c0_7] : memref<128x256xf32, #tpu.memory_space<vmem>>, vector<128x256xf32>
    %cst = arith.constant 1.000000e+00 : f32
    %7 = vector.broadcast %cst : f32 to vector<128x256xf32>
    %8 = arith.divf %7, %4 : vector<128x256xf32>
    %9 = vector.shape_cast %3 : vector<8x256xf32> to vector<8x1x256xf32>
    %10 = vector.shape_cast %5 : vector<128x256xf32> to vector<1x128x256xf32>
    %11 = vector.broadcast %9 : vector<8x1x256xf32> to vector<8x128x256xf32>
    %12 = vector.broadcast %10 : vector<1x128x256xf32> to vector<8x128x256xf32>
    %13 = arith.subf %11, %12 : vector<8x128x256xf32>
    %14 = vector.shape_cast %8 : vector<128x256xf32> to vector<1x128x256xf32>
    %15 = vector.broadcast %14 : vector<1x128x256xf32> to vector<8x128x256xf32>
    %16 = arith.mulf %13, %15 : vector<8x128x256xf32>
    %17 = arith.mulf %16, %16 : vector<8x128x256xf32>
    %cst_8 = arith.constant 1.000000e+00 : f32
    %18 = vector.broadcast %cst_8 : f32 to vector<8x128x256xf32>
    %19 = arith.subf %17, %18 : vector<8x128x256xf32>
    %cst_9 = arith.constant -5.000000e-01 : f32
    %20 = vector.broadcast %cst_9 : f32 to vector<8x128x256xf32>
    %21 = arith.mulf %20, %17 : vector<8x128x256xf32>
    %22 = math.exp %21 : vector<8x128x256xf32>
    %23 = arith.mulf %19, %22 : vector<8x128x256xf32>
    %c0_10 = arith.constant 0 : index
    %c0_11 = arith.constant 0 : index
    %24 = vector.load %arg9[%c0_10, %c0_11] : memref<8x128xf32, #tpu.memory_space<vmem>>, vector<8x128xf32>
    %25 = vector.shape_cast %6 : vector<128x256xf32> to vector<1x128x256xf32>
    %26 = vector.broadcast %25 : vector<1x128x256xf32> to vector<8x128x256xf32>
    %27 = arith.mulf %23, %26 : vector<8x128x256xf32>
    %cst_12 = arith.constant dense<0.000000e+00> : vector<8x128xf32>
    %28 = vector.multi_reduction <add>, %27, %cst_12 [2] : vector<8x128x256xf32> to vector<8x128xf32>
    %29 = arith.addf %24, %28 : vector<8x128xf32>
    %c0_13 = arith.constant 0 : index
    %c0_14 = arith.constant 0 : index
    %30 = vector.load %arg9[%c0_13, %c0_14] : memref<8x128xf32, #tpu.memory_space<vmem>>, vector<8x128xf32>
    tpu.vector_store %arg9[%c0_13, %c0_14], %29 {strides = array<i32>} : memref<8x128xf32, #tpu.memory_space<vmem>>, vector<8x128xf32>,
    %c0_i32_15 = arith.constant 0 : i32
    %31 = arith.cmpi eq, %arg1, %c0_i32_15 : i32
    %32 = arith.extui %31 : i1 to i32
    %c0_i32_16 = arith.constant 0 : i32
    %33 = arith.cmpi ne, %32, %c0_i32_16 : i32
    scf.if %33 {
      %c0_17 = arith.constant 0 : index
      %c0_18 = arith.constant 0 : index
      %34 = vector.load %arg9[%c0_17, %c0_18] : memref<8x128xf32, #tpu.memory_space<vmem>>, vector<8x128xf32>
      %cst_19 = arith.constant 0.867325068 : f32
      %35 = vector.broadcast %cst_19 : f32 to vector<8x128xf32>
      %36 = arith.mulf %35, %34 : vector<8x128xf32>
      %cst_20 = arith.constant dense<0.000000e+00> : vector<128xf32>
      %37 = vector.multi_reduction <add>, %36, %cst_20 [0] : vector<8x128xf32> to vector<128xf32>
      %38 = vector.shape_cast %37 : vector<128xf32> to vector<1x128xf32>
      %cst_21 = arith.constant 8.000000e+00 : f32
      %39 = vector.broadcast %cst_21 : f32 to vector<1x128xf32>
      %40 = arith.divf %38, %39 : vector<1x128xf32>
      %41 = vector.broadcast %40 : vector<1x128xf32> to vector<8x128xf32>
      %42 = arith.subf %36, %41 : vector<8x128xf32>
      %43 = arith.mulf %42, %42 : vector<8x128xf32>
      %cst_22 = arith.constant dense<0.000000e+00> : vector<128xf32>
      %44 = vector.multi_reduction <add>, %43, %cst_22 [0] : vector<8x128xf32> to vector<128xf32>
      %45 = vector.shape_cast %44 : vector<128xf32> to vector<1x128xf32>
      %cst_23 = arith.constant 8.000000e+00 : f32
      %46 = vector.broadcast %cst_23 : f32 to vector<1x128xf32>
      %47 = arith.divf %45, %46 : vector<1x128xf32>
      %48 = vector.broadcast %40 : vector<1x128xf32> to vector<8x128xf32>
      %49 = arith.subf %36, %48 : vector<8x128xf32>
      %cst_24 = arith.constant 9.99999974E-6 : f32
      %50 = vector.broadcast %cst_24 : f32 to vector<1x128xf32>
      %51 = arith.addf %47, %50 : vector<1x128xf32>
      %52 = math.rsqrt %51 : vector<1x128xf32>
      %53 = vector.broadcast %52 : vector<1x128xf32> to vector<8x128xf32>
      %54 = arith.mulf %49, %53 : vector<8x128xf32>
      %c0_25 = arith.constant 0 : index
      %c0_26 = arith.constant 0 : index
      %55 = vector.load %arg6[%c0_25, %c0_26] : memref<1x128xf32, #tpu.memory_space<vmem>>, vector<1x128xf32>
      %56 = vector.broadcast %55 : vector<1x128xf32> to vector<8x128xf32>
      %57 = arith.mulf %54, %56 : vector<8x128xf32>
      %c0_27 = arith.constant 0 : index
      %c0_28 = arith.constant 0 : index
      %58 = vector.load %arg7[%c0_27, %c0_28] : memref<1x128xf32, #tpu.memory_space<vmem>>, vector<1x128xf32>
      %59 = vector.broadcast %58 : vector<1x128xf32> to vector<8x128xf32>
      %60 = arith.addf %57, %59 : vector<8x128xf32>
      %c0_29 = arith.constant 0 : index
      %c0_30 = arith.constant 0 : index
      %61 = vector.load %arg8[%c0_29, %c0_30] : memref<8x128xf32, #tpu.memory_space<vmem>>, vector<8x128xf32>
      tpu.vector_store %arg8[%c0_29, %c0_30], %60 {strides = array<i32>} : memref<8x128xf32, #tpu.memory_space<vmem>>, vector<8x128xf32>,
    } else {
    }
    return
  }
  func.func @transform_0(%arg0: i32, %arg1: i32) -> (i32, i32) {
    %c0_i32 = arith.constant 0 : i32
    %c0_i32_0 = arith.constant 0 : i32
    return %c0_i32, %arg1 : i32, i32
  }
  func.func @transform_1(%arg0: i32, %arg1: i32) -> (i32, i32) {
    %c0_i32 = arith.constant 0 : i32
    return %arg0, %arg1 : i32, i32
  }
  func.func @transform_2(%arg0: i32, %arg1: i32) -> (i32, i32) {
    %c0_i32 = arith.constant 0 : i32
    return %arg0, %arg1 : i32, i32
  }
  func.func @transform_3(%arg0: i32, %arg1: i32) -> (i32, i32) {
    %c0_i32 = arith.constant 0 : i32
    return %arg0, %arg1 : i32, i32
  }
  func.func @transform_4(%arg0: i32, %arg1: i32) -> (i32, i32) {
    %c0_i32 = arith.constant 0 : i32
    %c0_i32_0 = arith.constant 0 : i32
    return %c0_i32, %arg0 : i32, i32
  }
  func.func @transform_5(%arg0: i32, %arg1: i32) -> (i32, i32) {
    %c0_i32 = arith.constant 0 : i32
    %c0_i32_0 = arith.constant 0 : i32
    return %c0_i32, %arg0 : i32, i32
  }
  func.func @transform_6(%arg0: i32, %arg1: i32) -> (i32, i32) {
    %c0_i32 = arith.constant 0 : i32
    %c0_i32_0 = arith.constant 0 : i32
    return %c0_i32, %arg0 : i32, i32
  }
}

</mosaic_0001>

<llo_original>
// kernel: tpu_custom_call.1
$region0: #{tpu_custom_call.1}
  #allocation0 [shape = 'u32[]', space=smem, size = 0x4, offset = 0x4, fixed_abs, tag = 'smem constant byte address 0x4 - core index']
  #allocation1 [shape = 'u32[72,128]{1,0:T(1,128)}', space=vmem, size = 0x9000, scoped, tag = 'internal scratch']
  #allocation2 [shape = 'f32[8,128]{1,0:T(8,128)}', space=vmem, size = 0x1000, scoped, tag = 'scratch operand']
  %s0 = inlined_call_operand.hbm [shape: f32[8,256], index: 0, kind: input, shape index: {}]
  %s1 = inlined_call_operand.hbm [shape: f32[128,256], index: 1, kind: input, shape index: {}]
  %s2 = inlined_call_operand.hbm [shape: f32[128,256], index: 2, kind: input, shape index: {}]
  %s3 = inlined_call_operand.hbm [shape: f32[128,256], index: 3, kind: input, shape index: {}]
  %s4 = inlined_call_operand.vmem [shape: f32[1,128], index: 4, kind: input, shape index: {}]
  %s5 = inlined_call_operand.vmem [shape: f32[1,128], index: 5, kind: input, shape index: {}]
  %s6 = inlined_call_operand.hbm [shape: f32[8,128], index: 6, kind: output, shape index: {}]
  %s7 = sld [smem:[#allocation0]]
  $region58: #{tpu_custom_call.1} parent=0
    _
  %s9 = ssub.s32 1, %s7
  %s10 = scalar_select 0, %s9, %s7
  $region1: #{tpu_custom_call.1} parent=0
    #allocation3 [shape = 'u8[8192]{0}', space=vmem, size = 0x2000, scoped, tag = 'input window, operand 0, single buffered']
    #allocation4 [shape = 's32[1]{0}', space=sflag, size = 0x4, scoped, tag = 'scoped memory for tpu_custom_call.1']
    #allocation5 [shape = 's32[1]{0}', space=sflag, size = 0x4, scoped, tag = 'scoped memory for tpu_custom_call.1']
    #allocation6 [shape = 'u8[131072]{0}', space=vmem, size = 0x20000, scoped, tag = 'input window, operand 1, single buffered']
    #allocation7 [shape = 's32[1]{0}', space=sflag, size = 0x4, scoped, tag = 'scoped memory for tpu_custom_call.1']
    #allocation8 [shape = 'u8[131072]{0}', space=vmem, size = 0x20000, scoped, tag = 'input window, operand 2, single buffered']
    #allocation9 [shape = 'u8[131072]{0}', space=vmem, size = 0x20000, scoped, tag = 'input window, operand 3, single buffered']
    #allocation10 [shape = 's32[1]{0}', space=sflag, size = 0x4, scoped, tag = 'scoped memory for tpu_custom_call.1']
    #allocation11 [shape = 'u8[4096]{0}', space=vmem, size = 0x1000, scoped, tag = 'output window, operand 0, single buffered']
    %11 = vsyncpa [#allocation4], 0
    %12 = vsyncpa [#allocation7], 0
    %13 = vsyncpa [#allocation10], 0
    %14 = vsyncpa [#allocation5], 0
    // Predicated region
    $region2: #{tpu_custom_call.1} parent=1 // pred_check
      _
    $region3: #{tpu_custom_call.1} parent=1 // pred_check_branch
      %16 = sbr.rel (0) target = $region5
    $region4: #{tpu_custom_call.1} parent=1 // pred_region
      %18 = vsyncadd [#allocation4], 0
      %s20 = sshll.u32 %s0, 4
      %s21 = int_to_ptr.hbm [resolvable:$true] %s20
      %s22 = sshll.u32 [#allocation3], 4
      %s23 = int_to_ptr.vmem [resolvable:$true] %s22
      %25 = dma.hbm_to_vmem [thread:$0]  %s21, 256, %s23, [#allocation4]
    $region5: #{tpu_custom_call.1} parent=1 // pred_fallthru
      _
    // Predicated region
    $region6: #{tpu_custom_call.1} parent=1 // pred_check
      _
    $region7: #{tpu_custom_call.1} parent=1 // pred_check_branch
      %27 = sbr.rel (0) target = $region9
    $region8: #{tpu_custom_call.1} parent=1 // pred_region
      %29 = vsyncadd [#allocation7], 0
      %s30 = sshll.u32 %s1, 4
      %s31 = int_to_ptr.hbm [resolvable:$true] %s30
      %s32 = sshll.u32 [#allocation6], 4
      %s33 = int_to_ptr.vmem [resolvable:$true] %s32
      %38 = dma.hbm_to_vmem [thread:$0]  %s31, 4096, %s33, [#allocation7], 256, 256, 16
    $region9: #{tpu_custom_call.1} parent=1 // pred_fallthru
      _
    // Predicated region
    $region10: #{tpu_custom_call.1} parent=1 // pred_check
      _
    $region11: #{tpu_custom_call.1} parent=1 // pred_check_branch
      %40 = sbr.rel (0) target = $region13
    $region12: #{tpu_custom_call.1} parent=1 // pred_region
      %42 = vsyncadd [#allocation7], 0
      %s43 = sshll.u32 %s2, 4
      %s44 = int_to_ptr.hbm [resolvable:$true] %s43
      %s45 = sshll.u32 [#allocation8], 4
      %s46 = int_to_ptr.vmem [resolvable:$true] %s45
      %51 = dma.hbm_to_vmem [thread:$0]  %s44, 4096, %s46, [#allocation7], 256, 256, 16
    $region13: #{tpu_custom_call.1} parent=1 // pred_fallthru
      _
    // Predicated region
    $region14: #{tpu_custom_call.1} parent=1 // pred_check
      _
    $region15: #{tpu_custom_call.1} parent=1 // pred_check_branch
      %53 = sbr.rel (0) target = $region17
    $region16: #{tpu_custom_call.1} parent=1 // pred_region
      %55 = vsyncadd [#allocation10], 0
      %s56 = sshll.u32 %s3, 4
      %s57 = int_to_ptr.hbm [resolvable:$true] %s56
      %s58 = sshll.u32 [#allocation9], 4
      %s59 = int_to_ptr.vmem [resolvable:$true] %s58
      %64 = dma.hbm_to_vmem [thread:$0]  %s57, 4096, %s59, [#allocation10], 256, 256, 16
    $region17: #{tpu_custom_call.1} parent=1 // pred_fallthru
      _
    // Predicated region
    $region18: #{tpu_custom_call.1} parent=1 // pred_check
      _
    $region19: #{tpu_custom_call.1} parent=1 // pred_check_branch
      %66 = sbr.rel (0) target = $region21
    $region20: #{tpu_custom_call.1} parent=1 // pred_region
      _
    $region21: #{tpu_custom_call.1} parent=1 // pred_fallthru
      _
    // Predicated region
    $region22: #{tpu_custom_call.1} parent=1 // pred_check
      _
    $region23: #{tpu_custom_call.1} parent=1 // pred_check_branch
      %68 = sbr.rel (0) target = $region25
    $region24: #{tpu_custom_call.1} parent=1 // pred_region
      _
    $region25: #{tpu_custom_call.1} parent=1 // pred_fallthru
      _
    // Predicated region
    $region26: #{tpu_custom_call.1} parent=1 // pred_check
      _
    $region27: #{tpu_custom_call.1} parent=1 // pred_check_branch
      %70 = sbr.rel (0) target = $region29
    $region28: #{tpu_custom_call.1} parent=1 // pred_region
      %72 = dma.done [#allocation4], 256
    $region29: #{tpu_custom_call.1} parent=1 // pred_fallthru
      _
    // Predicated region
    $region30: #{tpu_custom_call.1} parent=1 // pred_check
      _
    $region31: #{tpu_custom_call.1} parent=1 // pred_check_branch
      %74 = sbr.rel (0) target = $region33
    $region32: #{tpu_custom_call.1} parent=1 // pred_region
      %76 = dma.done [#allocation7], 4096
    $region33: #{tpu_custom_call.1} parent=1 // pred_fallthru
      _
    // Predicated region
    $region34: #{tpu_custom_call.1} parent=1 // pred_check
      _
    $region35: #{tpu_custom_call.1} parent=1 // pred_check_branch
      %78 = sbr.rel (0) target = $region37
    $region36: #{tpu_custom_call.1} parent=1 // pred_region
      %80 = dma.done [#allocation7], 4096
    $region37: #{tpu_custom_call.1} parent=1 // pred_fallthru
      _
    // Predicated region
    $region38: #{tpu_custom_call.1} parent=1 // pred_check
      _
    $region39: #{tpu_custom_call.1} parent=1 // pred_check_branch
      %82 = sbr.rel (0) target = $region41
    $region40: #{tpu_custom_call.1} parent=1 // pred_region
      %84 = dma.done [#allocation10], 4096
    $region41: #{tpu_custom_call.1} parent=1 // pred_fallthru
      _
    %p85 = scmp.eq.s32.totalorder 0, 0
    // Predicated region
    $region42: #{tpu_custom_call.1} parent=1 // pred_check
      %p86 = pneg %p85
    $region43: #{tpu_custom_call.1} parent=1 // pred_check_branch
      %88 = sbr.rel (%p86) target = $region45
    $region44: #{tpu_custom_call.1} parent=1 // pred_region
      %89 = vst [vmem:[#allocation2] sm:$0xff] 0.0
    $region45: #{tpu_custom_call.1} parent=1 // pred_fallthru
      _
    %v90 = vld [vmem:[#allocation3] sm:$0xff]
    %v91 = vld [vmem:[#allocation3 + $0x8] sm:$0xff]
    %v92 = vld [vmem:[#allocation6] sm:$0xff]
    %v93 = vld [vmem:[#allocation6 + $0x8] sm:$0xff]
    %v94 = vld [vmem:[#allocation6 + $0x10] sm:$0xff]
    %v95 = vld [vmem:[#allocation6 + $0x18] sm:$0xff]
    %v96 = vld [vmem:[#allocation6 + $0x20] sm:$0xff]
    %v97 = vld [vmem:[#allocation6 + $0x28] sm:$0xff]
    %v98 = vld [vmem:[#allocation6 + $0x30] sm:$0xff]
    %v99 = vld [vmem:[#allocation6 + $0x38] sm:$0xff]
    %v100 = vld [vmem:[#allocation6 + $0x40] sm:$0xff]
    %v101 = vld [vmem:[#allocation6 + $0x48] sm:$0xff]
    %v102 = vld [vmem:[#allocation6 + $0x50] sm:$0xff]
    %v103 = vld [vmem:[#allocation6 + $0x58] sm:$0xff]
    %v104 = vld [vmem:[#allocation6 + $0x60] sm:$0xff]
    %v105 = vld [vmem:[#allocation6 + $0x68] sm:$0xff]
    %v106 = vld [vmem:[#allocation6 + $0x70] sm:$0xff]
    %v107 = vld [vmem:[#allocation6 + $0x78] sm:$0xff]
    %v108 = vld [vmem:[#allocation6 + $0x80] sm:$0xff]
    %v109 = vld [vmem:[#allocation6 + $0x88] sm:$0xff]
    %v110 = vld [vmem:[#allocation6 + $0x90] sm:$0xff]
    %v111 = vld [vmem:[#allocation6 + $0x98] sm:$0xff]
    %v112 = vld [vmem:[#allocation6 + $0xa0] sm:$0xff]
    %v113 = vld [vmem:[#allocation6 + $0xa8] sm:$0xff]
    %v114 = vld [vmem:[#allocation6 + $0xb0] sm:$0xff]
    %v115 = vld [vmem:[#allocation6 + $0xb8] sm:$0xff]
    %v116 = vld [vmem:[#allocation6 + $0xc0] sm:$0xff]
    %v117 = vld [vmem:[#allocation6 + $0xc8] sm:$0xff]
    %v118 = vld [vmem:[#allocation6 + $0xd0] sm:$0xff]
    %v119 = vld [vmem:[#allocation6 + $0xd8] sm:$0xff]
    %v120 = vld [vmem:[#allocation6 + $0xe0] sm:$0xff]
    %v121 = vld [vmem:[#allocation6 + $0xe8] sm:$0xff]
    %v122 = vld [vmem:[#allocation6 + $0xf0] sm:$0xff]
    %v123 = vld [vmem:[#allocation6 + $0xf8] sm:$0xff]
    %v124 = vld [vmem:[#allocation8] sm:$0xff]
    %v125 = vld [vmem:[#allocation8 + $0x8] sm:$0xff]
    %v126 = vld [vmem:[#allocation8 + $0x10] sm:$0xff]
    %v127 = vld [vmem:[#allocation8 + $0x18] sm:$0xff]
    %v128 = vld [vmem:[#allocation8 + $0x20] sm:$0xff]
    %v129 = vld [vmem:[#allocation8 + $0x28] sm:$0xff]
    %v130 = vld [vmem:[#allocation8 + $0x30] sm:$0xff]
    %v131 = vld [vmem:[#allocation8 + $0x38] sm:$0xff]
    %v132 = vld [vmem:[#allocation8 + $0x40] sm:$0xff]
    %v133 = vld [vmem:[#allocation8 + $0x48] sm:$0xff]
    %v134 = vld [vmem:[#allocation8 + $0x50] sm:$0xff]
    %v135 = vld [vmem:[#allocation8 + $0x58] sm:$0xff]
    %v136 = vld [vmem:[#allocation8 + $0x60] sm:$0xff]
    %v137 = vld [vmem:[#allocation8 + $0x68] sm:$0xff]
    %v138 = vld [vmem:[#allocation8 + $0x70] sm:$0xff]
    %v139 = vld [vmem:[#allocation8 + $0x78] sm:$0xff]
    %v140 = vld [vmem:[#allocation8 + $0x80] sm:$0xff]
    %v141 = vld [vmem:[#allocation8 + $0x88] sm:$0xff]
    %v142 = vld [vmem:[#allocation8 + $0x90] sm:$0xff]
    %v143 = vld [vmem:[#allocation8 + $0x98] sm:$0xff]
    %v144 = vld [vmem:[#allocation8 + $0xa0] sm:$0xff]
    %v145 = vld [vmem:[#allocation8 + $0xa8] sm:$0xff]
    %v146 = vld [vmem:[#allocation8 + $0xb0] sm:$0xff]
    %v147 = vld [vmem:[#allocation8 + $0xb8] sm:$0xff]
    %v148 = vld [vmem:[#allocation8 + $0xc0] sm:$0xff]
    %v149 = vld [vmem:[#allocation8 + $0xc8] sm:$0xff]
    %v150 = vld [vmem:[#allocation8 + $0xd0] sm:$0xff]
    %v151 = vld [vmem:[#allocation8 + $0xd8] sm:$0xff]
    %v152 = vld [vmem:[#allocation8 + $0xe0] sm:$0xff]
    %v153 = vld [vmem:[#allocation8 + $0xe8] sm:$0xff]
    %v154 = vld [vmem:[#allocation8 + $0xf0] sm:$0xff]
    %v155 = vld [vmem:[#allocation8 + $0xf8] sm:$0xff]
    %v156 = vld [vmem:[#allocation9] sm:$0xff]
    %v157 = vld [vmem:[#allocation9 + $0x8] sm:$0xff]
    %v158 = vld [vmem:[#allocation9 + $0x10] sm:$0xff]
    %v159 = vld [vmem:[#allocation9 + $0x18] sm:$0xff]
    %v160 = vld [vmem:[#allocation9 + $0x20] sm:$0xff]
    %v161 = vld [vmem:[#allocation9 + $0x28] sm:$0xff]
    %v162 = vld [vmem:[#allocation9 + $0x30] sm:$0xff]
    %v163 = vld [vmem:[#allocation9 + $0x38] sm:$0xff]
    %v164 = vld [vmem:[#allocation9 + $0x40] sm:$0xff]
    %v165 = vld [vmem:[#allocation9 + $0x48] sm:$0xff]
    %v166 = vld [vmem:[#allocation9 + $0x50] sm:$0xff]
    %v167 = vld [vmem:[#allocation9 + $0x58] sm:$0xff]
    %v168 = vld [vmem:[#allocation9 + $0x60] sm:$0xff]
    %v169 = vld [vmem:[#allocation9 + $0x68] sm:$0xff]
    %v170 = vld [vmem:[#allocation9 + $0x70] sm:$0xff]
    %v171 = vld [vmem:[#allocation9 + $0x78] sm:$0xff]
    %v172 = vld [vmem:[#allocation9 + $0x80] sm:$0xff]
    %v173 = vld [vmem:[#allocation9 + $0x88] sm:$0xff]
    %v174 = vld [vmem:[#allocation9 + $0x90] sm:$0xff]
    %v175 = vld [vmem:[#allocation9 + $0x98] sm:$0xff]
    %v176 = vld [vmem:[#allocation9 + $0xa0] sm:$0xff]
    %v177 = vld [vmem:[#allocation9 + $0xa8] sm:$0xff]
    %v178 = vld [vmem:[#allocation9 + $0xb0] sm:$0xff]
    %v179 = vld [vmem:[#allocation9 + $0xb8] sm:$0xff]
    %v180 = vld [vmem:[#allocation9 + $0xc0] sm:$0xff]
    %v181 = vld [vmem:[#allocation9 + $0xc8] sm:$0xff]
    %v182 = vld [vmem:[#allocation9 + $0xd0] sm:$0xff]
    %v183 = vld [vmem:[#allocation9 + $0xd8] sm:$0xff]
    %v184 = vld [vmem:[#allocation9 + $0xe0] sm:$0xff]
    %v185 = vld [vmem:[#allocation9 + $0xe8] sm:$0xff]
    %v186 = vld [vmem:[#allocation9 + $0xf0] sm:$0xff]
    %v187 = vld [vmem:[#allocation9 + $0xf8] sm:$0xff]
    %v188 = vrcp.pop %v92
    %v189 = vmul.f32 %v92, %v188
    %v190 = vsub.f32 1.0, %v189
    %v191 = vmul.f32 %v188, %v190
    %v192 = vadd.f32 %v188, %v191
    %vm193 = vweird.f32 %v92
    %vm194 = vweird.f32 %v188
    %vm195 = vmor %vm193, %vm194
    %v196 = vsel %vm195, %v188, %v192
    %v197 = vand.u32 2147483647, %v92
    %vm198 = vcmp.eq.f32.partialorder %v197, 8.507059e+37
    %v199 = vand.u32 %v92, 2147483648
    %v200 = vor.u32 1.1754944e-38, %v199
    %v201 = vsel %vm198, %v200, %v196
    %v202 = vmul.f32 1.0, %v201
    %v203 = vrcp.pop %v93
    %v204 = vmul.f32 %v93, %v203
    %v205 = vsub.f32 1.0, %v204
    %v206 = vmul.f32 %v203, %v205
    %v207 = vadd.f32 %v203, %v206
    %vm208 = vweird.f32 %v93
    %vm209 = vweird.f32 %v203
    %vm210 = vmor %vm208, %vm209
    %v211 = vsel %vm210, %v203, %v207
    %v212 = vand.u32 2147483647, %v93
    %vm213 = vcmp.eq.f32.partialorder %v212, 8.507059e+37
    %v214 = vand.u32 %v93, 2147483648
    %v215 = vor.u32 1.1754944e-38, %v214
    %v216 = vsel %vm213, %v215, %v211
    %v217 = vmul.f32 1.0, %v216
    %v218 = vrcp.pop %v94
    %v219 = vmul.f32 %v94, %v218
    %v220 = vsub.f32 1.0, %v219
    %v221 = vmul.f32 %v218, %v220
    %v222 = vadd.f32 %v218, %v221
    %vm223 = vweird.f32 %v94
    %vm224 = vweird.f32 %v218
    %vm225 = vmor %vm223, %vm224
    %v226 = vsel %vm225, %v218, %v222
    %v227 = vand.u32 2147483647, %v94
    %vm228 = vcmp.eq.f32.partialorder %v227, 8.507059e+37
    %v229 = vand.u32 %v94, 2147483648
    %v230 = vor.u32 1.1754944e-38, %v229
    %v231 = vsel %vm228, %v230, %v226
    %v232 = vmul.f32 1.0, %v231
    %v233 = vrcp.pop %v95
    %v234 = vmul.f32 %v95, %v233
    %v235 = vsub.f32 1.0, %v234
    %v236 = vmul.f32 %v233, %v235
    %v237 = vadd.f32 %v233, %v236
    %vm238 = vweird.f32 %v95
    %vm239 = vweird.f32 %v233
    %vm240 = vmor %vm238, %vm239
    %v241 = vsel %vm240, %v233, %v237
    %v242 = vand.u32 2147483647, %v95
    %vm243 = vcmp.eq.f32.partialorder %v242, 8.507059e+37
    %v244 = vand.u32 %v95, 2147483648
    %v245 = vor.u32 1.1754944e-38, %v244
    %v246 = vsel %vm243, %v245, %v241
    %v247 = vmul.f32 1.0, %v246
    %v248 = vrcp.pop %v96
    %v249 = vmul.f32 %v96, %v248
    %v250 = vsub.f32 1.0, %v249
    %v251 = vmul.f32 %v248, %v250
    %v252 = vadd.f32 %v248, %v251
    %vm253 = vweird.f32 %v96
    %vm254 = vweird.f32 %v248
    %vm255 = vmor %vm253, %vm254
    %v256 = vsel %vm255, %v248, %v252
    %v257 = vand.u32 2147483647, %v96
    %vm258 = vcmp.eq.f32.partialorder %v257, 8.507059e+37
    %v259 = vand.u32 %v96, 2147483648
    %v260 = vor.u32 1.1754944e-38, %v259
    %v261 = vsel %vm258, %v260, %v256
    %v262 = vmul.f32 1.0, %v261
    %v263 = vrcp.pop %v97
    %v264 = vmul.f32 %v97, %v263
    %v265 = vsub.f32 1.0, %v264
    %v266 = vmul.f32 %v263, %v265
    %v267 = vadd.f32 %v263, %v266
    %vm268 = vweird.f32 %v97
    %vm269 = vweird.f32 %v263
    %vm270 = vmor %vm268, %vm269
    %v271 = vsel %vm270, %v263, %v267
    %v272 = vand.u32 2147483647, %v97
    %vm273 = vcmp.eq.f32.partialorder %v272, 8.507059e+37
    %v274 = vand.u32 %v97, 2147483648
    %v275 = vor.u32 1.1754944e-38, %v274
    %v276 = vsel %vm273, %v275, %v271
    %v277 = vmul.f32 1.0, %v276
    %v278 = vrcp.pop %v98
    %v279 = vmul.f32 %v98, %v278
    %v280 = vsub.f32 1.0, %v279
    %v281 = vmul.f32 %v278, %v280
    %v282 = vadd.f32 %v278, %v281
    %vm283 = vweird.f32 %v98
    %vm284 = vweird.f32 %v278
    %vm285 = vmor %vm283, %vm284
    %v286 = vsel %vm285, %v278, %v282
    %v287 = vand.u32 2147483647, %v98
    %vm288 = vcmp.eq.f32.partialorder %v287, 8.507059e+37
    %v289 = vand.u32 %v98, 2147483648
    %v290 = vor.u32 1.1754944e-38, %v289
    %v291 = vsel %vm288, %v290, %v286
    %v292 = vmul.f32 1.0, %v291
    %v293 = vrcp.pop %v99
    %v294 = vmul.f32 %v99, %v293
    %v295 = vsub.f32 1.0, %v294
    %v296 = vmul.f32 %v293, %v295
    %v297 = vadd.f32 %v293, %v296
    %vm298 = vweird.f32 %v99
    %vm299 = vweird.f32 %v293
    %vm300 = vmor %vm298, %vm299
    %v301 = vsel %vm300, %v293, %v297
    %v302 = vand.u32 2147483647, %v99
    %vm303 = vcmp.eq.f32.partialorder %v302, 8.507059e+37
    %v304 = vand.u32 %v99, 2147483648
    %v305 = vor.u32 1.1754944e-38, %v304
    %v306 = vsel %vm303, %v305, %v301
    %v307 = vmul.f32 1.0, %v306
    %v308 = vrcp.pop %v100
    %v309 = vmul.f32 %v100, %v308
    %v310 = vsub.f32 1.0, %v309
    %v311 = vmul.f32 %v308, %v310
    %v312 = vadd.f32 %v308, %v311
    %vm313 = vweird.f32 %v100
    %vm314 = vweird.f32 %v308
    %vm315 = vmor %vm313, %vm314
    %v316 = vsel %vm315, %v308, %v312
    %v317 = vand.u32 2147483647, %v100
    %vm318 = vcmp.eq.f32.partialorder %v317, 8.507059e+37
    %v319 = vand.u32 %v100, 2147483648
    %v320 = vor.u32 1.1754944e-38, %v319
    %v321 = vsel %vm318, %v320, %v316
    %v322 = vmul.f32 1.0, %v321
    %v323 = vrcp.pop %v101
    %v324 = vmul.f32 %v101, %v323
    %v325 = vsub.f32 1.0, %v324
    %v326 = vmul.f32 %v323, %v325
    %v327 = vadd.f32 %v323, %v326
    %vm328 = vweird.f32 %v101
    %vm329 = vweird.f32 %v323
    %vm330 = vmor %vm328, %vm329
    %v331 = vsel %vm330, %v323, %v327
    %v332 = vand.u32 2147483647, %v101
    %vm333 = vcmp.eq.f32.partialorder %v332, 8.507059e+37
    %v334 = vand.u32 %v101, 2147483648
    %v335 = vor.u32 1.1754944e-38, %v334
    %v336 = vsel %vm333, %v335, %v331
    %v337 = vmul.f32 1.0, %v336
    %v338 = vrcp.pop %v102
    %v339 = vmul.f32 %v102, %v338
    %v340 = vsub.f32 1.0, %v339
    %v341 = vmul.f32 %v338, %v340
    %v342 = vadd.f32 %v338, %v341
    %vm343 = vweird.f32 %v102
    %vm344 = vweird.f32 %v338
    %vm345 = vmor %vm343, %vm344
    %v346 = vsel %vm345, %v338, %v342
    %v347 = vand.u32 2147483647, %v102
    %vm348 = vcmp.eq.f32.partialorder %v347, 8.507059e+37
    %v349 = vand.u32 %v102, 2147483648
    %v350 = vor.u32 1.1754944e-38, %v349
    %v351 = vsel %vm348, %v350, %v346
    %v352 = vmul.f32 1.0, %v351
    %v353 = vrcp.pop %v103
    %v354 = vmul.f32 %v103, %v353
    %v355 = vsub.f32 1.0, %v354
    %v356 = vmul.f32 %v353, %v355
    %v357 = vadd.f32 %v353, %v356
    %vm358 = vweird.f32 %v103
    %vm359 = vweird.f32 %v353
    %vm360 = vmor %vm358, %vm359
    %v361 = vsel %vm360, %v353, %v357
    %v362 = vand.u32 2147483647, %v103
    %vm363 = vcmp.eq.f32.partialorder %v362, 8.507059e+37
    %v364 = vand.u32 %v103, 2147483648
    %v365 = vor.u32 1.1754944e-38, %v364
    %v366 = vsel %vm363, %v365, %v361
    %v367 = vmul.f32 1.0, %v366
    %v368 = vrcp.pop %v104
    %v369 = vmul.f32 %v104, %v368
    %v370 = vsub.f32 1.0, %v369
    %v371 = vmul.f32 %v368, %v370
    %v372 = vadd.f32 %v368, %v371
    %vm373 = vweird.f32 %v104
    %vm374 = vweird.f32 %v368
    %vm375 = vmor %vm373, %vm374
    %v376 = vsel %vm375, %v368, %v372
    %v377 = vand.u32 2147483647, %v104
    %vm378 = vcmp.eq.f32.partialorder %v377, 8.507059e+37
    %v379 = vand.u32 %v104, 2147483648
    %v380 = vor.u32 1.1754944e-38, %v379
    %v381 = vsel %vm378, %v380, %v376
    %v382 = vmul.f32 1.0, %v381
    %v383 = vrcp.pop %v105
    %v384 = vmul.f32 %v105, %v383
    %v385 = vsub.f32 1.0, %v384
    %v386 = vmul.f32 %v383, %v385
    %v387 = vadd.f32 %v383, %v386
    %vm388 = vweird.f32 %v105
    %vm389 = vweird.f32 %v383
    %vm390 = vmor %vm388, %vm389
    %v391 = vsel %vm390, %v383, %v387
    %v392 = vand.u32 2147483647, %v105
    %vm393 = vcmp.eq.f32.partialorder %v392, 8.507059e+37
    %v394 = vand.u32 %v105, 2147483648
    %v395 = vor.u32 1.1754944e-38, %v394
    %v396 = vsel %vm393, %v395, %v391
    %v397 = vmul.f32 1.0, %v396
    %v398 = vrcp.pop %v106
    %v399 = vmul.f32 %v106, %v398
    %v400 = vsub.f32 1.0, %v399
    %v401 = vmul.f32 %v398, %v400
    %v402 = vadd.f32 %v398, %v401
    %vm403 = vweird.f32 %v106
    %vm404 = vweird.f32 %v398
    %vm405 = vmor %vm403, %vm404
    %v406 = vsel %vm405, %v398, %v402
    %v407 = vand.u32 2147483647, %v106
    %vm408 = vcmp.eq.f32.partialorder %v407, 8.507059e+37
    %v409 = vand.u32 %v106, 2147483648
    %v410 = vor.u32 1.1754944e-38, %v409
    %v411 = vsel %vm408, %v410, %v406
    %v412 = vmul.f32 1.0, %v411
    %v413 = vrcp.pop %v107
    %v414 = vmul.f32 %v107, %v413
    %v415 = vsub.f32 1.0, %v414
    %v416 = vmul.f32 %v413, %v415
    %v417 = vadd.f32 %v413, %v416
    %vm418 = vweird.f32 %v107
    %vm419 = vweird.f32 %v413
    %vm420 = vmor %vm418, %vm419
    %v421 = vsel %vm420, %v413, %v417
    %v422 = vand.u32 2147483647, %v107
    %vm423 = vcmp.eq.f32.partialorder %v422, 8.507059e+37
    %v424 = vand.u32 %v107, 2147483648
    %v425 = vor.u32 1.1754944e-38, %v424
    %v426 = vsel %vm423, %v425, %v421
    %v427 = vmul.f32 1.0, %v426
    %v428 = vrcp.pop %v108
    %v429 = vmul.f32 %v108, %v428
    %v430 = vsub.f32 1.0, %v429
    %v431 = vmul.f32 %v428, %v430
    %v432 = vadd.f32 %v428, %v431
    %vm433 = vweird.f32 %v108
    %vm434 = vweird.f32 %v428
    %vm435 = vmor %vm433, %vm434
    %v436 = vsel %vm435, %v428, %v432
    %v437 = vand.u32 2147483647, %v108
    %vm438 = vcmp.eq.f32.partialorder %v437, 8.507059e+37
    %v439 = vand.u32 %v108, 2147483648
    %v440 = vor.u32 1.1754944e-38, %v439
    %v441 = vsel %vm438, %v440, %v436
    %v442 = vmul.f32 1.0, %v441
    %v443 = vrcp.pop %v109
    %v444 = vmul.f32 %v109, %v443
    %v445 = vsub.f32 1.0, %v444
    %v446 = vmul.f32 %v443, %v445
    %v447 = vadd.f32 %v443, %v446
    %vm448 = vweird.f32 %v109
    %vm449 = vweird.f32 %v443
    %vm450 = vmor %vm448, %vm449
    %v451 = vsel %vm450, %v443, %v447
    %v452 = vand.u32 2147483647, %v109
    %vm453 = vcmp.eq.f32.partialorder %v452, 8.507059e+37
    %v454 = vand.u32 %v109, 2147483648
    %v455 = vor.u32 1.1754944e-38, %v454
    %v456 = vsel %vm453, %v455, %v451
    %v457 = vmul.f32 1.0, %v456
    %v458 = vrcp.pop %v110
    %v459 = vmul.f32 %v110, %v458
    %v460 = vsub.f32 1.0, %v459
    %v461 = vmul.f32 %v458, %v460
    %v462 = vadd.f32 %v458, %v461
    %vm463 = vweird.f32 %v110
    %vm464 = vweird.f32 %v458
    %vm465 = vmor %vm463, %vm464
    %v466 = vsel %vm465, %v458, %v462
    %v467 = vand.u32 2147483647, %v110
    %vm468 = vcmp.eq.f32.partialorder %v467, 8.507059e+37
    %v469 = vand.u32 %v110, 2147483648
    %v470 = vor.u32 1.1754944e-38, %v469
    %v471 = vsel %vm468, %v470, %v466
    %v472 = vmul.f32 1.0, %v471
    %v473 = vrcp.pop %v111
    %v474 = vmul.f32 %v111, %v473
    %v475 = vsub.f32 1.0, %v474
    %v476 = vmul.f32 %v473, %v475
    %v477 = vadd.f32 %v473, %v476
    %vm478 = vweird.f32 %v111
    %vm479 = vweird.f32 %v473
    %vm480 = vmor %vm478, %vm479
    %v481 = vsel %vm480, %v473, %v477
    %v482 = vand.u32 2147483647, %v111
    %vm483 = vcmp.eq.f32.partialorder %v482, 8.507059e+37
    %v484 = vand.u32 %v111, 2147483648
    %v485 = vor.u32 1.1754944e-38, %v484
    %v486 = vsel %vm483, %v485, %v481
    %v487 = vmul.f32 1.0, %v486
    %v488 = vrcp.pop %v112
    %v489 = vmul.f32 %v112, %v488
    %v490 = vsub.f32 1.0, %v489
    %v491 = vmul.f32 %v488, %v490
    %v492 = vadd.f32 %v488, %v491
    %vm493 = vweird.f32 %v112
    %vm494 = vweird.f32 %v488
    %vm495 = vmor %vm493, %vm494
    %v496 = vsel %vm495, %v488, %v492
    %v497 = vand.u32 2147483647, %v112
    %vm498 = vcmp.eq.f32.partialorder %v497, 8.507059e+37
    %v499 = vand.u32 %v112, 2147483648
    %v500 = vor.u32 1.1754944e-38, %v499
    %v501 = vsel %vm498, %v500, %v496
    %v502 = vmul.f32 1.0, %v501
    %v503 = vrcp.pop %v113
    %v504 = vmul.f32 %v113, %v503
    %v505 = vsub.f32 1.0, %v504
    %v506 = vmul.f32 %v503, %v505
    %v507 = vadd.f32 %v503, %v506
    %vm508 = vweird.f32 %v113
    %vm509 = vweird.f32 %v503
    %vm510 = vmor %vm508, %vm509
    %v511 = vsel %vm510, %v503, %v507
    %v512 = vand.u32 2147483647, %v113
    %vm513 = vcmp.eq.f32.partialorder %v512, 8.507059e+37
    %v514 = vand.u32 %v113, 2147483648
    %v515 = vor.u32 1.1754944e-38, %v514
    %v516 = vsel %vm513, %v515, %v511
    %v517 = vmul.f32 1.0, %v516
    %v518 = vrcp.pop %v114
    %v519 = vmul.f32 %v114, %v518
    %v520 = vsub.f32 1.0, %v519
    %v521 = vmul.f32 %v518, %v520
    %v522 = vadd.f32 %v518, %v521
    %vm523 = vweird.f32 %v114
    %vm524 = vweird.f32 %v518
    %vm525 = vmor %vm523, %vm524
    %v526 = vsel %vm525, %v518, %v522
    %v527 = vand.u32 2147483647, %v114
    %vm528 = vcmp.eq.f32.partialorder %v527, 8.507059e+37
    %v529 = vand.u32 %v114, 2147483648
    %v530 = vor.u32 1.1754944e-38, %v529
    %v531 = vsel %vm528, %v530, %v526
    %v532 = vmul.f32 1.0, %v531
    %v533 = vrcp.pop %v115
    %v534 = vmul.f32 %v115, %v533
    %v535 = vsub.f32 1.0, %v534
    %v536 = vmul.f32 %v533, %v535
    %v537 = vadd.f32 %v533, %v536
    %vm538 = vweird.f32 %v115
    %vm539 = vweird.f32 %v533
    %vm540 = vmor %vm538, %vm539
    %v541 = vsel %vm540, %v533, %v537
    %v542 = vand.u32 2147483647, %v115
    %vm543 = vcmp.eq.f32.partialorder %v542, 8.507059e+37
    %v544 = vand.u32 %v115, 2147483648
    %v545 = vor.u32 1.1754944e-38, %v544
    %v546 = vsel %vm543, %v545, %v541
    %v547 = vmul.f32 1.0, %v546
    %v548 = vrcp.pop %v116
    %v549 = vmul.f32 %v116, %v548
    %v550 = vsub.f32 1.0, %v549
    %v551 = vmul.f32 %v548, %v550
    %v552 = vadd.f32 %v548, %v551
    %vm553 = vweird.f32 %v116
    %vm554 = vweird.f32 %v548
    %vm555 = vmor %vm553, %vm554
    %v556 = vsel %vm555, %v548, %v552
    %v557 = vand.u32 2147483647, %v116
    %vm558 = vcmp.eq.f32.partialorder %v557, 8.507059e+37
    %v559 = vand.u32 %v116, 2147483648
    %v560 = vor.u32 1.1754944e-38, %v559
    %v561 = vsel %vm558, %v560, %v556
    %v562 = vmul.f32 1.0, %v561
    %v563 = vrcp.pop %v117
    %v564 = vmul.f32 %v117, %v563
    %v565 = vsub.f32 1.0, %v564
    %v566 = vmul.f32 %v563, %v565
    %v567 = vadd.f32 %v563, %v566
    %vm568 = vweird.f32 %v117
    %vm569 = vweird.f32 %v563
    %vm570 = vmor %vm568, %vm569
    %v571 = vsel %vm570, %v563, %v567
    %v572 = vand.u32 2147483647, %v117
    %vm573 = vcmp.eq.f32.partialorder %v572, 8.507059e+37
    %v574 = vand.u32 %v117, 2147483648
    %v575 = vor.u32 1.1754944e-38, %v574
    %v576 = vsel %vm573, %v575, %v571
    %v577 = vmul.f32 1.0, %v576
    %v578 = vrcp.pop %v118
    %v579 = vmul.f32 %v118, %v578
    %v580 = vsub.f32 1.0, %v579
    %v581 = vmul.f32 %v578, %v580
    %v582 = vadd.f32 %v578, %v581
    %vm583 = vweird.f32 %v118
    %vm584 = vweird.f32 %v578
    %vm585 = vmor %vm583, %vm584
    %v586 = vsel %vm585, %v578, %v582
    %v587 = vand.u32 2147483647, %v118
    %vm588 = vcmp.eq.f32.partialorder %v587, 8.507059e+37
    %v589 = vand.u32 %v118, 2147483648
    %v590 = vor.u32 1.1754944e-38, %v589
    %v591 = vsel %vm588, %v590, %v586
    %v592 = vmul.f32 1.0, %v591
    %v593 = vrcp.pop %v119
    %v594 = vmul.f32 %v119, %v593
    %v595 = vsub.f32 1.0, %v594
    %v596 = vmul.f32 %v593, %v595
    %v597 = vadd.f32 %v593, %v596
    %vm598 = vweird.f32 %v119
    %vm599 = vweird.f32 %v593
    %vm600 = vmor %vm598, %vm599
    %v601 = vsel %vm600, %v593, %v597
    %v602 = vand.u32 2147483647, %v119
    %vm603 = vcmp.eq.f32.partialorder %v602, 8.507059e+37
    %v604 = vand.u32 %v119, 2147483648
    %v605 = vor.u32 1.1754944e-38, %v604
    %v606 = vsel %vm603, %v605, %v601
    %v607 = vmul.f32 1.0, %v606
    %v608 = vrcp.pop %v120
    %v609 = vmul.f32 %v120, %v608
    %v610 = vsub.f32 1.0, %v609
    %v611 = vmul.f32 %v608, %v610
    %v612 = vadd.f32 %v608, %v611
    %vm613 = vweird.f32 %v120
    %vm614 = vweird.f32 %v608
    %vm615 = vmor %vm613, %vm614
    %v616 = vsel %vm615, %v608, %v612
    %v617 = vand.u32 2147483647, %v120
    %vm618 = vcmp.eq.f32.partialorder %v617, 8.507059e+37
    %v619 = vand.u32 %v120, 2147483648
    %v620 = vor.u32 1.1754944e-38, %v619
    %v621 = vsel %vm618, %v620, %v616
    %v622 = vmul.f32 1.0, %v621
    %v623 = vrcp.pop %v121
    %v624 = vmul.f32 %v121, %v623
    %v625 = vsub.f32 1.0, %v624
    %v626 = vmul.f32 %v623, %v625
    %v627 = vadd.f32 %v623, %v626
    %vm628 = vweird.f32 %v121
    %vm629 = vweird.f32 %v623
    %vm630 = vmor %vm628, %vm629
    %v631 = vsel %vm630, %v623, %v627
    %v632 = vand.u32 2147483647, %v121
    %vm633 = vcmp.eq.f32.partialorder %v632, 8.507059e+37
    %v634 = vand.u32 %v121, 2147483648
    %v635 = vor.u32 1.1754944e-38, %v634
    %v636 = vsel %vm633, %v635, %v631
    %v637 = vmul.f32 1.0, %v636
    %v638 = vrcp.pop %v122
    %v639 = vmul.f32 %v122, %v638
    %v640 = vsub.f32 1.0, %v639
    %v641 = vmul.f32 %v638, %v640
    %v642 = vadd.f32 %v638, %v641
    %vm643 = vweird.f32 %v122
    %vm644 = vweird.f32 %v638
    %vm645 = vmor %vm643, %vm644
    %v646 = vsel %vm645, %v638, %v642
    %v647 = vand.u32 2147483647, %v122
    %vm648 = vcmp.eq.f32.partialorder %v647, 8.507059e+37
    %v649 = vand.u32 %v122, 2147483648
    %v650 = vor.u32 1.1754944e-38, %v649
    %v651 = vsel %vm648, %v650, %v646
    %v652 = vmul.f32 1.0, %v651
    %v653 = vrcp.pop %v123
    %v654 = vmul.f32 %v123, %v653
    %v655 = vsub.f32 1.0, %v654
    %v656 = vmul.f32 %v653, %v655
    %v657 = vadd.f32 %v653, %v656
    %vm658 = vweird.f32 %v123
    %vm659 = vweird.f32 %v653
    %vm660 = vmor %vm658, %vm659
    %v661 = vsel %vm660, %v653, %v657
    %v662 = vand.u32 2147483647, %v123
    %vm663 = vcmp.eq.f32.partialorder %v662, 8.507059e+37
    %v664 = vand.u32 %v123, 2147483648
    %v665 = vor.u32 1.1754944e-38, %v664
    %v666 = vsel %vm663, %v665, %v661
    %v667 = vmul.f32 1.0, %v666
    %v670 = vrot.slane %v91, 7
    %vm671 = vcmask 1040384
    %v672 = vsel %vm671, %v90, %v670
    %vm673 = vcmask 1041409
    %v674 = vsel %vm673, %v90, %v670
    %v675 = vrot.slane %v674, 1
    %vm676 = vcmask 1042434
    %v677 = vsel %vm676, %v90, %v670
    %v678 = vrot.slane %v677, 2
    %vm679 = vcmask 1043459
    %v680 = vsel %vm679, %v90, %v670
    %v681 = vrot.slane %v680, 3
    %vm682 = vcmask 1044484
    %v683 = vsel %vm682, %v90, %v670
    %v684 = vrot.slane %v683, 4
    %vm685 = vcmask 1045509
    %v686 = vsel %vm685, %v90, %v670
    %v687 = vrot.slane %v686, 5
    %vm688 = vcmask 1046534
    %v689 = vsel %vm688, %v90, %v670
    %v690 = vrot.slane %v689, 6
    %vm691 = vcmask 1046528
    %v692 = vsel %vm691, %v670, %v90
    %v693 = vrot.slane %v692, 7
    %v694 = vperm.slane %v672, 0
    %v695 = vperm.slane %v672, 1
    %v696 = vperm.slane %v675, 0
    %v697 = vperm.slane %v675, 1
    %v698 = vperm.slane %v678, 0
    %v699 = vperm.slane %v678, 1
    %v700 = vperm.slane %v681, 0
    %v701 = vperm.slane %v681, 1
    %v702 = vperm.slane %v684, 0
    %v703 = vperm.slane %v684, 1
    %v704 = vperm.slane %v687, 0
    %v705 = vperm.slane %v687, 1
    %v706 = vperm.slane %v690, 0
    %v707 = vperm.slane %v690, 1
    %v708 = vperm.slane %v693, 0
    %v709 = vperm.slane %v693, 1
    %v726 = vsub.f32 %v694, %v124
    %v727 = vsub.f32 %v695, %v125
    %v728 = vsub.f32 %v694, %v126
    %v729 = vsub.f32 %v695, %v127
    %v730 = vsub.f32 %v694, %v128
    %v731 = vsub.f32 %v695, %v129
    %v732 = vsub.f32 %v694, %v130
    %v733 = vsub.f32 %v695, %v131
    %v734 = vsub.f32 %v694, %v132
    %v735 = vsub.f32 %v695, %v133
    %v736 = vsub.f32 %v694, %v134
    %v737 = vsub.f32 %v695, %v135
    %v738 = vsub.f32 %v694, %v136
    %v739 = vsub.f32 %v695, %v137
    %v740 = vsub.f32 %v694, %v138
    %v741 = vsub.f32 %v695, %v139
    %v742 = vsub.f32 %v694, %v140
    %v743 = vsub.f32 %v695, %v141
    %v744 = vsub.f32 %v694, %v142
    %v745 = vsub.f32 %v695, %v143
    %v746 = vsub.f32 %v694, %v144
    %v747 = vsub.f32 %v695, %v145
    %v748 = vsub.f32 %v694, %v146
    %v749 = vsub.f32 %v695, %v147
    %v750 = vsub.f32 %v694, %v148
    %v751 = vsub.f32 %v695, %v149
    %v752 = vsub.f32 %v694, %v150
    %v753 = vsub.f32 %v695, %v151
    %v754 = vsub.f32 %v694, %v152
    %v755 = vsub.f32 %v695, %v153
    %v756 = vsub.f32 %v694, %v154
    %v757 = vsub.f32 %v695, %v155
    %v758 = vsub.f32 %v696, %v124
    %v759 = vsub.f32 %v697, %v125
    %v760 = vsub.f32 %v696, %v126
    %v761 = vsub.f32 %v697, %v127
    %v762 = vsub.f32 %v696, %v128
    %v763 = vsub.f32 %v697, %v129
    %v764 = vsub.f32 %v696, %v130
    %v765 = vsub.f32 %v697, %v131
    %v766 = vsub.f32 %v696, %v132
    %v767 = vsub.f32 %v697, %v133
    %v768 = vsub.f32 %v696, %v134
    %v769 = vsub.f32 %v697, %v135
    %v770 = vsub.f32 %v696, %v136
    %v771 = vsub.f32 %v697, %v137
    %v772 = vsub.f32 %v696, %v138
    %v773 = vsub.f32 %v697, %v139
    %v774 = vsub.f32 %v696, %v140
    %v775 = vsub.f32 %v697, %v141
    %v776 = vsub.f32 %v696, %v142
    %v777 = vsub.f32 %v697, %v143
    %v778 = vsub.f32 %v696, %v144
    %v779 = vsub.f32 %v697, %v145
    %v780 = vsub.f32 %v696, %v146
    %v781 = vsub.f32 %v697, %v147
    %v782 = vsub.f32 %v696, %v148
    %v783 = vsub.f32 %v697, %v149
    %v784 = vsub.f32 %v696, %v150
    %v785 = vsub.f32 %v697, %v151
    %v786 = vsub.f32 %v696, %v152
    %v787 = vsub.f32 %v697, %v153
    %v788 = vsub.f32 %v696, %v154
    %v789 = vsub.f32 %v697, %v155
    %v790 = vsub.f32 %v698, %v124
    %v791 = vsub.f32 %v699, %v125
    %v792 = vsub.f32 %v698, %v126
    %v793 = vsub.f32 %v699, %v127
    %v794 = vsub.f32 %v698, %v128
    %v795 = vsub.f32 %v699, %v129
    %v796 = vsub.f32 %v698, %v130
    %v797 = vsub.f32 %v699, %v131
    %v798 = vsub.f32 %v698, %v132
    %v799 = vsub.f32 %v699, %v133
    %v800 = vsub.f32 %v698, %v134
    %v801 = vsub.f32 %v699, %v135
    %v802 = vsub.f32 %v698, %v136
    %v803 = vsub.f32 %v699, %v137
    %v804 = vsub.f32 %v698, %v138
    %v805 = vsub.f32 %v699, %v139
    %v806 = vsub.f32 %v698, %v140
    %v807 = vsub.f32 %v699, %v141
    %v808 = vsub.f32 %v698, %v142
    %v809 = vsub.f32 %v699, %v143
    %v810 = vsub.f32 %v698, %v144
    %v811 = vsub.f32 %v699, %v145
    %v812 = vsub.f32 %v698, %v146
    %v813 = vsub.f32 %v699, %v147
    %v814 = vsub.f32 %v698, %v148
    %v815 = vsub.f32 %v699, %v149
    %v816 = vsub.f32 %v698, %v150
    %v817 = vsub.f32 %v699, %v151
    %v818 = vsub.f32 %v698, %v152
    %v819 = vsub.f32 %v699, %v153
    %v820 = vsub.f32 %v698, %v154
    %v821 = vsub.f32 %v699, %v155
    %v822 = vsub.f32 %v700, %v124
    %v823 = vsub.f32 %v701, %v125
    %v824 = vsub.f32 %v700, %v126
    %v825 = vsub.f32 %v701, %v127
    %v826 = vsub.f32 %v700, %v128
    %v827 = vsub.f32 %v701, %v129
    %v828 = vsub.f32 %v700, %v130
    %v829 = vsub.f32 %v701, %v131
    %v830 = vsub.f32 %v700, %v132
    %v831 = vsub.f32 %v701, %v133
    %v832 = vsub.f32 %v700, %v134
    %v833 = vsub.f32 %v701, %v135
    %v834 = vsub.f32 %v700, %v136
    %v835 = vsub.f32 %v701, %v137
    %v836 = vsub.f32 %v700, %v138
    %v837 = vsub.f32 %v701, %v139
    %v838 = vsub.f32 %v700, %v140
    %v839 = vsub.f32 %v701, %v141
    %v840 = vsub.f32 %v700, %v142
    %v841 = vsub.f32 %v701, %v143
    %v842 = vsub.f32 %v700, %v144
    %v843 = vsub.f32 %v701, %v145
    %v844 = vsub.f32 %v700, %v146
    %v845 = vsub.f32 %v701, %v147
    %v846 = vsub.f32 %v700, %v148
    %v847 = vsub.f32 %v701, %v149
    %v848 = vsub.f32 %v700, %v150
    %v849 = vsub.f32 %v701, %v151
    %v850 = vsub.f32 %v700, %v152
    %v851 = vsub.f32 %v701, %v153
    %v852 = vsub.f32 %v700, %v154
    %v853 = vsub.f32 %v701, %v155
    %v854 = vsub.f32 %v702, %v124
    %v855 = vsub.f32 %v703, %v125
    %v856 = vsub.f32 %v702, %v126
    %v857 = vsub.f32 %v703, %v127
    %v858 = vsub.f32 %v702, %v128
    %v859 = vsub.f32 %v703, %v129
    %v860 = vsub.f32 %v702, %v130
    %v861 = vsub.f32 %v703, %v131
    %v862 = vsub.f32 %v702, %v132
    %v863 = vsub.f32 %v703, %v133
    %v864 = vsub.f32 %v702, %v134
    %v865 = vsub.f32 %v703, %v135
    %v866 = vsub.f32 %v702, %v136
    %v867 = vsub.f32 %v703, %v137
    %v868 = vsub.f32 %v702, %v138
    %v869 = vsub.f32 %v703, %v139
    %v870 = vsub.f32 %v702, %v140
    %v871 = vsub.f32 %v703, %v141
    %v872 = vsub.f32 %v702, %v142
    %v873 = vsub.f32 %v703, %v143
    %v874 = vsub.f32 %v702, %v144
    %v875 = vsub.f32 %v703, %v145
    %v876 = vsub.f32 %v702, %v146
    %v877 = vsub.f32 %v703, %v147
    %v878 = vsub.f32 %v702, %v148
    %v879 = vsub.f32 %v703, %v149
    %v880 = vsub.f32 %v702, %v150
    %v881 = vsub.f32 %v703, %v151
    %v882 = vsub.f32 %v702, %v152
    %v883 = vsub.f32 %v703, %v153
    %v884 = vsub.f32 %v702, %v154
    %v885 = vsub.f32 %v703, %v155
    %v886 = vsub.f32 %v704, %v124
    %v887 = vsub.f32 %v705, %v125
    %v888 = vsub.f32 %v704, %v126
    %v889 = vsub.f32 %v705, %v127
    %v890 = vsub.f32 %v704, %v128
    %v891 = vsub.f32 %v705, %v129
    %v892 = vsub.f32 %v704, %v130
    %v893 = vsub.f32 %v705, %v131
    %v894 = vsub.f32 %v704, %v132
    %v895 = vsub.f32 %v705, %v133
    %v896 = vsub.f32 %v704, %v134
    %v897 = vsub.f32 %v705, %v135
    %v898 = vsub.f32 %v704, %v136
    %v899 = vsub.f32 %v705, %v137
    %v900 = vsub.f32 %v704, %v138
    %v901 = vsub.f32 %v705, %v139
    %v902 = vsub.f32 %v704, %v140
    %v903 = vsub.f32 %v705, %v141
    %v904 = vsub.f32 %v704, %v142
    %v905 = vsub.f32 %v705, %v143
    %v906 = vsub.f32 %v704, %v144
    %v907 = vsub.f32 %v705, %v145
    %v908 = vsub.f32 %v704, %v146
    %v909 = vsub.f32 %v705, %v147
    %v910 = vsub.f32 %v704, %v148
    %v911 = vsub.f32 %v705, %v149
    %v912 = vsub.f32 %v704, %v150
    %v913 = vsub.f32 %v705, %v151
    %v914 = vsub.f32 %v704, %v152
    %v915 = vsub.f32 %v705, %v153
    %v916 = vsub.f32 %v704, %v154
    %v917 = vsub.f32 %v705, %v155
    %v918 = vsub.f32 %v706, %v124
    %v919 = vsub.f32 %v707, %v125
    %v920 = vsub.f32 %v706, %v126
    %v921 = vsub.f32 %v707, %v127
    %v922 = vsub.f32 %v706, %v128
    %v923 = vsub.f32 %v707, %v129
    %v924 = vsub.f32 %v706, %v130
    %v925 = vsub.f32 %v707, %v131
    %v926 = vsub.f32 %v706, %v132
    %v927 = vsub.f32 %v707, %v133
    %v928 = vsub.f32 %v706, %v134
    %v929 = vsub.f32 %v707, %v135
    %v930 = vsub.f32 %v706, %v136
    %v931 = vsub.f32 %v707, %v137
    %v932 = vsub.f32 %v706, %v138
    %v933 = vsub.f32 %v707, %v139
    %v934 = vsub.f32 %v706, %v140
    %v935 = vsub.f32 %v707, %v141
    %v936 = vsub.f32 %v706, %v142
    %v937 = vsub.f32 %v707, %v143
    %v938 = vsub.f32 %v706, %v144
    %v939 = vsub.f32 %v707, %v145
    %v940 = vsub.f32 %v706, %v146
    %v941 = vsub.f32 %v707, %v147
    %v942 = vsub.f32 %v706, %v148
    %v943 = vsub.f32 %v707, %v149
    %v944 = vsub.f32 %v706, %v150
    %v945 = vsub.f32 %v707, %v151
    %v946 = vsub.f32 %v706, %v152
    %v947 = vsub.f32 %v707, %v153
    %v948 = vsub.f32 %v706, %v154
    %v949 = vsub.f32 %v707, %v155
    %v950 = vsub.f32 %v708, %v124
    %v951 = vsub.f32 %v709, %v125
    %v952 = vsub.f32 %v708, %v126
    %v953 = vsub.f32 %v709, %v127
    %v954 = vsub.f32 %v708, %v128
    %v955 = vsub.f32 %v709, %v129
    %v956 = vsub.f32 %v708, %v130
    %v957 = vsub.f32 %v709, %v131
    %v958 = vsub.f32 %v708, %v132
    %v959 = vsub.f32 %v709, %v133
    %v960 = vsub.f32 %v708, %v134
    %v961 = vsub.f32 %v709, %v135
    %v962 = vsub.f32 %v708, %v136
    %v963 = vsub.f32 %v709, %v137
    %v964 = vsub.f32 %v708, %v138
    %v965 = vsub.f32 %v709, %v139
    %v966 = vsub.f32 %v708, %v140
    %v967 = vsub.f32 %v709, %v141
    %v968 = vsub.f32 %v708, %v142
    %v969 = vsub.f32 %v709, %v143
    %v970 = vsub.f32 %v708, %v144
    %v971 = vsub.f32 %v709, %v145
    %v972 = vsub.f32 %v708, %v146
    %v973 = vsub.f32 %v709, %v147
    %v974 = vsub.f32 %v708, %v148
    %v975 = vsub.f32 %v709, %v149
    %v976 = vsub.f32 %v708, %v150
    %v977 = vsub.f32 %v709, %v151
    %v978 = vsub.f32 %v708, %v152
    %v979 = vsub.f32 %v709, %v153
    %v980 = vsub.f32 %v708, %v154
    %v981 = vsub.f32 %v709, %v155
    %v982 = vmul.f32 %v726, %v202
    %v983 = vmul.f32 %v727, %v217
    %v984 = vmul.f32 %v728, %v232
    %v985 = vmul.f32 %v729, %v247
    %v986 = vmul.f32 %v730, %v262
    %v987 = vmul.f32 %v731, %v277
    %v988 = vmul.f32 %v732, %v292
    %v989 = vmul.f32 %v733, %v307
    %v990 = vmul.f32 %v734, %v322
    %v991 = vmul.f32 %v735, %v337
    %v992 = vmul.f32 %v736, %v352
    %v993 = vmul.f32 %v737, %v367
    %v994 = vmul.f32 %v738, %v382
    %v995 = vmul.f32 %v739, %v397
    %v996 = vmul.f32 %v740, %v412
    %v997 = vmul.f32 %v741, %v427
    %v998 = vmul.f32 %v742, %v442
    %v999 = vmul.f32 %v743, %v457
    %v1000 = vmul.f32 %v744, %v472
    %v1001 = vmul.f32 %v745, %v487
    %v1002 = vmul.f32 %v746, %v502
    %v1003 = vmul.f32 %v747, %v517
    %v1004 = vmul.f32 %v748, %v532
    %v1005 = vmul.f32 %v749, %v547
    %v1006 = vmul.f32 %v750, %v562
    %v1007 = vmul.f32 %v751, %v577
    %v1008 = vmul.f32 %v752, %v592
    %v1009 = vmul.f32 %v753, %v607
    %v1010 = vmul.f32 %v754, %v622
    %v1011 = vmul.f32 %v755, %v637
    %v1012 = vmul.f32 %v756, %v652
    %v1013 = vmul.f32 %v757, %v667
    %v1014 = vmul.f32 %v758, %v202
    %v1015 = vmul.f32 %v759, %v217
    %v1016 = vmul.f32 %v760, %v232
    %v1017 = vmul.f32 %v761, %v247
    %v1018 = vmul.f32 %v762, %v262
    %v1019 = vmul.f32 %v763, %v277
    %v1020 = vmul.f32 %v764, %v292
    %v1021 = vmul.f32 %v765, %v307
    %v1022 = vmul.f32 %v766, %v322
    %v1023 = vmul.f32 %v767, %v337
    %v1024 = vmul.f32 %v768, %v352
    %v1025 = vmul.f32 %v769, %v367
    %v1026 = vmul.f32 %v770, %v382
    %v1027 = vmul.f32 %v771, %v397
    %v1028 = vmul.f32 %v772, %v412
    %v1029 = vmul.f32 %v773, %v427
    %v1030 = vmul.f32 %v774, %v442
    %v1031 = vmul.f32 %v775, %v457
    %v1032 = vmul.f32 %v776, %v472
    %v1033 = vmul.f32 %v777, %v487
    %v1034 = vmul.f32 %v778, %v502
    %v1035 = vmul.f32 %v779, %v517
    %v1036 = vmul.f32 %v780, %v532
    %v1037 = vmul.f32 %v781, %v547
    %v1038 = vmul.f32 %v782, %v562
    %v1039 = vmul.f32 %v783, %v577
    %v1040 = vmul.f32 %v784, %v592
    %v1041 = vmul.f32 %v785, %v607
    %v1042 = vmul.f32 %v786, %v622
    %v1043 = vmul.f32 %v787, %v637
    %v1044 = vmul.f32 %v788, %v652
    %v1045 = vmul.f32 %v789, %v667
    %v1046 = vmul.f32 %v790, %v202
    %v1047 = vmul.f32 %v791, %v217
    %v1048 = vmul.f32 %v792, %v232
    %v1049 = vmul.f32 %v793, %v247
    %v1050 = vmul.f32 %v794, %v262
    %v1051 = vmul.f32 %v795, %v277
    %v1052 = vmul.f32 %v796, %v292
    %v1053 = vmul.f32 %v797, %v307
    %v1054 = vmul.f32 %v798, %v322
    %v1055 = vmul.f32 %v799, %v337
    %v1056 = vmul.f32 %v800, %v352
    %v1057 = vmul.f32 %v801, %v367
    %v1058 = vmul.f32 %v802, %v382
    %v1059 = vmul.f32 %v803, %v397
    %v1060 = vmul.f32 %v804, %v412
    %v1061 = vmul.f32 %v805, %v427
    %v1062 = vmul.f32 %v806, %v442
    %v1063 = vmul.f32 %v807, %v457
    %v1064 = vmul.f32 %v808, %v472
    %v1065 = vmul.f32 %v809, %v487
    %v1066 = vmul.f32 %v810, %v502
    %v1067 = vmul.f32 %v811, %v517
    %v1068 = vmul.f32 %v812, %v532
    %v1069 = vmul.f32 %v813, %v547
    %v1070 = vmul.f32 %v814, %v562
    %v1071 = vmul.f32 %v815, %v577
    %v1072 = vmul.f32 %v816, %v592
    %v1073 = vmul.f32 %v817, %v607
    %v1074 = vmul.f32 %v818, %v622
    %v1075 = vmul.f32 %v819, %v637
    %v1076 = vmul.f32 %v820, %v652
    %v1077 = vmul.f32 %v821, %v667
    %v1078 = vmul.f32 %v822, %v202
    %v1079 = vmul.f32 %v823, %v217
    %v1080 = vmul.f32 %v824, %v232
    %v1081 = vmul.f32 %v825, %v247
    %v1082 = vmul.f32 %v826, %v262
    %v1083 = vmul.f32 %v827, %v277
    %v1084 = vmul.f32 %v828, %v292
    %v1085 = vmul.f32 %v829, %v307
    %v1086 = vmul.f32 %v830, %v322
    %v1087 = vmul.f32 %v831, %v337
    %v1088 = vmul.f32 %v832, %v352
    %v1089 = vmul.f32 %v833, %v367
    %v1090 = vmul.f32 %v834, %v382
    %v1091 = vmul.f32 %v835, %v397
    %v1092 = vmul.f32 %v836, %v412
    %v1093 = vmul.f32 %v837, %v427
    %v1094 = vmul.f32 %v838, %v442
    %v1095 = vmul.f32 %v839, %v457
    %v1096 = vmul.f32 %v840, %v472
    %v1097 = vmul.f32 %v841, %v487
    %v1098 = vmul.f32 %v842, %v502
    %v1099 = vmul.f32 %v843, %v517
    %v1100 = vmul.f32 %v844, %v532
    %v1101 = vmul.f32 %v845, %v547
    %v1102 = vmul.f32 %v846, %v562
    %v1103 = vmul.f32 %v847, %v577
    %v1104 = vmul.f32 %v848, %v592
    %v1105 = vmul.f32 %v849, %v607
    %v1106 = vmul.f32 %v850, %v622
    %v1107 = vmul.f32 %v851, %v637
    %v1108 = vmul.f32 %v852, %v652
    %v1109 = vmul.f32 %v853, %v667
    %v1110 = vmul.f32 %v854, %v202
    %v1111 = vmul.f32 %v855, %v217
    %v1112 = vmul.f32 %v856, %v232
    %v1113 = vmul.f32 %v857, %v247
    %v1114 = vmul.f32 %v858, %v262
    %v1115 = vmul.f32 %v859, %v277
    %v1116 = vmul.f32 %v860, %v292
    %v1117 = vmul.f32 %v861, %v307
    %v1118 = vmul.f32 %v862, %v322
    %v1119 = vmul.f32 %v863, %v337
    %v1120 = vmul.f32 %v864, %v352
    %v1121 = vmul.f32 %v865, %v367
    %v1122 = vmul.f32 %v866, %v382
    %v1123 = vmul.f32 %v867, %v397
    %v1124 = vmul.f32 %v868, %v412
    %v1125 = vmul.f32 %v869, %v427
    %v1126 = vmul.f32 %v870, %v442
    %v1127 = vmul.f32 %v871, %v457
    %v1128 = vmul.f32 %v872, %v472
    %v1129 = vmul.f32 %v873, %v487
    %v1130 = vmul.f32 %v874, %v502
    %v1131 = vmul.f32 %v875, %v517
    %v1132 = vmul.f32 %v876, %v532
    %v1133 = vmul.f32 %v877, %v547
    %v1134 = vmul.f32 %v878, %v562
    %v1135 = vmul.f32 %v879, %v577
    %v1136 = vmul.f32 %v880, %v592
    %v1137 = vmul.f32 %v881, %v607
    %v1138 = vmul.f32 %v882, %v622
    %v1139 = vmul.f32 %v883, %v637
    %v1140 = vmul.f32 %v884, %v652
    %v1141 = vmul.f32 %v885, %v667
    %v1142 = vmul.f32 %v886, %v202
    %v1143 = vmul.f32 %v887, %v217
    %v1144 = vmul.f32 %v888, %v232
    %v1145 = vmul.f32 %v889, %v247
    %v1146 = vmul.f32 %v890, %v262
    %v1147 = vmul.f32 %v891, %v277
    %v1148 = vmul.f32 %v892, %v292
    %v1149 = vmul.f32 %v893, %v307
    %v1150 = vmul.f32 %v894, %v322
    %v1151 = vmul.f32 %v895, %v337
    %v1152 = vmul.f32 %v896, %v352
    %v1153 = vmul.f32 %v897, %v367
    %v1154 = vmul.f32 %v898, %v382
    %v1155 = vmul.f32 %v899, %v397
    %v1156 = vmul.f32 %v900, %v412
    %v1157 = vmul.f32 %v901, %v427
    %v1158 = vmul.f32 %v902, %v442
    %v1159 = vmul.f32 %v903, %v457
    %v1160 = vmul.f32 %v904, %v472
    %v1161 = vmul.f32 %v905, %v487
    %v1162 = vmul.f32 %v906, %v502
    %v1163 = vmul.f32 %v907, %v517
    %v1164 = vmul.f32 %v908, %v532
    %v1165 = vmul.f32 %v909, %v547
    %v1166 = vmul.f32 %v910, %v562
    %v1167 = vmul.f32 %v911, %v577
    %v1168 = vmul.f32 %v912, %v592
    %v1169 = vmul.f32 %v913, %v607
    %v1170 = vmul.f32 %v914, %v622
    %v1171 = vmul.f32 %v915, %v637
    %v1172 = vmul.f32 %v916, %v652
    %v1173 = vmul.f32 %v917, %v667
    %v1174 = vmul.f32 %v918, %v202
    %v1175 = vmul.f32 %v919, %v217
    %v1176 = vmul.f32 %v920, %v232
    %v1177 = vmul.f32 %v921, %v247
    %v1178 = vmul.f32 %v922, %v262
    %v1179 = vmul.f32 %v923, %v277
    %v1180 = vmul.f32 %v924, %v292
    %v1181 = vmul.f32 %v925, %v307
    %v1182 = vmul.f32 %v926, %v322
    %v1183 = vmul.f32 %v927, %v337
    %v1184 = vmul.f32 %v928, %v352
    %v1185 = vmul.f32 %v929, %v367
    %v1186 = vmul.f32 %v930, %v382
    %v1187 = vmul.f32 %v931, %v397
    %v1188 = vmul.f32 %v932, %v412
    %v1189 = vmul.f32 %v933, %v427
    %v1190 = vmul.f32 %v934, %v442
    %v1191 = vmul.f32 %v935, %v457
    %v1192 = vmul.f32 %v936, %v472
    %v1193 = vmul.f32 %v937, %v487
    %v1194 = vmul.f32 %v938, %v502
    %v1195 = vmul.f32 %v939, %v517
    %v1196 = vmul.f32 %v940, %v532
    %v1197 = vmul.f32 %v941, %v547
    %v1198 = vmul.f32 %v942, %v562
    %v1199 = vmul.f32 %v943, %v577
    %v1200 = vmul.f32 %v944, %v592
    %v1201 = vmul.f32 %v945, %v607
    %v1202 = vmul.f32 %v946, %v622
    %v1203 = vmul.f32 %v947, %v637
    %v1204 = vmul.f32 %v948, %v652
    %v1205 = vmul.f32 %v949, %v667
    %v1206 = vmul.f32 %v950, %v202
    %v1207 = vmul.f32 %v951, %v217
    %v1208 = vmul.f32 %v952, %v232
    %v1209 = vmul.f32 %v953, %v247
    %v1210 = vmul.f32 %v954, %v262
    %v1211 = vmul.f32 %v955, %v277
    %v1212 = vmul.f32 %v956, %v292
    %v1213 = vmul.f32 %v957, %v307
    %v1214 = vmul.f32 %v958, %v322
    %v1215 = vmul.f32 %v959, %v337
    %v1216 = vmul.f32 %v960, %v352
    %v1217 = vmul.f32 %v961, %v367
    %v1218 = vmul.f32 %v962, %v382
    %v1219 = vmul.f32 %v963, %v397
    %v1220 = vmul.f32 %v964, %v412
    %v1221 = vmul.f32 %v965, %v427
    %v1222 = vmul.f32 %v966, %v442
    %v1223 = vmul.f32 %v967, %v457
    %v1224 = vmul.f32 %v968, %v472
    %v1225 = vmul.f32 %v969, %v487
    %v1226 = vmul.f32 %v970, %v502
    %v1227 = vmul.f32 %v971, %v517
    %v1228 = vmul.f32 %v972, %v532
    %v1229 = vmul.f32 %v973, %v547
    %v1230 = vmul.f32 %v974, %v562
    %v1231 = vmul.f32 %v975, %v577
    %v1232 = vmul.f32 %v976, %v592
    %v1233 = vmul.f32 %v977, %v607
    %v1234 = vmul.f32 %v978, %v622
    %v1235 = vmul.f32 %v979, %v637
    %v1236 = vmul.f32 %v980, %v652
    %v1237 = vmul.f32 %v981, %v667
    %v1238 = vmul.f32 %v982, %v982
    %v1239 = vmul.f32 %v983, %v983
    %v1240 = vmul.f32 %v984, %v984
    %v1241 = vmul.f32 %v985, %v985
    %v1242 = vmul.f32 %v986, %v986
    %v1243 = vmul.f32 %v987, %v987
    %v1244 = vmul.f32 %v988, %v988
    %v1245 = vmul.f32 %v989, %v989
    %v1246 = vmul.f32 %v990, %v990
    %v1247 = vmul.f32 %v991, %v991
    %v1248 = vmul.f32 %v992, %v992
    %v1249 = vmul.f32 %v993, %v993
    %v1250 = vmul.f32 %v994, %v994
    %v1251 = vmul.f32 %v995, %v995
    %v1252 = vmul.f32 %v996, %v996
    %v1253 = vmul.f32 %v997, %v997
    %v1254 = vmul.f32 %v998, %v998
    %v1255 = vmul.f32 %v999, %v999
    %v1256 = vmul.f32 %v1000, %v1000
    %v1257 = vmul.f32 %v1001, %v1001
    %v1258 = vmul.f32 %v1002, %v1002
    %v1259 = vmul.f32 %v1003, %v1003
    %v1260 = vmul.f32 %v1004, %v1004
    %v1261 = vmul.f32 %v1005, %v1005
    %v1262 = vmul.f32 %v1006, %v1006
    %v1263 = vmul.f32 %v1007, %v1007
    %v1264 = vmul.f32 %v1008, %v1008
    %v1265 = vmul.f32 %v1009, %v1009
    %v1266 = vmul.f32 %v1010, %v1010
    %v1267 = vmul.f32 %v1011, %v1011
    %v1268 = vmul.f32 %v1012, %v1012
    %v1269 = vmul.f32 %v1013, %v1013
    %v1270 = vmul.f32 %v1014, %v1014
    %v1271 = vmul.f32 %v1015, %v1015
    %v1272 = vmul.f32 %v1016, %v1016
    %v1273 = vmul.f32 %v1017, %v1017
    %v1274 = vmul.f32 %v1018, %v1018
    %v1275 = vmul.f32 %v1019, %v1019
    %v1276 = vmul.f32 %v1020, %v1020
    %v1277 = vmul.f32 %v1021, %v1021
    %v1278 = vmul.f32 %v1022, %v1022
    %v1279 = vmul.f32 %v1023, %v1023
    %v1280 = vmul.f32 %v1024, %v1024
    %v1281 = vmul.f32 %v1025, %v1025
    %v1282 = vmul.f32 %v1026, %v1026
    %v1283 = vmul.f32 %v1027, %v1027
    %v1284 = vmul.f32 %v1028, %v1028
    %v1285 = vmul.f32 %v1029, %v1029
    %v1286 = vmul.f32 %v1030, %v1030
    %v1287 = vmul.f32 %v1031, %v1031
    %v1288 = vmul.f32 %v1032, %v1032
    %v1289 = vmul.f32 %v1033, %v1033
    %v1290 = vmul.f32 %v1034, %v1034
    %v1291 = vmul.f32 %v1035, %v1035
    %v1292 = vmul.f32 %v1036, %v1036
    %v1293 = vmul.f32 %v1037, %v1037
    %v1294 = vmul.f32 %v1038, %v1038
    %v1295 = vmul.f32 %v1039, %v1039
    %v1296 = vmul.f32 %v1040, %v1040
    %v1297 = vmul.f32 %v1041, %v1041
    %v1298 = vmul.f32 %v1042, %v1042
    %v1299 = vmul.f32 %v1043, %v1043
    %v1300 = vmul.f32 %v1044, %v1044
    %v1301 = vmul.f32 %v1045, %v1045
    %v1302 = vmul.f32 %v1046, %v1046
    %v1303 = vmul.f32 %v1047, %v1047
    %v1304 = vmul.f32 %v1048, %v1048
    %v1305 = vmul.f32 %v1049, %v1049
    %v1306 = vmul.f32 %v1050, %v1050
    %v1307 = vmul.f32 %v1051, %v1051
    %v1308 = vmul.f32 %v1052, %v1052
    %v1309 = vmul.f32 %v1053, %v1053
    %v1310 = vmul.f32 %v1054, %v1054
    %v1311 = vmul.f32 %v1055, %v1055
    %v1312 = vmul.f32 %v1056, %v1056
    %v1313 = vmul.f32 %v1057, %v1057
    %v1314 = vmul.f32 %v1058, %v1058
    %v1315 = vmul.f32 %v1059, %v1059
    %v1316 = vmul.f32 %v1060, %v1060
    %v1317 = vmul.f32 %v1061, %v1061
    %v1318 = vmul.f32 %v1062, %v1062
    %v1319 = vmul.f32 %v1063, %v1063
    %v1320 = vmul.f32 %v1064, %v1064
    %v1321 = vmul.f32 %v1065, %v1065
    %v1322 = vmul.f32 %v1066, %v1066
    %v1323 = vmul.f32 %v1067, %v1067
    %v1324 = vmul.f32 %v1068, %v1068
    %v1325 = vmul.f32 %v1069, %v1069
    %v1326 = vmul.f32 %v1070, %v1070
    %v1327 = vmul.f32 %v1071, %v1071
    %v1328 = vmul.f32 %v1072, %v1072
    %v1329 = vmul.f32 %v1073, %v1073
    %v1330 = vmul.f32 %v1074, %v1074
    %v1331 = vmul.f32 %v1075, %v1075
    %v1332 = vmul.f32 %v1076, %v1076
    %v1333 = vmul.f32 %v1077, %v1077
    %v1334 = vmul.f32 %v1078, %v1078
    %v1335 = vmul.f32 %v1079, %v1079
    %v1336 = vmul.f32 %v1080, %v1080
    %v1337 = vmul.f32 %v1081, %v1081
    %v1338 = vmul.f32 %v1082, %v1082
    %v1339 = vmul.f32 %v1083, %v1083
    %v1340 = vmul.f32 %v1084, %v1084
    %v1341 = vmul.f32 %v1085, %v1085
    %v1342 = vmul.f32 %v1086, %v1086
    %v1343 = vmul.f32 %v1087, %v1087
    %v1344 = vmul.f32 %v1088, %v1088
    %v1345 = vmul.f32 %v1089, %v1089
    %v1346 = vmul.f32 %v1090, %v1090
    %v1347 = vmul.f32 %v1091, %v1091
    %v1348 = vmul.f32 %v1092, %v1092
    %v1349 = vmul.f32 %v1093, %v1093
    %v1350 = vmul.f32 %v1094, %v1094
    %v1351 = vmul.f32 %v1095, %v1095
    %v1352 = vmul.f32 %v1096, %v1096
    %v1353 = vmul.f32 %v1097, %v1097
    %v1354 = vmul.f32 %v1098, %v1098
    %v1355 = vmul.f32 %v1099, %v1099
    %v1356 = vmul.f32 %v1100, %v1100
    %v1357 = vmul.f32 %v1101, %v1101
    %v1358 = vmul.f32 %v1102, %v1102
    %v1359 = vmul.f32 %v1103, %v1103
    %v1360 = vmul.f32 %v1104, %v1104
    %v1361 = vmul.f32 %v1105, %v1105
    %v1362 = vmul.f32 %v1106, %v1106
    %v1363 = vmul.f32 %v1107, %v1107
    %v1364 = vmul.f32 %v1108, %v1108
    %v1365 = vmul.f32 %v1109, %v1109
    %v1366 = vmul.f32 %v1110, %v1110
    %v1367 = vmul.f32 %v1111, %v1111
    %v1368 = vmul.f32 %v1112, %v1112
    %v1369 = vmul.f32 %v1113, %v1113
    %v1370 = vmul.f32 %v1114, %v1114
    %v1371 = vmul.f32 %v1115, %v1115
    %v1372 = vmul.f32 %v1116, %v1116
    %v1373 = vmul.f32 %v1117, %v1117
    %v1374 = vmul.f32 %v1118, %v1118
    %v1375 = vmul.f32 %v1119, %v1119
    %v1376 = vmul.f32 %v1120, %v1120
    %v1377 = vmul.f32 %v1121, %v1121
    %v1378 = vmul.f32 %v1122, %v1122
    %v1379 = vmul.f32 %v1123, %v1123
    %v1380 = vmul.f32 %v1124, %v1124
    %v1381 = vmul.f32 %v1125, %v1125
    %v1382 = vmul.f32 %v1126, %v1126
    %v1383 = vmul.f32 %v1127, %v1127
    %v1384 = vmul.f32 %v1128, %v1128
    %v1385 = vmul.f32 %v1129, %v1129
    %v1386 = vmul.f32 %v1130, %v1130
    %v1387 = vmul.f32 %v1131, %v1131
    %v1388 = vmul.f32 %v1132, %v1132
    %v1389 = vmul.f32 %v1133, %v1133
    %v1390 = vmul.f32 %v1134, %v1134
    %v1391 = vmul.f32 %v1135, %v1135
    %v1392 = vmul.f32 %v1136, %v1136
    %v1393 = vmul.f32 %v1137, %v1137
    %v1394 = vmul.f32 %v1138, %v1138
    %v1395 = vmul.f32 %v1139, %v1139
    %v1396 = vmul.f32 %v1140, %v1140
    %v1397 = vmul.f32 %v1141, %v1141
    %v1398 = vmul.f32 %v1142, %v1142
    %v1399 = vmul.f32 %v1143, %v1143
    %v1400 = vmul.f32 %v1144, %v1144
    %v1401 = vmul.f32 %v1145, %v1145
    %v1402 = vmul.f32 %v1146, %v1146
    %v1403 = vmul.f32 %v1147, %v1147
    %v1404 = vmul.f32 %v1148, %v1148
    %v1405 = vmul.f32 %v1149, %v1149
    %v1406 = vmul.f32 %v1150, %v1150
    %v1407 = vmul.f32 %v1151, %v1151
    %v1408 = vmul.f32 %v1152, %v1152
    %v1409 = vmul.f32 %v1153, %v1153
    %v1410 = vmul.f32 %v1154, %v1154
    %v1411 = vmul.f32 %v1155, %v1155
    %v1412 = vmul.f32 %v1156, %v1156
    %v1413 = vmul.f32 %v1157, %v1157
    %v1414 = vmul.f32 %v1158, %v1158
    %v1415 = vmul.f32 %v1159, %v1159
    %v1416 = vmul.f32 %v1160, %v1160
    %v1417 = vmul.f32 %v1161, %v1161
    %v1418 = vmul.f32 %v1162, %v1162
    %v1419 = vmul.f32 %v1163, %v1163
    %v1420 = vmul.f32 %v1164, %v1164
    %v1421 = vmul.f32 %v1165, %v1165
    %v1422 = vmul.f32 %v1166, %v1166
    %v1423 = vmul.f32 %v1167, %v1167
    %v1424 = vmul.f32 %v1168, %v1168
    %v1425 = vmul.f32 %v1169, %v1169
    %v1426 = vmul.f32 %v1170, %v1170
    %v1427 = vmul.f32 %v1171, %v1171
    %v1428 = vmul.f32 %v1172, %v1172
    %v1429 = vmul.f32 %v1173, %v1173
    %v1430 = vmul.f32 %v1174, %v1174
    %v1431 = vmul.f32 %v1175, %v1175
    %v1432 = vmul.f32 %v1176, %v1176
    %v1433 = vmul.f32 %v1177, %v1177
    %v1434 = vmul.f32 %v1178, %v1178
    %v1435 = vmul.f32 %v1179, %v1179
    %v1436 = vmul.f32 %v1180, %v1180
    %v1437 = vmul.f32 %v1181, %v1181
    %v1438 = vmul.f32 %v1182, %v1182
    %v1439 = vmul.f32 %v1183, %v1183
    %v1440 = vmul.f32 %v1184, %v1184
    %v1441 = vmul.f32 %v1185, %v1185
    %v1442 = vmul.f32 %v1186, %v1186
    %v1443 = vmul.f32 %v1187, %v1187
    %v1444 = vmul.f32 %v1188, %v1188
    %v1445 = vmul.f32 %v1189, %v1189
    %v1446 = vmul.f32 %v1190, %v1190
    %v1447 = vmul.f32 %v1191, %v1191
    %v1448 = vmul.f32 %v1192, %v1192
    %v1449 = vmul.f32 %v1193, %v1193
    %v1450 = vmul.f32 %v1194, %v1194
    %v1451 = vmul.f32 %v1195, %v1195
    %v1452 = vmul.f32 %v1196, %v1196
    %v1453 = vmul.f32 %v1197, %v1197
    %v1454 = vmul.f32 %v1198, %v1198
    %v1455 = vmul.f32 %v1199, %v1199
    %v1456 = vmul.f32 %v1200, %v1200
    %v1457 = vmul.f32 %v1201, %v1201
    %v1458 = vmul.f32 %v1202, %v1202
    %v1459 = vmul.f32 %v1203, %v1203
    %v1460 = vmul.f32 %v1204, %v1204
    %v1461 = vmul.f32 %v1205, %v1205
    %v1462 = vmul.f32 %v1206, %v1206
    %v1463 = vmul.f32 %v1207, %v1207
    %v1464 = vmul.f32 %v1208, %v1208
    %v1465 = vmul.f32 %v1209, %v1209
    %v1466 = vmul.f32 %v1210, %v1210
    %v1467 = vmul.f32 %v1211, %v1211
    %v1468 = vmul.f32 %v1212, %v1212
    %v1469 = vmul.f32 %v1213, %v1213
    %v1470 = vmul.f32 %v1214, %v1214
    %v1471 = vmul.f32 %v1215, %v1215
    %v1472 = vmul.f32 %v1216, %v1216
    %v1473 = vmul.f32 %v1217, %v1217
    %v1474 = vmul.f32 %v1218, %v1218
    %v1475 = vmul.f32 %v1219, %v1219
    %v1476 = vmul.f32 %v1220, %v1220
    %v1477 = vmul.f32 %v1221, %v1221
    %v1478 = vmul.f32 %v1222, %v1222
    %v1479 = vmul.f32 %v1223, %v1223
    %v1480 = vmul.f32 %v1224, %v1224
    %v1481 = vmul.f32 %v1225, %v1225
    %v1482 = vmul.f32 %v1226, %v1226
    %v1483 = vmul.f32 %v1227, %v1227
    %v1484 = vmul.f32 %v1228, %v1228
    %v1485 = vmul.f32 %v1229, %v1229
    %v1486 = vmul.f32 %v1230, %v1230
    %v1487 = vmul.f32 %v1231, %v1231
    %v1488 = vmul.f32 %v1232, %v1232
    %v1489 = vmul.f32 %v1233, %v1233
    %v1490 = vmul.f32 %v1234, %v1234
    %v1491 = vmul.f32 %v1235, %v1235
    %v1492 = vmul.f32 %v1236, %v1236
    %v1493 = vmul.f32 %v1237, %v1237
    %v1494 = vsub.f32 %v1238, 1.0
    %v1495 = vsub.f32 %v1239, 1.0
    %v1496 = vsub.f32 %v1240, 1.0
    %v1497 = vsub.f32 %v1241, 1.0
    %v1498 = vsub.f32 %v1242, 1.0
    %v1499 = vsub.f32 %v1243, 1.0
    %v1500 = vsub.f32 %v1244, 1.0
    %v1501 = vsub.f32 %v1245, 1.0
    %v1502 = vsub.f32 %v1246, 1.0
    %v1503 = vsub.f32 %v1247, 1.0
    %v1504 = vsub.f32 %v1248, 1.0
    %v1505 = vsub.f32 %v1249, 1.0
    %v1506 = vsub.f32 %v1250, 1.0
    %v1507 = vsub.f32 %v1251, 1.0
    %v1508 = vsub.f32 %v1252, 1.0
    %v1509 = vsub.f32 %v1253, 1.0
    %v1510 = vsub.f32 %v1254, 1.0
    %v1511 = vsub.f32 %v1255, 1.0
    %v1512 = vsub.f32 %v1256, 1.0
    %v1513 = vsub.f32 %v1257, 1.0
    %v1514 = vsub.f32 %v1258, 1.0
    %v1515 = vsub.f32 %v1259, 1.0
    %v1516 = vsub.f32 %v1260, 1.0
    %v1517 = vsub.f32 %v1261, 1.0
    %v1518 = vsub.f32 %v1262, 1.0
    %v1519 = vsub.f32 %v1263, 1.0
    %v1520 = vsub.f32 %v1264, 1.0
    %v1521 = vsub.f32 %v1265, 1.0
    %v1522 = vsub.f32 %v1266, 1.0
    %v1523 = vsub.f32 %v1267, 1.0
    %v1524 = vsub.f32 %v1268, 1.0
    %v1525 = vsub.f32 %v1269, 1.0
    %v1526 = vsub.f32 %v1270, 1.0
    %v1527 = vsub.f32 %v1271, 1.0
    %v1528 = vsub.f32 %v1272, 1.0
    %v1529 = vsub.f32 %v1273, 1.0
    %v1530 = vsub.f32 %v1274, 1.0
    %v1531 = vsub.f32 %v1275, 1.0
    %v1532 = vsub.f32 %v1276, 1.0
    %v1533 = vsub.f32 %v1277, 1.0
    %v1534 = vsub.f32 %v1278, 1.0
    %v1535 = vsub.f32 %v1279, 1.0
    %v1536 = vsub.f32 %v1280, 1.0
    %v1537 = vsub.f32 %v1281, 1.0
    %v1538 = vsub.f32 %v1282, 1.0
    %v1539 = vsub.f32 %v1283, 1.0
    %v1540 = vsub.f32 %v1284, 1.0
    %v1541 = vsub.f32 %v1285, 1.0
    %v1542 = vsub.f32 %v1286, 1.0
    %v1543 = vsub.f32 %v1287, 1.0
    %v1544 = vsub.f32 %v1288, 1.0
    %v1545 = vsub.f32 %v1289, 1.0
    %v1546 = vsub.f32 %v1290, 1.0
    %v1547 = vsub.f32 %v1291, 1.0
    %v1548 = vsub.f32 %v1292, 1.0
    %v1549 = vsub.f32 %v1293, 1.0
    %v1550 = vsub.f32 %v1294, 1.0
    %v1551 = vsub.f32 %v1295, 1.0
    %v1552 = vsub.f32 %v1296, 1.0
    %v1553 = vsub.f32 %v1297, 1.0
    %v1554 = vsub.f32 %v1298, 1.0
    %v1555 = vsub.f32 %v1299, 1.0
    %v1556 = vsub.f32 %v1300, 1.0
    %v1557 = vsub.f32 %v1301, 1.0
    %v1558 = vsub.f32 %v1302, 1.0
    %v1559 = vsub.f32 %v1303, 1.0
    %v1560 = vsub.f32 %v1304, 1.0
    %v1561 = vsub.f32 %v1305, 1.0
    %v1562 = vsub.f32 %v1306, 1.0
    %v1563 = vsub.f32 %v1307, 1.0
    %v1564 = vsub.f32 %v1308, 1.0
    %v1565 = vsub.f32 %v1309, 1.0
    %v1566 = vsub.f32 %v1310, 1.0
    %v1567 = vsub.f32 %v1311, 1.0
    %v1568 = vsub.f32 %v1312, 1.0
    %v1569 = vsub.f32 %v1313, 1.0
    %v1570 = vsub.f32 %v1314, 1.0
    %v1571 = vsub.f32 %v1315, 1.0
    %v1572 = vsub.f32 %v1316, 1.0
    %v1573 = vsub.f32 %v1317, 1.0
    %v1574 = vsub.f32 %v1318, 1.0
    %v1575 = vsub.f32 %v1319, 1.0
    %v1576 = vsub.f32 %v1320, 1.0
    %v1577 = vsub.f32 %v1321, 1.0
    %v1578 = vsub.f32 %v1322, 1.0
    %v1579 = vsub.f32 %v1323, 1.0
    %v1580 = vsub.f32 %v1324, 1.0
    %v1581 = vsub.f32 %v1325, 1.0
    %v1582 = vsub.f32 %v1326, 1.0
    %v1583 = vsub.f32 %v1327, 1.0
    %v1584 = vsub.f32 %v1328, 1.0
    %v1585 = vsub.f32 %v1329, 1.0
    %v1586 = vsub.f32 %v1330, 1.0
    %v1587 = vsub.f32 %v1331, 1.0
    %v1588 = vsub.f32 %v1332, 1.0
    %v1589 = vsub.f32 %v1333, 1.0
    %v1590 = vsub.f32 %v1334, 1.0
    %v1591 = vsub.f32 %v1335, 1.0
    %v1592 = vsub.f32 %v1336, 1.0
    %v1593 = vsub.f32 %v1337, 1.0
    %v1594 = vsub.f32 %v1338, 1.0
    %v1595 = vsub.f32 %v1339, 1.0
    %v1596 = vsub.f32 %v1340, 1.0
    %v1597 = vsub.f32 %v1341, 1.0
    %v1598 = vsub.f32 %v1342, 1.0
    %v1599 = vsub.f32 %v1343, 1.0
    %v1600 = vsub.f32 %v1344, 1.0
    %v1601 = vsub.f32 %v1345, 1.0
    %v1602 = vsub.f32 %v1346, 1.0
    %v1603 = vsub.f32 %v1347, 1.0
    %v1604 = vsub.f32 %v1348, 1.0
    %v1605 = vsub.f32 %v1349, 1.0
    %v1606 = vsub.f32 %v1350, 1.0
    %v1607 = vsub.f32 %v1351, 1.0
    %v1608 = vsub.f32 %v1352, 1.0
    %v1609 = vsub.f32 %v1353, 1.0
    %v1610 = vsub.f32 %v1354, 1.0
    %v1611 = vsub.f32 %v1355, 1.0
    %v1612 = vsub.f32 %v1356, 1.0
    %v1613 = vsub.f32 %v1357, 1.0
    %v1614 = vsub.f32 %v1358, 1.0
    %v1615 = vsub.f32 %v1359, 1.0
    %v1616 = vsub.f32 %v1360, 1.0
    %v1617 = vsub.f32 %v1361, 1.0
    %v1618 = vsub.f32 %v1362, 1.0
    %v1619 = vsub.f32 %v1363, 1.0
    %v1620 = vsub.f32 %v1364, 1.0
    %v1621 = vsub.f32 %v1365, 1.0
    %v1622 = vsub.f32 %v1366, 1.0
    %v1623 = vsub.f32 %v1367, 1.0
    %v1624 = vsub.f32 %v1368, 1.0
    %v1625 = vsub.f32 %v1369, 1.0
    %v1626 = vsub.f32 %v1370, 1.0
    %v1627 = vsub.f32 %v1371, 1.0
    %v1628 = vsub.f32 %v1372, 1.0
    %v1629 = vsub.f32 %v1373, 1.0
    %v1630 = vsub.f32 %v1374, 1.0
    %v1631 = vsub.f32 %v1375, 1.0
    %v1632 = vsub.f32 %v1376, 1.0
    %v1633 = vsub.f32 %v1377, 1.0
    %v1634 = vsub.f32 %v1378, 1.0
    %v1635 = vsub.f32 %v1379, 1.0
    %v1636 = vsub.f32 %v1380, 1.0
    %v1637 = vsub.f32 %v1381, 1.0
    %v1638 = vsub.f32 %v1382, 1.0
    %v1639 = vsub.f32 %v1383, 1.0
    %v1640 = vsub.f32 %v1384, 1.0
    %v1641 = vsub.f32 %v1385, 1.0
    %v1642 = vsub.f32 %v1386, 1.0
    %v1643 = vsub.f32 %v1387, 1.0
    %v1644 = vsub.f32 %v1388, 1.0
    %v1645 = vsub.f32 %v1389, 1.0
    %v1646 = vsub.f32 %v1390, 1.0
    %v1647 = vsub.f32 %v1391, 1.0
    %v1648 = vsub.f32 %v1392, 1.0
    %v1649 = vsub.f32 %v1393, 1.0
    %v1650 = vsub.f32 %v1394, 1.0
    %v1651 = vsub.f32 %v1395, 1.0
    %v1652 = vsub.f32 %v1396, 1.0
    %v1653 = vsub.f32 %v1397, 1.0
    %v1654 = vsub.f32 %v1398, 1.0
    %v1655 = vsub.f32 %v1399, 1.0
    %v1656 = vsub.f32 %v1400, 1.0
    %v1657 = vsub.f32 %v1401, 1.0
    %v1658 = vsub.f32 %v1402, 1.0
    %v1659 = vsub.f32 %v1403, 1.0
    %v1660 = vsub.f32 %v1404, 1.0
    %v1661 = vsub.f32 %v1405, 1.0
    %v1662 = vsub.f32 %v1406, 1.0
    %v1663 = vsub.f32 %v1407, 1.0
    %v1664 = vsub.f32 %v1408, 1.0
    %v1665 = vsub.f32 %v1409, 1.0
    %v1666 = vsub.f32 %v1410, 1.0
    %v1667 = vsub.f32 %v1411, 1.0
    %v1668 = vsub.f32 %v1412, 1.0
    %v1669 = vsub.f32 %v1413, 1.0
    %v1670 = vsub.f32 %v1414, 1.0
    %v1671 = vsub.f32 %v1415, 1.0
    %v1672 = vsub.f32 %v1416, 1.0
    %v1673 = vsub.f32 %v1417, 1.0
    %v1674 = vsub.f32 %v1418, 1.0
    %v1675 = vsub.f32 %v1419, 1.0
    %v1676 = vsub.f32 %v1420, 1.0
    %v1677 = vsub.f32 %v1421, 1.0
    %v1678 = vsub.f32 %v1422, 1.0
    %v1679 = vsub.f32 %v1423, 1.0
    %v1680 = vsub.f32 %v1424, 1.0
    %v1681 = vsub.f32 %v1425, 1.0
    %v1682 = vsub.f32 %v1426, 1.0
    %v1683 = vsub.f32 %v1427, 1.0
    %v1684 = vsub.f32 %v1428, 1.0
    %v1685 = vsub.f32 %v1429, 1.0
    %v1686 = vsub.f32 %v1430, 1.0
    %v1687 = vsub.f32 %v1431, 1.0
    %v1688 = vsub.f32 %v1432, 1.0
    %v1689 = vsub.f32 %v1433, 1.0
    %v1690 = vsub.f32 %v1434, 1.0
    %v1691 = vsub.f32 %v1435, 1.0
    %v1692 = vsub.f32 %v1436, 1.0
    %v1693 = vsub.f32 %v1437, 1.0
    %v1694 = vsub.f32 %v1438, 1.0
    %v1695 = vsub.f32 %v1439, 1.0
    %v1696 = vsub.f32 %v1440, 1.0
    %v1697 = vsub.f32 %v1441, 1.0
    %v1698 = vsub.f32 %v1442, 1.0
    %v1699 = vsub.f32 %v1443, 1.0
    %v1700 = vsub.f32 %v1444, 1.0
    %v1701 = vsub.f32 %v1445, 1.0
    %v1702 = vsub.f32 %v1446, 1.0
    %v1703 = vsub.f32 %v1447, 1.0
    %v1704 = vsub.f32 %v1448, 1.0
    %v1705 = vsub.f32 %v1449, 1.0
    %v1706 = vsub.f32 %v1450, 1.0
    %v1707 = vsub.f32 %v1451, 1.0
    %v1708 = vsub.f32 %v1452, 1.0
    %v1709 = vsub.f32 %v1453, 1.0
    %v1710 = vsub.f32 %v1454, 1.0
    %v1711 = vsub.f32 %v1455, 1.0
    %v1712 = vsub.f32 %v1456, 1.0
    %v1713 = vsub.f32 %v1457, 1.0
    %v1714 = vsub.f32 %v1458, 1.0
    %v1715 = vsub.f32 %v1459, 1.0
    %v1716 = vsub.f32 %v1460, 1.0
    %v1717 = vsub.f32 %v1461, 1.0
    %v1718 = vsub.f32 %v1462, 1.0
    %v1719 = vsub.f32 %v1463, 1.0
    %v1720 = vsub.f32 %v1464, 1.0
    %v1721 = vsub.f32 %v1465, 1.0
    %v1722 = vsub.f32 %v1466, 1.0
    %v1723 = vsub.f32 %v1467, 1.0
    %v1724 = vsub.f32 %v1468, 1.0
    %v1725 = vsub.f32 %v1469, 1.0
    %v1726 = vsub.f32 %v1470, 1.0
    %v1727 = vsub.f32 %v1471, 1.0
    %v1728 = vsub.f32 %v1472, 1.0
    %v1729 = vsub.f32 %v1473, 1.0
    %v1730 = vsub.f32 %v1474, 1.0
    %v1731 = vsub.f32 %v1475, 1.0
    %v1732 = vsub.f32 %v1476, 1.0
    %v1733 = vsub.f32 %v1477, 1.0
    %v1734 = vsub.f32 %v1478, 1.0
    %v1735 = vsub.f32 %v1479, 1.0
    %v1736 = vsub.f32 %v1480, 1.0
    %v1737 = vsub.f32 %v1481, 1.0
    %v1738 = vsub.f32 %v1482, 1.0
    %v1739 = vsub.f32 %v1483, 1.0
    %v1740 = vsub.f32 %v1484, 1.0
    %v1741 = vsub.f32 %v1485, 1.0
    %v1742 = vsub.f32 %v1486, 1.0
    %v1743 = vsub.f32 %v1487, 1.0
    %v1744 = vsub.f32 %v1488, 1.0
    %v1745 = vsub.f32 %v1489, 1.0
    %v1746 = vsub.f32 %v1490, 1.0
    %v1747 = vsub.f32 %v1491, 1.0
    %v1748 = vsub.f32 %v1492, 1.0
    %v1749 = vsub.f32 %v1493, 1.0
    %v1750 = vmul.f32 %v1238, -0.5
    %v1751 = vmul.f32 %v1239, -0.5
    %v1752 = vmul.f32 %v1240, -0.5
    %v1753 = vmul.f32 %v1241, -0.5
    %v1754 = vmul.f32 %v1242, -0.5
    %v1755 = vmul.f32 %v1243, -0.5
    %v1756 = vmul.f32 %v1244, -0.5
    %v1757 = vmul.f32 %v1245, -0.5
    %v1758 = vmul.f32 %v1246, -0.5
    %v1759 = vmul.f32 %v1247, -0.5
    %v1760 = vmul.f32 %v1248, -0.5
    %v1761 = vmul.f32 %v1249, -0.5
    %v1762 = vmul.f32 %v1250, -0.5
    %v1763 = vmul.f32 %v1251, -0.5
    %v1764 = vmul.f32 %v1252, -0.5
    %v1765 = vmul.f32 %v1253, -0.5
    %v1766 = vmul.f32 %v1254, -0.5
    %v1767 = vmul.f32 %v1255, -0.5
    %v1768 = vmul.f32 %v1256, -0.5
    %v1769 = vmul.f32 %v1257, -0.5
    %v1770 = vmul.f32 %v1258, -0.5
    %v1771 = vmul.f32 %v1259, -0.5
    %v1772 = vmul.f32 %v1260, -0.5
    %v1773 = vmul.f32 %v1261, -0.5
    %v1774 = vmul.f32 %v1262, -0.5
    %v1775 = vmul.f32 %v1263, -0.5
    %v1776 = vmul.f32 %v1264, -0.5
    %v1777 = vmul.f32 %v1265, -0.5
    %v1778 = vmul.f32 %v1266, -0.5
    %v1779 = vmul.f32 %v1267, -0.5
    %v1780 = vmul.f32 %v1268, -0.5
    %v1781 = vmul.f32 %v1269, -0.5
    %v1782 = vmul.f32 %v1270, -0.5
    %v1783 = vmul.f32 %v1271, -0.5
    %v1784 = vmul.f32 %v1272, -0.5
    %v1785 = vmul.f32 %v1273, -0.5
    %v1786 = vmul.f32 %v1274, -0.5
    %v1787 = vmul.f32 %v1275, -0.5
    %v1788 = vmul.f32 %v1276, -0.5
    %v1789 = vmul.f32 %v1277, -0.5
    %v1790 = vmul.f32 %v1278, -0.5
    %v1791 = vmul.f32 %v1279, -0.5
    %v1792 = vmul.f32 %v1280, -0.5
    %v1793 = vmul.f32 %v1281, -0.5
    %v1794 = vmul.f32 %v1282, -0.5
    %v1795 = vmul.f32 %v1283, -0.5
    %v1796 = vmul.f32 %v1284, -0.5
    %v1797 = vmul.f32 %v1285, -0.5
    %v1798 = vmul.f32 %v1286, -0.5
    %v1799 = vmul.f32 %v1287, -0.5
    %v1800 = vmul.f32 %v1288, -0.5
    %v1801 = vmul.f32 %v1289, -0.5
    %v1802 = vmul.f32 %v1290, -0.5
    %v1803 = vmul.f32 %v1291, -0.5
    %v1804 = vmul.f32 %v1292, -0.5
    %v1805 = vmul.f32 %v1293, -0.5
    %v1806 = vmul.f32 %v1294, -0.5
    %v1807 = vmul.f32 %v1295, -0.5
    %v1808 = vmul.f32 %v1296, -0.5
    %v1809 = vmul.f32 %v1297, -0.5
    %v1810 = vmul.f32 %v1298, -0.5
    %v1811 = vmul.f32 %v1299, -0.5
    %v1812 = vmul.f32 %v1300, -0.5
    %v1813 = vmul.f32 %v1301, -0.5
    %v1814 = vmul.f32 %v1302, -0.5
    %v1815 = vmul.f32 %v1303, -0.5
    %v1816 = vmul.f32 %v1304, -0.5
    %v1817 = vmul.f32 %v1305, -0.5
    %v1818 = vmul.f32 %v1306, -0.5
    %v1819 = vmul.f32 %v1307, -0.5
    %v1820 = vmul.f32 %v1308, -0.5
    %v1821 = vmul.f32 %v1309, -0.5
    %v1822 = vmul.f32 %v1310, -0.5
    %v1823 = vmul.f32 %v1311, -0.5
    %v1824 = vmul.f32 %v1312, -0.5
    %v1825 = vmul.f32 %v1313, -0.5
    %v1826 = vmul.f32 %v1314, -0.5
    %v1827 = vmul.f32 %v1315, -0.5
    %v1828 = vmul.f32 %v1316, -0.5
    %v1829 = vmul.f32 %v1317, -0.5
    %v1830 = vmul.f32 %v1318, -0.5
    %v1831 = vmul.f32 %v1319, -0.5
    %v1832 = vmul.f32 %v1320, -0.5
    %v1833 = vmul.f32 %v1321, -0.5
    %v1834 = vmul.f32 %v1322, -0.5
    %v1835 = vmul.f32 %v1323, -0.5
    %v1836 = vmul.f32 %v1324, -0.5
    %v1837 = vmul.f32 %v1325, -0.5
    %v1838 = vmul.f32 %v1326, -0.5
    %v1839 = vmul.f32 %v1327, -0.5
    %v1840 = vmul.f32 %v1328, -0.5
    %v1841 = vmul.f32 %v1329, -0.5
    %v1842 = vmul.f32 %v1330, -0.5
    %v1843 = vmul.f32 %v1331, -0.5
    %v1844 = vmul.f32 %v1332, -0.5
    %v1845 = vmul.f32 %v1333, -0.5
    %v1846 = vmul.f32 %v1334, -0.5
    %v1847 = vmul.f32 %v1335, -0.5
    %v1848 = vmul.f32 %v1336, -0.5
    %v1849 = vmul.f32 %v1337, -0.5
    %v1850 = vmul.f32 %v1338, -0.5
    %v1851 = vmul.f32 %v1339, -0.5
    %v1852 = vmul.f32 %v1340, -0.5
    %v1853 = vmul.f32 %v1341, -0.5
    %v1854 = vmul.f32 %v1342, -0.5
    %v1855 = vmul.f32 %v1343, -0.5
    %v1856 = vmul.f32 %v1344, -0.5
    %v1857 = vmul.f32 %v1345, -0.5
    %v1858 = vmul.f32 %v1346, -0.5
    %v1859 = vmul.f32 %v1347, -0.5
    %v1860 = vmul.f32 %v1348, -0.5
    %v1861 = vmul.f32 %v1349, -0.5
    %v1862 = vmul.f32 %v1350, -0.5
    %v1863 = vmul.f32 %v1351, -0.5
    %v1864 = vmul.f32 %v1352, -0.5
    %v1865 = vmul.f32 %v1353, -0.5
    %v1866 = vmul.f32 %v1354, -0.5
    %v1867 = vmul.f32 %v1355, -0.5
    %v1868 = vmul.f32 %v1356, -0.5
    %v1869 = vmul.f32 %v1357, -0.5
    %v1870 = vmul.f32 %v1358, -0.5
    %v1871 = vmul.f32 %v1359, -0.5
    %v1872 = vmul.f32 %v1360, -0.5
    %v1873 = vmul.f32 %v1361, -0.5
    %v1874 = vmul.f32 %v1362, -0.5
    %v1875 = vmul.f32 %v1363, -0.5
    %v1876 = vmul.f32 %v1364, -0.5
    %v1877 = vmul.f32 %v1365, -0.5
    %v1878 = vmul.f32 %v1366, -0.5
    %v1879 = vmul.f32 %v1367, -0.5
    %v1880 = vmul.f32 %v1368, -0.5
    %v1881 = vmul.f32 %v1369, -0.5
    %v1882 = vmul.f32 %v1370, -0.5
    %v1883 = vmul.f32 %v1371, -0.5
    %v1884 = vmul.f32 %v1372, -0.5
    %v1885 = vmul.f32 %v1373, -0.5
    %v1886 = vmul.f32 %v1374, -0.5
    %v1887 = vmul.f32 %v1375, -0.5
    %v1888 = vmul.f32 %v1376, -0.5
    %v1889 = vmul.f32 %v1377, -0.5
    %v1890 = vmul.f32 %v1378, -0.5
    %v1891 = vmul.f32 %v1379, -0.5
    %v1892 = vmul.f32 %v1380, -0.5
    %v1893 = vmul.f32 %v1381, -0.5
    %v1894 = vmul.f32 %v1382, -0.5
    %v1895 = vmul.f32 %v1383, -0.5
    %v1896 = vmul.f32 %v1384, -0.5
    %v1897 = vmul.f32 %v1385, -0.5
    %v1898 = vmul.f32 %v1386, -0.5
    %v1899 = vmul.f32 %v1387, -0.5
    %v1900 = vmul.f32 %v1388, -0.5
    %v1901 = vmul.f32 %v1389, -0.5
    %v1902 = vmul.f32 %v1390, -0.5
    %v1903 = vmul.f32 %v1391, -0.5
    %v1904 = vmul.f32 %v1392, -0.5
    %v1905 = vmul.f32 %v1393, -0.5
    %v1906 = vmul.f32 %v1394, -0.5
    %v1907 = vmul.f32 %v1395, -0.5
    %v1908 = vmul.f32 %v1396, -0.5
    %v1909 = vmul.f32 %v1397, -0.5
    %v1910 = vmul.f32 %v1398, -0.5
    %v1911 = vmul.f32 %v1399, -0.5
    %v1912 = vmul.f32 %v1400, -0.5
    %v1913 = vmul.f32 %v1401, -0.5
    %v1914 = vmul.f32 %v1402, -0.5
    %v1915 = vmul.f32 %v1403, -0.5
    %v1916 = vmul.f32 %v1404, -0.5
    %v1917 = vmul.f32 %v1405, -0.5
    %v1918 = vmul.f32 %v1406, -0.5
    %v1919 = vmul.f32 %v1407, -0.5
    %v1920 = vmul.f32 %v1408, -0.5
    %v1921 = vmul.f32 %v1409, -0.5
    %v1922 = vmul.f32 %v1410, -0.5
    %v1923 = vmul.f32 %v1411, -0.5
    %v1924 = vmul.f32 %v1412, -0.5
    %v1925 = vmul.f32 %v1413, -0.5
    %v1926 = vmul.f32 %v1414, -0.5
    %v1927 = vmul.f32 %v1415, -0.5
    %v1928 = vmul.f32 %v1416, -0.5
    %v1929 = vmul.f32 %v1417, -0.5
    %v1930 = vmul.f32 %v1418, -0.5
    %v1931 = vmul.f32 %v1419, -0.5
    %v1932 = vmul.f32 %v1420, -0.5
    %v1933 = vmul.f32 %v1421, -0.5
    %v1934 = vmul.f32 %v1422, -0.5
    %v1935 = vmul.f32 %v1423, -0.5
    %v1936 = vmul.f32 %v1424, -0.5
    %v1937 = vmul.f32 %v1425, -0.5
    %v1938 = vmul.f32 %v1426, -0.5
    %v1939 = vmul.f32 %v1427, -0.5
    %v1940 = vmul.f32 %v1428, -0.5
    %v1941 = vmul.f32 %v1429, -0.5
    %v1942 = vmul.f32 %v1430, -0.5
    %v1943 = vmul.f32 %v1431, -0.5
    %v1944 = vmul.f32 %v1432, -0.5
    %v1945 = vmul.f32 %v1433, -0.5
    %v1946 = vmul.f32 %v1434, -0.5
    %v1947 = vmul.f32 %v1435, -0.5
    %v1948 = vmul.f32 %v1436, -0.5
    %v1949 = vmul.f32 %v1437, -0.5
    %v1950 = vmul.f32 %v1438, -0.5
    %v1951 = vmul.f32 %v1439, -0.5
    %v1952 = vmul.f32 %v1440, -0.5
    %v1953 = vmul.f32 %v1441, -0.5
    %v1954 = vmul.f32 %v1442, -0.5
    %v1955 = vmul.f32 %v1443, -0.5
    %v1956 = vmul.f32 %v1444, -0.5
    %v1957 = vmul.f32 %v1445, -0.5
    %v1958 = vmul.f32 %v1446, -0.5
    %v1959 = vmul.f32 %v1447, -0.5
    %v1960 = vmul.f32 %v1448, -0.5
    %v1961 = vmul.f32 %v1449, -0.5
    %v1962 = vmul.f32 %v1450, -0.5
    %v1963 = vmul.f32 %v1451, -0.5
    %v1964 = vmul.f32 %v1452, -0.5
    %v1965 = vmul.f32 %v1453, -0.5
    %v1966 = vmul.f32 %v1454, -0.5
    %v1967 = vmul.f32 %v1455, -0.5
    %v1968 = vmul.f32 %v1456, -0.5
    %v1969 = vmul.f32 %v1457, -0.5
    %v1970 = vmul.f32 %v1458, -0.5
    %v1971 = vmul.f32 %v1459, -0.5
    %v1972 = vmul.f32 %v1460, -0.5
    %v1973 = vmul.f32 %v1461, -0.5
    %v1974 = vmul.f32 %v1462, -0.5
    %v1975 = vmul.f32 %v1463, -0.5
    %v1976 = vmul.f32 %v1464, -0.5
    %v1977 = vmul.f32 %v1465, -0.5
    %v1978 = vmul.f32 %v1466, -0.5
    %v1979 = vmul.f32 %v1467, -0.5
    %v1980 = vmul.f32 %v1468, -0.5
    %v1981 = vmul.f32 %v1469, -0.5
    %v1982 = vmul.f32 %v1470, -0.5
    %v1983 = vmul.f32 %v1471, -0.5
    %v1984 = vmul.f32 %v1472, -0.5
    %v1985 = vmul.f32 %v1473, -0.5
    %v1986 = vmul.f32 %v1474, -0.5
    %v1987 = vmul.f32 %v1475, -0.5
    %v1988 = vmul.f32 %v1476, -0.5
    %v1989 = vmul.f32 %v1477, -0.5
    %v1990 = vmul.f32 %v1478, -0.5
    %v1991 = vmul.f32 %v1479, -0.5
    %v1992 = vmul.f32 %v1480, -0.5
    %v1993 = vmul.f32 %v1481, -0.5
    %v1994 = vmul.f32 %v1482, -0.5
    %v1995 = vmul.f32 %v1483, -0.5
    %v1996 = vmul.f32 %v1484, -0.5
    %v1997 = vmul.f32 %v1485, -0.5
    %v1998 = vmul.f32 %v1486, -0.5
    %v1999 = vmul.f32 %v1487, -0.5
    %v2000 = vmul.f32 %v1488, -0.5
    %v2001 = vmul.f32 %v1489, -0.5
    %v2002 = vmul.f32 %v1490, -0.5
    %v2003 = vmul.f32 %v1491, -0.5
    %v2004 = vmul.f32 %v1492, -0.5
    %v2005 = vmul.f32 %v1493, -0.5
    %v2006 = vmul.f32 %v1750, 1.442695
    %v2007 = vpow.pop %v2006
    %v2008 = vmul.f32 %v1751, 1.442695
    %v2009 = vpow.pop %v2008
    %v2010 = vmul.f32 %v1752, 1.442695
    %v2011 = vpow.pop %v2010
    %v2012 = vmul.f32 %v1753, 1.442695
    %v2013 = vpow.pop %v2012
    %v2014 = vmul.f32 %v1754, 1.442695
    %v2015 = vpow.pop %v2014
    %v2016 = vmul.f32 %v1755, 1.442695
    %v2017 = vpow.pop %v2016
    %v2018 = vmul.f32 %v1756, 1.442695
    %v2019 = vpow.pop %v2018
    %v2020 = vmul.f32 %v1757, 1.442695
    %v2021 = vpow.pop %v2020
    %v2022 = vmul.f32 %v1758, 1.442695
    %v2023 = vpow.pop %v2022
    %v2024 = vmul.f32 %v1759, 1.442695
    %v2025 = vpow.pop %v2024
    %v2026 = vmul.f32 %v1760, 1.442695
    %v2027 = vpow.pop %v2026
    %v2028 = vmul.f32 %v1761, 1.442695
    %v2029 = vpow.pop %v2028
    %v2030 = vmul.f32 %v1762, 1.442695
    %v2031 = vpow.pop %v2030
    %v2032 = vmul.f32 %v1763, 1.442695
    %v2033 = vpow.pop %v2032
    %v2034 = vmul.f32 %v1764, 1.442695
    %v2035 = vpow.pop %v2034
    %v2036 = vmul.f32 %v1765, 1.442695
    %v2037 = vpow.pop %v2036
    %v2038 = vmul.f32 %v1766, 1.442695
    %v2039 = vpow.pop %v2038
    %v2040 = vmul.f32 %v1767, 1.442695
    %v2041 = vpow.pop %v2040
    %v2042 = vmul.f32 %v1768, 1.442695
    %v2043 = vpow.pop %v2042
    %v2044 = vmul.f32 %v1769, 1.442695
    %v2045 = vpow.pop %v2044
    %v2046 = vmul.f32 %v1770, 1.442695
    %v2047 = vpow.pop %v2046
    %v2048 = vmul.f32 %v1771, 1.442695
    %v2049 = vpow.pop %v2048
    %v2050 = vmul.f32 %v1772, 1.442695
    %v2051 = vpow.pop %v2050
    %v2052 = vmul.f32 %v1773, 1.442695
    %v2053 = vpow.pop %v2052
    %v2054 = vmul.f32 %v1774, 1.442695
    %v2055 = vpow.pop %v2054
    %v2056 = vmul.f32 %v1775, 1.442695
    %v2057 = vpow.pop %v2056
    %v2058 = vmul.f32 %v1776, 1.442695
    %v2059 = vpow.pop %v2058
    %v2060 = vmul.f32 %v1777, 1.442695
    %v2061 = vpow.pop %v2060
    %v2062 = vmul.f32 %v1778, 1.442695
    %v2063 = vpow.pop %v2062
    %v2064 = vmul.f32 %v1779, 1.442695
    %v2065 = vpow.pop %v2064
    %v2066 = vmul.f32 %v1780, 1.442695
    %v2067 = vpow.pop %v2066
    %v2068 = vmul.f32 %v1781, 1.442695
    %v2069 = vpow.pop %v2068
    %v2070 = vmul.f32 %v1782, 1.442695
    %v2071 = vpow.pop %v2070
    %v2072 = vmul.f32 %v1783, 1.442695
    %v2073 = vpow.pop %v2072
    %v2074 = vmul.f32 %v1784, 1.442695
    %v2075 = vpow.pop %v2074
    %v2076 = vmul.f32 %v1785, 1.442695
    %v2077 = vpow.pop %v2076
    %v2078 = vmul.f32 %v1786, 1.442695
    %v2079 = vpow.pop %v2078
    %v2080 = vmul.f32 %v1787, 1.442695
    %v2081 = vpow.pop %v2080
    %v2082 = vmul.f32 %v1788, 1.442695
    %v2083 = vpow.pop %v2082
    %v2084 = vmul.f32 %v1789, 1.442695
    %v2085 = vpow.pop %v2084
    %v2086 = vmul.f32 %v1790, 1.442695
    %v2087 = vpow.pop %v2086
    %v2088 = vmul.f32 %v1791, 1.442695
    %v2089 = vpow.pop %v2088
    %v2090 = vmul.f32 %v1792, 1.442695
    %v2091 = vpow.pop %v2090
    %v2092 = vmul.f32 %v1793, 1.442695
    %v2093 = vpow.pop %v2092
    %v2094 = vmul.f32 %v1794, 1.442695
    %v2095 = vpow.pop %v2094
    %v2096 = vmul.f32 %v1795, 1.442695
    %v2097 = vpow.pop %v2096
    %v2098 = vmul.f32 %v1796, 1.442695
    %v2099 = vpow.pop %v2098
    %v2100 = vmul.f32 %v1797, 1.442695
    %v2101 = vpow.pop %v2100
    %v2102 = vmul.f32 %v1798, 1.442695
    %v2103 = vpow.pop %v2102
    %v2104 = vmul.f32 %v1799, 1.442695
    %v2105 = vpow.pop %v2104
    %v2106 = vmul.f32 %v1800, 1.442695
    %v2107 = vpow.pop %v2106
    %v2108 = vmul.f32 %v1801, 1.442695
    %v2109 = vpow.pop %v2108
    %v2110 = vmul.f32 %v1802, 1.442695
    %v2111 = vpow.pop %v2110
    %v2112 = vmul.f32 %v1803, 1.442695
    %v2113 = vpow.pop %v2112
    %v2114 = vmul.f32 %v1804, 1.442695
    %v2115 = vpow.pop %v2114
    %v2116 = vmul.f32 %v1805, 1.442695
    %v2117 = vpow.pop %v2116
    %v2118 = vmul.f32 %v1806, 1.442695
    %v2119 = vpow.pop %v2118
    %v2120 = vmul.f32 %v1807, 1.442695
    %v2121 = vpow.pop %v2120
    %v2122 = vmul.f32 %v1808, 1.442695
    %v2123 = vpow.pop %v2122
    %v2124 = vmul.f32 %v1809, 1.442695
    %v2125 = vpow.pop %v2124
    %v2126 = vmul.f32 %v1810, 1.442695
    %v2127 = vpow.pop %v2126
    %v2128 = vmul.f32 %v1811, 1.442695
    %v2129 = vpow.pop %v2128
    %v2130 = vmul.f32 %v1812, 1.442695
    %v2131 = vpow.pop %v2130
    %v2132 = vmul.f32 %v1813, 1.442695
    %v2133 = vpow.pop %v2132
    %v2134 = vmul.f32 %v1814, 1.442695
    %v2135 = vpow.pop %v2134
    %v2136 = vmul.f32 %v1815, 1.442695
    %v2137 = vpow.pop %v2136
    %v2138 = vmul.f32 %v1816, 1.442695
    %v2139 = vpow.pop %v2138
    %v2140 = vmul.f32 %v1817, 1.442695
    %v2141 = vpow.pop %v2140
    %v2142 = vmul.f32 %v1818, 1.442695
    %v2143 = vpow.pop %v2142
    %v2144 = vmul.f32 %v1819, 1.442695
    %v2145 = vpow.pop %v2144
    %v2146 = vmul.f32 %v1820, 1.442695
    %v2147 = vpow.pop %v2146
    %v2148 = vmul.f32 %v1821, 1.442695
    %v2149 = vpow.pop %v2148
    %v2150 = vmul.f32 %v1822, 1.442695
    %v2151 = vpow.pop %v2150
    %v2152 = vmul.f32 %v1823, 1.442695
    %v2153 = vpow.pop %v2152
    %v2154 = vmul.f32 %v1824, 1.442695
    %v2155 = vpow.pop %v2154
    %v2156 = vmul.f32 %v1825, 1.442695
    %v2157 = vpow.pop %v2156
    %v2158 = vmul.f32 %v1826, 1.442695
    %v2159 = vpow.pop %v2158
    %v2160 = vmul.f32 %v1827, 1.442695
    %v2161 = vpow.pop %v2160
    %v2162 = vmul.f32 %v1828, 1.442695
    %v2163 = vpow.pop %v2162
    %v2164 = vmul.f32 %v1829, 1.442695
    %v2165 = vpow.pop %v2164
    %v2166 = vmul.f32 %v1830, 1.442695
    %v2167 = vpow.pop %v2166
    %v2168 = vmul.f32 %v1831, 1.442695
    %v2169 = vpow.pop %v2168
    %v2170 = vmul.f32 %v1832, 1.442695
    %v2171 = vpow.pop %v2170
    %v2172 = vmul.f32 %v1833, 1.442695
    %v2173 = vpow.pop %v2172
    %v2174 = vmul.f32 %v1834, 1.442695
    %v2175 = vpow.pop %v2174
    %v2176 = vmul.f32 %v1835, 1.442695
    %v2177 = vpow.pop %v2176
    %v2178 = vmul.f32 %v1836, 1.442695
    %v2179 = vpow.pop %v2178
    %v2180 = vmul.f32 %v1837, 1.442695
    %v2181 = vpow.pop %v2180
    %v2182 = vmul.f32 %v1838, 1.442695
    %v2183 = vpow.pop %v2182
    %v2184 = vmul.f32 %v1839, 1.442695
    %v2185 = vpow.pop %v2184
    %v2186 = vmul.f32 %v1840, 1.442695
    %v2187 = vpow.pop %v2186
    %v2188 = vmul.f32 %v1841, 1.442695
    %v2189 = vpow.pop %v2188
    %v2190 = vmul.f32 %v1842, 1.442695
    %v2191 = vpow.pop %v2190
    %v2192 = vmul.f32 %v1843, 1.442695
    %v2193 = vpow.pop %v2192
    %v2194 = vmul.f32 %v1844, 1.442695
    %v2195 = vpow.pop %v2194
    %v2196 = vmul.f32 %v1845, 1.442695
    %v2197 = vpow.pop %v2196
    %v2198 = vmul.f32 %v1846, 1.442695
    %v2199 = vpow.pop %v2198
    %v2200 = vmul.f32 %v1847, 1.442695
    %v2201 = vpow.pop %v2200
    %v2202 = vmul.f32 %v1848, 1.442695
    %v2203 = vpow.pop %v2202
    %v2204 = vmul.f32 %v1849, 1.442695
    %v2205 = vpow.pop %v2204
    %v2206 = vmul.f32 %v1850, 1.442695
    %v2207 = vpow.pop %v2206
    %v2208 = vmul.f32 %v1851, 1.442695
    %v2209 = vpow.pop %v2208
    %v2210 = vmul.f32 %v1852, 1.442695
    %v2211 = vpow.pop %v2210
    %v2212 = vmul.f32 %v1853, 1.442695
    %v2213 = vpow.pop %v2212
    %v2214 = vmul.f32 %v1854, 1.442695
    %v2215 = vpow.pop %v2214
    %v2216 = vmul.f32 %v1855, 1.442695
    %v2217 = vpow.pop %v2216
    %v2218 = vmul.f32 %v1856, 1.442695
    %v2219 = vpow.pop %v2218
    %v2220 = vmul.f32 %v1857, 1.442695
    %v2221 = vpow.pop %v2220
    %v2222 = vmul.f32 %v1858, 1.442695
    %v2223 = vpow.pop %v2222
    %v2224 = vmul.f32 %v1859, 1.442695
    %v2225 = vpow.pop %v2224
    %v2226 = vmul.f32 %v1860, 1.442695
    %v2227 = vpow.pop %v2226
    %v2228 = vmul.f32 %v1861, 1.442695
    %v2229 = vpow.pop %v2228
    %v2230 = vmul.f32 %v1862, 1.442695
    %v2231 = vpow.pop %v2230
    %v2232 = vmul.f32 %v1863, 1.442695
    %v2233 = vpow.pop %v2232
    %v2234 = vmul.f32 %v1864, 1.442695
    %v2235 = vpow.pop %v2234
    %v2236 = vmul.f32 %v1865, 1.442695
    %v2237 = vpow.pop %v2236
    %v2238 = vmul.f32 %v1866, 1.442695
    %v2239 = vpow.pop %v2238
    %v2240 = vmul.f32 %v1867, 1.442695
    %v2241 = vpow.pop %v2240
    %v2242 = vmul.f32 %v1868, 1.442695
    %v2243 = vpow.pop %v2242
    %v2244 = vmul.f32 %v1869, 1.442695
    %v2245 = vpow.pop %v2244
    %v2246 = vmul.f32 %v1870, 1.442695
    %v2247 = vpow.pop %v2246
    %v2248 = vmul.f32 %v1871, 1.442695
    %v2249 = vpow.pop %v2248
    %v2250 = vmul.f32 %v1872, 1.442695
    %v2251 = vpow.pop %v2250
    %v2252 = vmul.f32 %v1873, 1.442695
    %v2253 = vpow.pop %v2252
    %v2254 = vmul.f32 %v1874, 1.442695
    %v2255 = vpow.pop %v2254
    %v2256 = vmul.f32 %v1875, 1.442695
    %v2257 = vpow.pop %v2256
    %v2258 = vmul.f32 %v1876, 1.442695
    %v2259 = vpow.pop %v2258
    %v2260 = vmul.f32 %v1877, 1.442695
    %v2261 = vpow.pop %v2260
    %v2262 = vmul.f32 %v1878, 1.442695
    %v2263 = vpow.pop %v2262
    %v2264 = vmul.f32 %v1879, 1.442695
    %v2265 = vpow.pop %v2264
    %v2266 = vmul.f32 %v1880, 1.442695
    %v2267 = vpow.pop %v2266
    %v2268 = vmul.f32 %v1881, 1.442695
    %v2269 = vpow.pop %v2268
    %v2270 = vmul.f32 %v1882, 1.442695
    %v2271 = vpow.pop %v2270
    %v2272 = vmul.f32 %v1883, 1.442695
    %v2273 = vpow.pop %v2272
    %v2274 = vmul.f32 %v1884, 1.442695
    %v2275 = vpow.pop %v2274
    %v2276 = vmul.f32 %v1885, 1.442695
    %v2277 = vpow.pop %v2276
    %v2278 = vmul.f32 %v1886, 1.442695
    %v2279 = vpow.pop %v2278
    %v2280 = vmul.f32 %v1887, 1.442695
    %v2281 = vpow.pop %v2280
    %v2282 = vmul.f32 %v1888, 1.442695
    %v2283 = vpow.pop %v2282
    %v2284 = vmul.f32 %v1889, 1.442695
    %v2285 = vpow.pop %v2284
    %v2286 = vmul.f32 %v1890, 1.442695
    %v2287 = vpow.pop %v2286
    %v2288 = vmul.f32 %v1891, 1.442695
    %v2289 = vpow.pop %v2288
    %v2290 = vmul.f32 %v1892, 1.442695
    %v2291 = vpow.pop %v2290
    %v2292 = vmul.f32 %v1893, 1.442695
    %v2293 = vpow.pop %v2292
    %v2294 = vmul.f32 %v1894, 1.442695
    %v2295 = vpow.pop %v2294
    %v2296 = vmul.f32 %v1895, 1.442695
    %v2297 = vpow.pop %v2296
    %v2298 = vmul.f32 %v1896, 1.442695
    %v2299 = vpow.pop %v2298
    %v2300 = vmul.f32 %v1897, 1.442695
    %v2301 = vpow.pop %v2300
    %v2302 = vmul.f32 %v1898, 1.442695
    %v2303 = vpow.pop %v2302
    %v2304 = vmul.f32 %v1899, 1.442695
    %v2305 = vpow.pop %v2304
    %v2306 = vmul.f32 %v1900, 1.442695
    %v2307 = vpow.pop %v2306
    %v2308 = vmul.f32 %v1901, 1.442695
    %v2309 = vpow.pop %v2308
    %v2310 = vmul.f32 %v1902, 1.442695
    %v2311 = vpow.pop %v2310
    %v2312 = vmul.f32 %v1903, 1.442695
    %v2313 = vpow.pop %v2312
    %v2314 = vmul.f32 %v1904, 1.442695
    %v2315 = vpow.pop %v2314
    %v2316 = vmul.f32 %v1905, 1.442695
    %v2317 = vpow.pop %v2316
    %v2318 = vmul.f32 %v1906, 1.442695
    %v2319 = vpow.pop %v2318
    %v2320 = vmul.f32 %v1907, 1.442695
    %v2321 = vpow.pop %v2320
    %v2322 = vmul.f32 %v1908, 1.442695
    %v2323 = vpow.pop %v2322
    %v2324 = vmul.f32 %v1909, 1.442695
    %v2325 = vpow.pop %v2324
    %v2326 = vmul.f32 %v1910, 1.442695
    %v2327 = vpow.pop %v2326
    %v2328 = vmul.f32 %v1911, 1.442695
    %v2329 = vpow.pop %v2328
    %v2330 = vmul.f32 %v1912, 1.442695
    %v2331 = vpow.pop %v2330
    %v2332 = vmul.f32 %v1913, 1.442695
    %v2333 = vpow.pop %v2332
    %v2334 = vmul.f32 %v1914, 1.442695
    %v2335 = vpow.pop %v2334
    %v2336 = vmul.f32 %v1915, 1.442695
    %v2337 = vpow.pop %v2336
    %v2338 = vmul.f32 %v1916, 1.442695
    %v2339 = vpow.pop %v2338
    %v2340 = vmul.f32 %v1917, 1.442695
    %v2341 = vpow.pop %v2340
    %v2342 = vmul.f32 %v1918, 1.442695
    %v2343 = vpow.pop %v2342
    %v2344 = vmul.f32 %v1919, 1.442695
    %v2345 = vpow.pop %v2344
    %v2346 = vmul.f32 %v1920, 1.442695
    %v2347 = vpow.pop %v2346
    %v2348 = vmul.f32 %v1921, 1.442695
    %v2349 = vpow.pop %v2348
    %v2350 = vmul.f32 %v1922, 1.442695
    %v2351 = vpow.pop %v2350
    %v2352 = vmul.f32 %v1923, 1.442695
    %v2353 = vpow.pop %v2352
    %v2354 = vmul.f32 %v1924, 1.442695
    %v2355 = vpow.pop %v2354
    %v2356 = vmul.f32 %v1925, 1.442695
    %v2357 = vpow.pop %v2356
    %v2358 = vmul.f32 %v1926, 1.442695
    %v2359 = vpow.pop %v2358
    %v2360 = vmul.f32 %v1927, 1.442695
    %v2361 = vpow.pop %v2360
    %v2362 = vmul.f32 %v1928, 1.442695
    %v2363 = vpow.pop %v2362
    %v2364 = vmul.f32 %v1929, 1.442695
    %v2365 = vpow.pop %v2364
    %v2366 = vmul.f32 %v1930, 1.442695
    %v2367 = vpow.pop %v2366
    %v2368 = vmul.f32 %v1931, 1.442695
    %v2369 = vpow.pop %v2368
    %v2370 = vmul.f32 %v1932, 1.442695
    %v2371 = vpow.pop %v2370
    %v2372 = vmul.f32 %v1933, 1.442695
    %v2373 = vpow.pop %v2372
    %v2374 = vmul.f32 %v1934, 1.442695
    %v2375 = vpow.pop %v2374
    %v2376 = vmul.f32 %v1935, 1.442695
    %v2377 = vpow.pop %v2376
    %v2378 = vmul.f32 %v1936, 1.442695
    %v2379 = vpow.pop %v2378
    %v2380 = vmul.f32 %v1937, 1.442695
    %v2381 = vpow.pop %v2380
    %v2382 = vmul.f32 %v1938, 1.442695
    %v2383 = vpow.pop %v2382
    %v2384 = vmul.f32 %v1939, 1.442695
    %v2385 = vpow.pop %v2384
    %v2386 = vmul.f32 %v1940, 1.442695
    %v2387 = vpow.pop %v2386
    %v2388 = vmul.f32 %v1941, 1.442695
    %v2389 = vpow.pop %v2388
    %v2390 = vmul.f32 %v1942, 1.442695
    %v2391 = vpow.pop %v2390
    %v2392 = vmul.f32 %v1943, 1.442695
    %v2393 = vpow.pop %v2392
    %v2394 = vmul.f32 %v1944, 1.442695
    %v2395 = vpow.pop %v2394
    %v2396 = vmul.f32 %v1945, 1.442695
    %v2397 = vpow.pop %v2396
    %v2398 = vmul.f32 %v1946, 1.442695
    %v2399 = vpow.pop %v2398
    %v2400 = vmul.f32 %v1947, 1.442695
    %v2401 = vpow.pop %v2400
    %v2402 = vmul.f32 %v1948, 1.442695
    %v2403 = vpow.pop %v2402
    %v2404 = vmul.f32 %v1949, 1.442695
    %v2405 = vpow.pop %v2404
    %v2406 = vmul.f32 %v1950, 1.442695
    %v2407 = vpow.pop %v2406
    %v2408 = vmul.f32 %v1951, 1.442695
    %v2409 = vpow.pop %v2408
    %v2410 = vmul.f32 %v1952, 1.442695
    %v2411 = vpow.pop %v2410
    %v2412 = vmul.f32 %v1953, 1.442695
    %v2413 = vpow.pop %v2412
    %v2414 = vmul.f32 %v1954, 1.442695
    %v2415 = vpow.pop %v2414
    %v2416 = vmul.f32 %v1955, 1.442695
    %v2417 = vpow.pop %v2416
    %v2418 = vmul.f32 %v1956, 1.442695
    %v2419 = vpow.pop %v2418
    %v2420 = vmul.f32 %v1957, 1.442695
    %v2421 = vpow.pop %v2420
    %v2422 = vmul.f32 %v1958, 1.442695
    %v2423 = vpow.pop %v2422
    %v2424 = vmul.f32 %v1959, 1.442695
    %v2425 = vpow.pop %v2424
    %v2426 = vmul.f32 %v1960, 1.442695
    %v2427 = vpow.pop %v2426
    %v2428 = vmul.f32 %v1961, 1.442695
    %v2429 = vpow.pop %v2428
    %v2430 = vmul.f32 %v1962, 1.442695
    %v2431 = vpow.pop %v2430
    %v2432 = vmul.f32 %v1963, 1.442695
    %v2433 = vpow.pop %v2432
    %v2434 = vmul.f32 %v1964, 1.442695
    %v2435 = vpow.pop %v2434
    %v2436 = vmul.f32 %v1965, 1.442695
    %v2437 = vpow.pop %v2436
    %v2438 = vmul.f32 %v1966, 1.442695
    %v2439 = vpow.pop %v2438
    %v2440 = vmul.f32 %v1967, 1.442695
    %v2441 = vpow.pop %v2440
    %v2442 = vmul.f32 %v1968, 1.442695
    %v2443 = vpow.pop %v2442
    %v2444 = vmul.f32 %v1969, 1.442695
    %v2445 = vpow.pop %v2444
    %v2446 = vmul.f32 %v1970, 1.442695
    %v2447 = vpow.pop %v2446
    %v2448 = vmul.f32 %v1971, 1.442695
    %v2449 = vpow.pop %v2448
    %v2450 = vmul.f32 %v1972, 1.442695
    %v2451 = vpow.pop %v2450
    %v2452 = vmul.f32 %v1973, 1.442695
    %v2453 = vpow.pop %v2452
    %v2454 = vmul.f32 %v1974, 1.442695
    %v2455 = vpow.pop %v2454
    %v2456 = vmul.f32 %v1975, 1.442695
    %v2457 = vpow.pop %v2456
    %v2458 = vmul.f32 %v1976, 1.442695
    %v2459 = vpow.pop %v2458
    %v2460 = vmul.f32 %v1977, 1.442695
    %v2461 = vpow.pop %v2460
    %v2462 = vmul.f32 %v1978, 1.442695
    %v2463 = vpow.pop %v2462
    %v2464 = vmul.f32 %v1979, 1.442695
    %v2465 = vpow.pop %v2464
    %v2466 = vmul.f32 %v1980, 1.442695
    %v2467 = vpow.pop %v2466
    %v2468 = vmul.f32 %v1981, 1.442695
    %v2469 = vpow.pop %v2468
    %v2470 = vmul.f32 %v1982, 1.442695
    %v2471 = vpow.pop %v2470
    %v2472 = vmul.f32 %v1983, 1.442695
    %v2473 = vpow.pop %v2472
    %v2474 = vmul.f32 %v1984, 1.442695
    %v2475 = vpow.pop %v2474
    %v2476 = vmul.f32 %v1985, 1.442695
    %v2477 = vpow.pop %v2476
    %v2478 = vmul.f32 %v1986, 1.442695
    %v2479 = vpow.pop %v2478
    %v2480 = vmul.f32 %v1987, 1.442695
    %v2481 = vpow.pop %v2480
    %v2482 = vmul.f32 %v1988, 1.442695
    %v2483 = vpow.pop %v2482
    %v2484 = vmul.f32 %v1989, 1.442695
    %v2485 = vpow.pop %v2484
    %v2486 = vmul.f32 %v1990, 1.442695
    %v2487 = vpow.pop %v2486
    %v2488 = vmul.f32 %v1991, 1.442695
    %v2489 = vpow.pop %v2488
    %v2490 = vmul.f32 %v1992, 1.442695
    %v2491 = vpow.pop %v2490
    %v2492 = vmul.f32 %v1993, 1.442695
    %v2493 = vpow.pop %v2492
    %v2494 = vmul.f32 %v1994, 1.442695
    %v2495 = vpow.pop %v2494
    %v2496 = vmul.f32 %v1995, 1.442695
    %v2497 = vpow.pop %v2496
    %v2498 = vmul.f32 %v1996, 1.442695
    %v2499 = vpow.pop %v2498
    %v2500 = vmul.f32 %v1997, 1.442695
    %v2501 = vpow.pop %v2500
    %v2502 = vmul.f32 %v1998, 1.442695
    %v2503 = vpow.pop %v2502
    %v2504 = vmul.f32 %v1999, 1.442695
    %v2505 = vpow.pop %v2504
    %v2506 = vmul.f32 %v2000, 1.442695
    %v2507 = vpow.pop %v2506
    %v2508 = vmul.f32 %v2001, 1.442695
    %v2509 = vpow.pop %v2508
    %v2510 = vmul.f32 %v2002, 1.442695
    %v2511 = vpow.pop %v2510
    %v2512 = vmul.f32 %v2003, 1.442695
    %v2513 = vpow.pop %v2512
    %v2514 = vmul.f32 %v2004, 1.442695
    %v2515 = vpow.pop %v2514
    %v2516 = vmul.f32 %v2005, 1.442695
    %v2517 = vpow.pop %v2516
    %v2518 = vmul.f32 %v1494, %v2007
    %v2519 = vmul.f32 %v1495, %v2009
    %v2520 = vmul.f32 %v1496, %v2011
    %v2521 = vmul.f32 %v1497, %v2013
    %v2522 = vmul.f32 %v1498, %v2015
    %v2523 = vmul.f32 %v1499, %v2017
    %v2524 = vmul.f32 %v1500, %v2019
    %v2525 = vmul.f32 %v1501, %v2021
    %v2526 = vmul.f32 %v1502, %v2023
    %v2527 = vmul.f32 %v1503, %v2025
    %v2528 = vmul.f32 %v1504, %v2027
    %v2529 = vmul.f32 %v1505, %v2029
    %v2530 = vmul.f32 %v1506, %v2031
    %v2531 = vmul.f32 %v1507, %v2033
    %v2532 = vmul.f32 %v1508, %v2035
    %v2533 = vmul.f32 %v1509, %v2037
    %v2534 = vmul.f32 %v1510, %v2039
    %v2535 = vmul.f32 %v1511, %v2041
    %v2536 = vmul.f32 %v1512, %v2043
    %v2537 = vmul.f32 %v1513, %v2045
    %v2538 = vmul.f32 %v1514, %v2047
    %v2539 = vmul.f32 %v1515, %v2049
    %v2540 = vmul.f32 %v1516, %v2051
    %v2541 = vmul.f32 %v1517, %v2053
    %v2542 = vmul.f32 %v1518, %v2055
    %v2543 = vmul.f32 %v1519, %v2057
    %v2544 = vmul.f32 %v1520, %v2059
    %v2545 = vmul.f32 %v1521, %v2061
    %v2546 = vmul.f32 %v1522, %v2063
    %v2547 = vmul.f32 %v1523, %v2065
    %v2548 = vmul.f32 %v1524, %v2067
    %v2549 = vmul.f32 %v1525, %v2069
    %v2550 = vmul.f32 %v1526, %v2071
    %v2551 = vmul.f32 %v1527, %v2073
    %v2552 = vmul.f32 %v1528, %v2075
    %v2553 = vmul.f32 %v1529, %v2077
    %v2554 = vmul.f32 %v1530, %v2079
    %v2555 = vmul.f32 %v1531, %v2081
    %v2556 = vmul.f32 %v1532, %v2083
    %v2557 = vmul.f32 %v1533, %v2085
    %v2558 = vmul.f32 %v1534, %v2087
    %v2559 = vmul.f32 %v1535, %v2089
    %v2560 = vmul.f32 %v1536, %v2091
    %v2561 = vmul.f32 %v1537, %v2093
    %v2562 = vmul.f32 %v1538, %v2095
    %v2563 = vmul.f32 %v1539, %v2097
    %v2564 = vmul.f32 %v1540, %v2099
    %v2565 = vmul.f32 %v1541, %v2101
    %v2566 = vmul.f32 %v1542, %v2103
    %v2567 = vmul.f32 %v1543, %v2105
    %v2568 = vmul.f32 %v1544, %v2107
    %v2569 = vmul.f32 %v1545, %v2109
    %v2570 = vmul.f32 %v1546, %v2111
    %v2571 = vmul.f32 %v1547, %v2113
    %v2572 = vmul.f32 %v1548, %v2115
    %v2573 = vmul.f32 %v1549, %v2117
    %v2574 = vmul.f32 %v1550, %v2119
    %v2575 = vmul.f32 %v1551, %v2121
    %v2576 = vmul.f32 %v1552, %v2123
    %v2577 = vmul.f32 %v1553, %v2125
    %v2578 = vmul.f32 %v1554, %v2127
    %v2579 = vmul.f32 %v1555, %v2129
    %v2580 = vmul.f32 %v1556, %v2131
    %v2581 = vmul.f32 %v1557, %v2133
    %v2582 = vmul.f32 %v1558, %v2135
    %v2583 = vmul.f32 %v1559, %v2137
    %v2584 = vmul.f32 %v1560, %v2139
    %v2585 = vmul.f32 %v1561, %v2141
    %v2586 = vmul.f32 %v1562, %v2143
    %v2587 = vmul.f32 %v1563, %v2145
    %v2588 = vmul.f32 %v1564, %v2147
    %v2589 = vmul.f32 %v1565, %v2149
    %v2590 = vmul.f32 %v1566, %v2151
    %v2591 = vmul.f32 %v1567, %v2153
    %v2592 = vmul.f32 %v1568, %v2155
    %v2593 = vmul.f32 %v1569, %v2157
    %v2594 = vmul.f32 %v1570, %v2159
    %v2595 = vmul.f32 %v1571, %v2161
    %v2596 = vmul.f32 %v1572, %v2163
    %v2597 = vmul.f32 %v1573, %v2165
    %v2598 = vmul.f32 %v1574, %v2167
    %v2599 = vmul.f32 %v1575, %v2169
    %v2600 = vmul.f32 %v1576, %v2171
    %v2601 = vmul.f32 %v1577, %v2173
    %v2602 = vmul.f32 %v1578, %v2175
    %v2603 = vmul.f32 %v1579, %v2177
    %v2604 = vmul.f32 %v1580, %v2179
    %v2605 = vmul.f32 %v1581, %v2181
    %v2606 = vmul.f32 %v1582, %v2183
    %v2607 = vmul.f32 %v1583, %v2185
    %v2608 = vmul.f32 %v1584, %v2187
    %v2609 = vmul.f32 %v1585, %v2189
    %v2610 = vmul.f32 %v1586, %v2191
    %v2611 = vmul.f32 %v1587, %v2193
    %v2612 = vmul.f32 %v1588, %v2195
    %v2613 = vmul.f32 %v1589, %v2197
    %v2614 = vmul.f32 %v1590, %v2199
    %v2615 = vmul.f32 %v1591, %v2201
    %v2616 = vmul.f32 %v1592, %v2203
    %v2617 = vmul.f32 %v1593, %v2205
    %v2618 = vmul.f32 %v1594, %v2207
    %v2619 = vmul.f32 %v1595, %v2209
    %v2620 = vmul.f32 %v1596, %v2211
    %v2621 = vmul.f32 %v1597, %v2213
    %v2622 = vmul.f32 %v1598, %v2215
    %v2623 = vmul.f32 %v1599, %v2217
    %v2624 = vmul.f32 %v1600, %v2219
    %v2625 = vmul.f32 %v1601, %v2221
    %v2626 = vmul.f32 %v1602, %v2223
    %v2627 = vmul.f32 %v1603, %v2225
    %v2628 = vmul.f32 %v1604, %v2227
    %v2629 = vmul.f32 %v1605, %v2229
    %v2630 = vmul.f32 %v1606, %v2231
    %v2631 = vmul.f32 %v1607, %v2233
    %v2632 = vmul.f32 %v1608, %v2235
    %v2633 = vmul.f32 %v1609, %v2237
    %v2634 = vmul.f32 %v1610, %v2239
    %v2635 = vmul.f32 %v1611, %v2241
    %v2636 = vmul.f32 %v1612, %v2243
    %v2637 = vmul.f32 %v1613, %v2245
    %v2638 = vmul.f32 %v1614, %v2247
    %v2639 = vmul.f32 %v1615, %v2249
    %v2640 = vmul.f32 %v1616, %v2251
    %v2641 = vmul.f32 %v1617, %v2253
    %v2642 = vmul.f32 %v1618, %v2255
    %v2643 = vmul.f32 %v1619, %v2257
    %v2644 = vmul.f32 %v1620, %v2259
    %v2645 = vmul.f32 %v1621, %v2261
    %v2646 = vmul.f32 %v1622, %v2263
    %v2647 = vmul.f32 %v1623, %v2265
    %v2648 = vmul.f32 %v1624, %v2267
    %v2649 = vmul.f32 %v1625, %v2269
    %v2650 = vmul.f32 %v1626, %v2271
    %v2651 = vmul.f32 %v1627, %v2273
    %v2652 = vmul.f32 %v1628, %v2275
    %v2653 = vmul.f32 %v1629, %v2277
    %v2654 = vmul.f32 %v1630, %v2279
    %v2655 = vmul.f32 %v1631, %v2281
    %v2656 = vmul.f32 %v1632, %v2283
    %v2657 = vmul.f32 %v1633, %v2285
    %v2658 = vmul.f32 %v1634, %v2287
    %v2659 = vmul.f32 %v1635, %v2289
    %v2660 = vmul.f32 %v1636, %v2291
    %v2661 = vmul.f32 %v1637, %v2293
    %v2662 = vmul.f32 %v1638, %v2295
    %v2663 = vmul.f32 %v1639, %v2297
    %v2664 = vmul.f32 %v1640, %v2299
    %v2665 = vmul.f32 %v1641, %v2301
    %v2666 = vmul.f32 %v1642, %v2303
    %v2667 = vmul.f32 %v1643, %v2305
    %v2668 = vmul.f32 %v1644, %v2307
    %v2669 = vmul.f32 %v1645, %v2309
    %v2670 = vmul.f32 %v1646, %v2311
    %v2671 = vmul.f32 %v1647, %v2313
    %v2672 = vmul.f32 %v1648, %v2315
    %v2673 = vmul.f32 %v1649, %v2317
    %v2674 = vmul.f32 %v1650, %v2319
    %v2675 = vmul.f32 %v1651, %v2321
    %v2676 = vmul.f32 %v1652, %v2323
    %v2677 = vmul.f32 %v1653, %v2325
    %v2678 = vmul.f32 %v1654, %v2327
    %v2679 = vmul.f32 %v1655, %v2329
    %v2680 = vmul.f32 %v1656, %v2331
    %v2681 = vmul.f32 %v1657, %v2333
    %v2682 = vmul.f32 %v1658, %v2335
    %v2683 = vmul.f32 %v1659, %v2337
    %v2684 = vmul.f32 %v1660, %v2339
    %v2685 = vmul.f32 %v1661, %v2341
    %v2686 = vmul.f32 %v1662, %v2343
    %v2687 = vmul.f32 %v1663, %v2345
    %v2688 = vmul.f32 %v1664, %v2347
    %v2689 = vmul.f32 %v1665, %v2349
    %v2690 = vmul.f32 %v1666, %v2351
    %v2691 = vmul.f32 %v1667, %v2353
    %v2692 = vmul.f32 %v1668, %v2355
    %v2693 = vmul.f32 %v1669, %v2357
    %v2694 = vmul.f32 %v1670, %v2359
    %v2695 = vmul.f32 %v1671, %v2361
    %v2696 = vmul.f32 %v1672, %v2363
    %v2697 = vmul.f32 %v1673, %v2365
    %v2698 = vmul.f32 %v1674, %v2367
    %v2699 = vmul.f32 %v1675, %v2369
    %v2700 = vmul.f32 %v1676, %v2371
    %v2701 = vmul.f32 %v1677, %v2373
    %v2702 = vmul.f32 %v1678, %v2375
    %v2703 = vmul.f32 %v1679, %v2377
    %v2704 = vmul.f32 %v1680, %v2379
    %v2705 = vmul.f32 %v1681, %v2381
    %v2706 = vmul.f32 %v1682, %v2383
    %v2707 = vmul.f32 %v1683, %v2385
    %v2708 = vmul.f32 %v1684, %v2387
    %v2709 = vmul.f32 %v1685, %v2389
    %v2710 = vmul.f32 %v1686, %v2391
    %v2711 = vmul.f32 %v1687, %v2393
    %v2712 = vmul.f32 %v1688, %v2395
    %v2713 = vmul.f32 %v1689, %v2397
    %v2714 = vmul.f32 %v1690, %v2399
    %v2715 = vmul.f32 %v1691, %v2401
    %v2716 = vmul.f32 %v1692, %v2403
    %v2717 = vmul.f32 %v1693, %v2405
    %v2718 = vmul.f32 %v1694, %v2407
    %v2719 = vmul.f32 %v1695, %v2409
    %v2720 = vmul.f32 %v1696, %v2411
    %v2721 = vmul.f32 %v1697, %v2413
    %v2722 = vmul.f32 %v1698, %v2415
    %v2723 = vmul.f32 %v1699, %v2417
    %v2724 = vmul.f32 %v1700, %v2419
    %v2725 = vmul.f32 %v1701, %v2421
    %v2726 = vmul.f32 %v1702, %v2423
    %v2727 = vmul.f32 %v1703, %v2425
    %v2728 = vmul.f32 %v1704, %v2427
    %v2729 = vmul.f32 %v1705, %v2429
    %v2730 = vmul.f32 %v1706, %v2431
    %v2731 = vmul.f32 %v1707, %v2433
    %v2732 = vmul.f32 %v1708, %v2435
    %v2733 = vmul.f32 %v1709, %v2437
    %v2734 = vmul.f32 %v1710, %v2439
    %v2735 = vmul.f32 %v1711, %v2441
    %v2736 = vmul.f32 %v1712, %v2443
    %v2737 = vmul.f32 %v1713, %v2445
    %v2738 = vmul.f32 %v1714, %v2447
    %v2739 = vmul.f32 %v1715, %v2449
    %v2740 = vmul.f32 %v1716, %v2451
    %v2741 = vmul.f32 %v1717, %v2453
    %v2742 = vmul.f32 %v1718, %v2455
    %v2743 = vmul.f32 %v1719, %v2457
    %v2744 = vmul.f32 %v1720, %v2459
    %v2745 = vmul.f32 %v1721, %v2461
    %v2746 = vmul.f32 %v1722, %v2463
    %v2747 = vmul.f32 %v1723, %v2465
    %v2748 = vmul.f32 %v1724, %v2467
    %v2749 = vmul.f32 %v1725, %v2469
    %v2750 = vmul.f32 %v1726, %v2471
    %v2751 = vmul.f32 %v1727, %v2473
    %v2752 = vmul.f32 %v1728, %v2475
    %v2753 = vmul.f32 %v1729, %v2477
    %v2754 = vmul.f32 %v1730, %v2479
    %v2755 = vmul.f32 %v1731, %v2481
    %v2756 = vmul.f32 %v1732, %v2483
    %v2757 = vmul.f32 %v1733, %v2485
    %v2758 = vmul.f32 %v1734, %v2487
    %v2759 = vmul.f32 %v1735, %v2489
    %v2760 = vmul.f32 %v1736, %v2491
    %v2761 = vmul.f32 %v1737, %v2493
    %v2762 = vmul.f32 %v1738, %v2495
    %v2763 = vmul.f32 %v1739, %v2497
    %v2764 = vmul.f32 %v1740, %v2499
    %v2765 = vmul.f32 %v1741, %v2501
    %v2766 = vmul.f32 %v1742, %v2503
    %v2767 = vmul.f32 %v1743, %v2505
    %v2768 = vmul.f32 %v1744, %v2507
    %v2769 = vmul.f32 %v1745, %v2509
    %v2770 = vmul.f32 %v1746, %v2511
    %v2771 = vmul.f32 %v1747, %v2513
    %v2772 = vmul.f32 %v1748, %v2515
    %v2773 = vmul.f32 %v1749, %v2517
    %v2774 = vld [vmem:[#allocation2] sm:$0xff]
    %v2775 = vmul.f32 %v2518, %v156
    %v2776 = vmul.f32 %v2519, %v157
    %v2777 = vmul.f32 %v2520, %v158
    %v2778 = vmul.f32 %v2521, %v159
    %v2779 = vmul.f32 %v2522, %v160
    %v2780 = vmul.f32 %v2523, %v161
    %v2781 = vmul.f32 %v2524, %v162
    %v2782 = vmul.f32 %v2525, %v163
    %v2783 = vmul.f32 %v2526, %v164
    %v2784 = vmul.f32 %v2527, %v165
    %v2785 = vmul.f32 %v2528, %v166
    %v2786 = vmul.f32 %v2529, %v167
    %v2787 = vmul.f32 %v2530, %v168
    %v2788 = vmul.f32 %v2531, %v169
    %v2789 = vmul.f32 %v2532, %v170
    %v2790 = vmul.f32 %v2533, %v171
    %v2791 = vmul.f32 %v2534, %v172
    %v2792 = vmul.f32 %v2535, %v173
    %v2793 = vmul.f32 %v2536, %v174
    %v2794 = vmul.f32 %v2537, %v175
    %v2795 = vmul.f32 %v2538, %v176
    %v2796 = vmul.f32 %v2539, %v177
    %v2797 = vmul.f32 %v2540, %v178
    %v2798 = vmul.f32 %v2541, %v179
    %v2799 = vmul.f32 %v2542, %v180
    %v2800 = vmul.f32 %v2543, %v181
    %v2801 = vmul.f32 %v2544, %v182
    %v2802 = vmul.f32 %v2545, %v183
    %v2803 = vmul.f32 %v2546, %v184
    %v2804 = vmul.f32 %v2547, %v185
    %v2805 = vmul.f32 %v2548, %v186
    %v2806 = vmul.f32 %v2549, %v187
    %v2807 = vmul.f32 %v2550, %v156
    %v2808 = vmul.f32 %v2551, %v157
    %v2809 = vmul.f32 %v2552, %v158
    %v2810 = vmul.f32 %v2553, %v159
    %v2811 = vmul.f32 %v2554, %v160
    %v2812 = vmul.f32 %v2555, %v161
    %v2813 = vmul.f32 %v2556, %v162
    %v2814 = vmul.f32 %v2557, %v163
    %v2815 = vmul.f32 %v2558, %v164
    %v2816 = vmul.f32 %v2559, %v165
    %v2817 = vmul.f32 %v2560, %v166
    %v2818 = vmul.f32 %v2561, %v167
    %v2819 = vmul.f32 %v2562, %v168
    %v2820 = vmul.f32 %v2563, %v169
    %v2821 = vmul.f32 %v2564, %v170
    %v2822 = vmul.f32 %v2565, %v171
    %v2823 = vmul.f32 %v2566, %v172
    %v2824 = vmul.f32 %v2567, %v173
    %v2825 = vmul.f32 %v2568, %v174
    %v2826 = vmul.f32 %v2569, %v175
    %v2827 = vmul.f32 %v2570, %v176
    %v2828 = vmul.f32 %v2571, %v177
    %v2829 = vmul.f32 %v2572, %v178
    %v2830 = vmul.f32 %v2573, %v179
    %v2831 = vmul.f32 %v2574, %v180
    %v2832 = vmul.f32 %v2575, %v181
    %v2833 = vmul.f32 %v2576, %v182
    %v2834 = vmul.f32 %v2577, %v183
    %v2835 = vmul.f32 %v2578, %v184
    %v2836 = vmul.f32 %v2579, %v185
    %v2837 = vmul.f32 %v2580, %v186
    %v2838 = vmul.f32 %v2581, %v187
    %v2839 = vmul.f32 %v2582, %v156
    %v2840 = vmul.f32 %v2583, %v157
    %v2841 = vmul.f32 %v2584, %v158
    %v2842 = vmul.f32 %v2585, %v159
    %v2843 = vmul.f32 %v2586, %v160
    %v2844 = vmul.f32 %v2587, %v161
    %v2845 = vmul.f32 %v2588, %v162
    %v2846 = vmul.f32 %v2589, %v163
    %v2847 = vmul.f32 %v2590, %v164
    %v2848 = vmul.f32 %v2591, %v165
    %v2849 = vmul.f32 %v2592, %v166
    %v2850 = vmul.f32 %v2593, %v167
    %v2851 = vmul.f32 %v2594, %v168
    %v2852 = vmul.f32 %v2595, %v169
    %v2853 = vmul.f32 %v2596, %v170
    %v2854 = vmul.f32 %v2597, %v171
    %v2855 = vmul.f32 %v2598, %v172
    %v2856 = vmul.f32 %v2599, %v173
    %v2857 = vmul.f32 %v2600, %v174
    %v2858 = vmul.f32 %v2601, %v175
    %v2859 = vmul.f32 %v2602, %v176
    %v2860 = vmul.f32 %v2603, %v177
    %v2861 = vmul.f32 %v2604, %v178
    %v2862 = vmul.f32 %v2605, %v179
    %v2863 = vmul.f32 %v2606, %v180
    %v2864 = vmul.f32 %v2607, %v181
    %v2865 = vmul.f32 %v2608, %v182
    %v2866 = vmul.f32 %v2609, %v183
    %v2867 = vmul.f32 %v2610, %v184
    %v2868 = vmul.f32 %v2611, %v185
    %v2869 = vmul.f32 %v2612, %v186
    %v2870 = vmul.f32 %v2613, %v187
    %v2871 = vmul.f32 %v2614, %v156
    %v2872 = vmul.f32 %v2615, %v157
    %v2873 = vmul.f32 %v2616, %v158
    %v2874 = vmul.f32 %v2617, %v159
    %v2875 = vmul.f32 %v2618, %v160
    %v2876 = vmul.f32 %v2619, %v161
    %v2877 = vmul.f32 %v2620, %v162
    %v2878 = vmul.f32 %v2621, %v163
    %v2879 = vmul.f32 %v2622, %v164
    %v2880 = vmul.f32 %v2623, %v165
    %v2881 = vmul.f32 %v2624, %v166
    %v2882 = vmul.f32 %v2625, %v167
    %v2883 = vmul.f32 %v2626, %v168
    %v2884 = vmul.f32 %v2627, %v169
    %v2885 = vmul.f32 %v2628, %v170
    %v2886 = vmul.f32 %v2629, %v171
    %v2887 = vmul.f32 %v2630, %v172
    %v2888 = vmul.f32 %v2631, %v173
    %v2889 = vmul.f32 %v2632, %v174
    %v2890 = vmul.f32 %v2633, %v175
    %v2891 = vmul.f32 %v2634, %v176
    %v2892 = vmul.f32 %v2635, %v177
    %v2893 = vmul.f32 %v2636, %v178
    %v2894 = vmul.f32 %v2637, %v179
    %v2895 = vmul.f32 %v2638, %v180
    %v2896 = vmul.f32 %v2639, %v181
    %v2897 = vmul.f32 %v2640, %v182
    %v2898 = vmul.f32 %v2641, %v183
    %v2899 = vmul.f32 %v2642, %v184
    %v2900 = vmul.f32 %v2643, %v185
    %v2901 = vmul.f32 %v2644, %v186
    %v2902 = vmul.f32 %v2645, %v187
    %v2903 = vmul.f32 %v2646, %v156
    %v2904 = vmul.f32 %v2647, %v157
    %v2905 = vmul.f32 %v2648, %v158
    %v2906 = vmul.f32 %v2649, %v159
    %v2907 = vmul.f32 %v2650, %v160
    %v2908 = vmul.f32 %v2651, %v161
    %v2909 = vmul.f32 %v2652, %v162
    %v2910 = vmul.f32 %v2653, %v163
    %v2911 = vmul.f32 %v2654, %v164
    %v2912 = vmul.f32 %v2655, %v165
    %v2913 = vmul.f32 %v2656, %v166
    %v2914 = vmul.f32 %v2657, %v167
    %v2915 = vmul.f32 %v2658, %v168
    %v2916 = vmul.f32 %v2659, %v169
    %v2917 = vmul.f32 %v2660, %v170
    %v2918 = vmul.f32 %v2661, %v171
    %v2919 = vmul.f32 %v2662, %v172
    %v2920 = vmul.f32 %v2663, %v173
    %v2921 = vmul.f32 %v2664, %v174
    %v2922 = vmul.f32 %v2665, %v175
    %v2923 = vmul.f32 %v2666, %v176
    %v2924 = vmul.f32 %v2667, %v177
    %v2925 = vmul.f32 %v2668, %v178
    %v2926 = vmul.f32 %v2669, %v179
    %v2927 = vmul.f32 %v2670, %v180
    %v2928 = vmul.f32 %v2671, %v181
    %v2929 = vmul.f32 %v2672, %v182
    %v2930 = vmul.f32 %v2673, %v183
    %v2931 = vmul.f32 %v2674, %v184
    %v2932 = vmul.f32 %v2675, %v185
    %v2933 = vmul.f32 %v2676, %v186
    %v2934 = vmul.f32 %v2677, %v187
    %v2935 = vmul.f32 %v2678, %v156
    %v2936 = vmul.f32 %v2679, %v157
    %v2937 = vmul.f32 %v2680, %v158
    %v2938 = vmul.f32 %v2681, %v159
    %v2939 = vmul.f32 %v2682, %v160
    %v2940 = vmul.f32 %v2683, %v161
    %v2941 = vmul.f32 %v2684, %v162
    %v2942 = vmul.f32 %v2685, %v163
    %v2943 = vmul.f32 %v2686, %v164
    %v2944 = vmul.f32 %v2687, %v165
    %v2945 = vmul.f32 %v2688, %v166
    %v2946 = vmul.f32 %v2689, %v167
    %v2947 = vmul.f32 %v2690, %v168
    %v2948 = vmul.f32 %v2691, %v169
    %v2949 = vmul.f32 %v2692, %v170
    %v2950 = vmul.f32 %v2693, %v171
    %v2951 = vmul.f32 %v2694, %v172
    %v2952 = vmul.f32 %v2695, %v173
    %v2953 = vmul.f32 %v2696, %v174
    %v2954 = vmul.f32 %v2697, %v175
    %v2955 = vmul.f32 %v2698, %v176
    %v2956 = vmul.f32 %v2699, %v177
    %v2957 = vmul.f32 %v2700, %v178
    %v2958 = vmul.f32 %v2701, %v179
    %v2959 = vmul.f32 %v2702, %v180
    %v2960 = vmul.f32 %v2703, %v181
    %v2961 = vmul.f32 %v2704, %v182
    %v2962 = vmul.f32 %v2705, %v183
    %v2963 = vmul.f32 %v2706, %v184
    %v2964 = vmul.f32 %v2707, %v185
    %v2965 = vmul.f32 %v2708, %v186
    %v2966 = vmul.f32 %v2709, %v187
    %v2967 = vmul.f32 %v2710, %v156
    %v2968 = vmul.f32 %v2711, %v157
    %v2969 = vmul.f32 %v2712, %v158
    %v2970 = vmul.f32 %v2713, %v159
    %v2971 = vmul.f32 %v2714, %v160
    %v2972 = vmul.f32 %v2715, %v161
    %v2973 = vmul.f32 %v2716, %v162
    %v2974 = vmul.f32 %v2717, %v163
    %v2975 = vmul.f32 %v2718, %v164
    %v2976 = vmul.f32 %v2719, %v165
    %v2977 = vmul.f32 %v2720, %v166
    %v2978 = vmul.f32 %v2721, %v167
    %v2979 = vmul.f32 %v2722, %v168
    %v2980 = vmul.f32 %v2723, %v169
    %v2981 = vmul.f32 %v2724, %v170
    %v2982 = vmul.f32 %v2725, %v171
    %v2983 = vmul.f32 %v2726, %v172
    %v2984 = vmul.f32 %v2727, %v173
    %v2985 = vmul.f32 %v2728, %v174
    %v2986 = vmul.f32 %v2729, %v175
    %v2987 = vmul.f32 %v2730, %v176
    %v2988 = vmul.f32 %v2731, %v177
    %v2989 = vmul.f32 %v2732, %v178
    %v2990 = vmul.f32 %v2733, %v179
    %v2991 = vmul.f32 %v2734, %v180
    %v2992 = vmul.f32 %v2735, %v181
    %v2993 = vmul.f32 %v2736, %v182
    %v2994 = vmul.f32 %v2737, %v183
    %v2995 = vmul.f32 %v2738, %v184
    %v2996 = vmul.f32 %v2739, %v185
    %v2997 = vmul.f32 %v2740, %v186
    %v2998 = vmul.f32 %v2741, %v187
    %v2999 = vmul.f32 %v2742, %v156
    %v3000 = vmul.f32 %v2743, %v157
    %v3001 = vmul.f32 %v2744, %v158
    %v3002 = vmul.f32 %v2745, %v159
    %v3003 = vmul.f32 %v2746, %v160
    %v3004 = vmul.f32 %v2747, %v161
    %v3005 = vmul.f32 %v2748, %v162
    %v3006 = vmul.f32 %v2749, %v163
    %v3007 = vmul.f32 %v2750, %v164
    %v3008 = vmul.f32 %v2751, %v165
    %v3009 = vmul.f32 %v2752, %v166
    %v3010 = vmul.f32 %v2753, %v167
    %v3011 = vmul.f32 %v2754, %v168
    %v3012 = vmul.f32 %v2755, %v169
    %v3013 = vmul.f32 %v2756, %v170
    %v3014 = vmul.f32 %v2757, %v171
    %v3015 = vmul.f32 %v2758, %v172
    %v3016 = vmul.f32 %v2759, %v173
    %v3017 = vmul.f32 %v2760, %v174
    %v3018 = vmul.f32 %v2761, %v175
    %v3019 = vmul.f32 %v2762, %v176
    %v3020 = vmul.f32 %v2763, %v177
    %v3021 = vmul.f32 %v2764, %v178
    %v3022 = vmul.f32 %v2765, %v179
    %v3023 = vmul.f32 %v2766, %v180
    %v3024 = vmul.f32 %v2767, %v181
    %v3025 = vmul.f32 %v2768, %v182
    %v3026 = vmul.f32 %v2769, %v183
    %v3027 = vmul.f32 %v2770, %v184
    %v3028 = vmul.f32 %v2771, %v185
    %v3029 = vmul.f32 %v2772, %v186
    %v3030 = vmul.f32 %v2773, %v187
    %v3031 = vadd.f32 %v2775, %v2776
    %3032 = vadd.xlane.f32.xlu0 %v3031
    %v3033 = vpop.xlane.xlu0 %3032
    %v3034 = vadd.f32 %v2777, %v2778
    %3035 = vadd.xlane.f32.xlu0 %v3034
    %v3036 = vpop.xlane.xlu0 %3035
    %v3037 = vadd.f32 %v2779, %v2780
    %3038 = vadd.xlane.f32.xlu0 %v3037
    %v3039 = vpop.xlane.xlu0 %3038
    %v3040 = vadd.f32 %v2781, %v2782
    %3041 = vadd.xlane.f32.xlu0 %v3040
    %v3042 = vpop.xlane.xlu0 %3041
    %v3043 = vadd.f32 %v2783, %v2784
    %3044 = vadd.xlane.f32.xlu0 %v3043
    %v3045 = vpop.xlane.xlu0 %3044
    %v3046 = vadd.f32 %v2785, %v2786
    %3047 = vadd.xlane.f32.xlu0 %v3046
    %v3048 = vpop.xlane.xlu0 %3047
    %v3049 = vadd.f32 %v2787, %v2788
    %3050 = vadd.xlane.f32.xlu0 %v3049
    %v3051 = vpop.xlane.xlu0 %3050
    %v3052 = vadd.f32 %v2789, %v2790
    %3053 = vadd.xlane.f32.xlu0 %v3052
    %v3054 = vpop.xlane.xlu0 %3053
    %v3055 = vadd.f32 %v2791, %v2792
    %3056 = vadd.xlane.f32.xlu0 %v3055
    %v3057 = vpop.xlane.xlu0 %3056
    %v3058 = vadd.f32 %v2793, %v2794
    %3059 = vadd.xlane.f32.xlu0 %v3058
    %v3060 = vpop.xlane.xlu0 %3059
    %v3061 = vadd.f32 %v2795, %v2796
    %3062 = vadd.xlane.f32.xlu0 %v3061
    %v3063 = vpop.xlane.xlu0 %3062
    %v3064 = vadd.f32 %v2797, %v2798
    %3065 = vadd.xlane.f32.xlu0 %v3064
    %v3066 = vpop.xlane.xlu0 %3065
    %v3067 = vadd.f32 %v2799, %v2800
    %3068 = vadd.xlane.f32.xlu0 %v3067
    %v3069 = vpop.xlane.xlu0 %3068
    %v3070 = vadd.f32 %v2801, %v2802
    %3071 = vadd.xlane.f32.xlu0 %v3070
    %v3072 = vpop.xlane.xlu0 %3071
    %v3073 = vadd.f32 %v2803, %v2804
    %3074 = vadd.xlane.f32.xlu0 %v3073
    %v3075 = vpop.xlane.xlu0 %3074
    %v3076 = vadd.f32 %v2805, %v2806
    %3077 = vadd.xlane.f32.xlu0 %v3076
    %v3078 = vpop.xlane.xlu0 %3077
    %v3079 = vadd.f32 %v2807, %v2808
    %3080 = vadd.xlane.f32.xlu0 %v3079
    %v3081 = vpop.xlane.xlu0 %3080
    %v3082 = vadd.f32 %v2809, %v2810
    %3083 = vadd.xlane.f32.xlu0 %v3082
    %v3084 = vpop.xlane.xlu0 %3083
    %v3085 = vadd.f32 %v2811, %v2812
    %3086 = vadd.xlane.f32.xlu0 %v3085
    %v3087 = vpop.xlane.xlu0 %3086
    %v3088 = vadd.f32 %v2813, %v2814
    %3089 = vadd.xlane.f32.xlu0 %v3088
    %v3090 = vpop.xlane.xlu0 %3089
    %v3091 = vadd.f32 %v2815, %v2816
    %3092 = vadd.xlane.f32.xlu0 %v3091
    %v3093 = vpop.xlane.xlu0 %3092
    %v3094 = vadd.f32 %v2817, %v2818
    %3095 = vadd.xlane.f32.xlu0 %v3094
    %v3096 = vpop.xlane.xlu0 %3095
    %v3097 = vadd.f32 %v2819, %v2820
    %3098 = vadd.xlane.f32.xlu0 %v3097
    %v3099 = vpop.xlane.xlu0 %3098
    %v3100 = vadd.f32 %v2821, %v2822
    %3101 = vadd.xlane.f32.xlu0 %v3100
    %v3102 = vpop.xlane.xlu0 %3101
    %v3103 = vadd.f32 %v2823, %v2824
    %3104 = vadd.xlane.f32.xlu0 %v3103
    %v3105 = vpop.xlane.xlu0 %3104
    %v3106 = vadd.f32 %v2825, %v2826
    %3107 = vadd.xlane.f32.xlu0 %v3106
    %v3108 = vpop.xlane.xlu0 %3107
    %v3109 = vadd.f32 %v2827, %v2828
    %3110 = vadd.xlane.f32.xlu0 %v3109
    %v3111 = vpop.xlane.xlu0 %3110
    %v3112 = vadd.f32 %v2829, %v2830
    %3113 = vadd.xlane.f32.xlu0 %v3112
    %v3114 = vpop.xlane.xlu0 %3113
    %v3115 = vadd.f32 %v2831, %v2832
    %3116 = vadd.xlane.f32.xlu0 %v3115
    %v3117 = vpop.xlane.xlu0 %3116
    %v3118 = vadd.f32 %v2833, %v2834
    %3119 = vadd.xlane.f32.xlu0 %v3118
    %v3120 = vpop.xlane.xlu0 %3119
    %v3121 = vadd.f32 %v2835, %v2836
    %3122 = vadd.xlane.f32.xlu0 %v3121
    %v3123 = vpop.xlane.xlu0 %3122
    %v3124 = vadd.f32 %v2837, %v2838
    %3125 = vadd.xlane.f32.xlu0 %v3124
    %v3126 = vpop.xlane.xlu0 %3125
    %v3127 = vadd.f32 %v2839, %v2840
    %3128 = vadd.xlane.f32.xlu0 %v3127
    %v3129 = vpop.xlane.xlu0 %3128
    %v3130 = vadd.f32 %v2841, %v2842
    %3131 = vadd.xlane.f32.xlu0 %v3130
    %v3132 = vpop.xlane.xlu0 %3131
    %v3133 = vadd.f32 %v2843, %v2844
    %3134 = vadd.xlane.f32.xlu0 %v3133
    %v3135 = vpop.xlane.xlu0 %3134
    %v3136 = vadd.f32 %v2845, %v2846
    %3137 = vadd.xlane.f32.xlu0 %v3136
    %v3138 = vpop.xlane.xlu0 %3137
    %v3139 = vadd.f32 %v2847, %v2848
    %3140 = vadd.xlane.f32.xlu0 %v3139
    %v3141 = vpop.xlane.xlu0 %3140
    %v3142 = vadd.f32 %v2849, %v2850
    %3143 = vadd.xlane.f32.xlu0 %v3142
    %v3144 = vpop.xlane.xlu0 %3143
    %v3145 = vadd.f32 %v2851, %v2852
    %3146 = vadd.xlane.f32.xlu0 %v3145
    %v3147 = vpop.xlane.xlu0 %3146
    %v3148 = vadd.f32 %v2853, %v2854
    %3149 = vadd.xlane.f32.xlu0 %v3148
    %v3150 = vpop.xlane.xlu0 %3149
    %v3151 = vadd.f32 %v2855, %v2856
    %3152 = vadd.xlane.f32.xlu0 %v3151
    %v3153 = vpop.xlane.xlu0 %3152
    %v3154 = vadd.f32 %v2857, %v2858
    %3155 = vadd.xlane.f32.xlu0 %v3154
    %v3156 = vpop.xlane.xlu0 %3155
    %v3157 = vadd.f32 %v2859, %v2860
    %3158 = vadd.xlane.f32.xlu0 %v3157
    %v3159 = vpop.xlane.xlu0 %3158
    %v3160 = vadd.f32 %v2861, %v2862
    %3161 = vadd.xlane.f32.xlu0 %v3160
    %v3162 = vpop.xlane.xlu0 %3161
    %v3163 = vadd.f32 %v2863, %v2864
    %3164 = vadd.xlane.f32.xlu0 %v3163
    %v3165 = vpop.xlane.xlu0 %3164
    %v3166 = vadd.f32 %v2865, %v2866
    %3167 = vadd.xlane.f32.xlu0 %v3166
    %v3168 = vpop.xlane.xlu0 %3167
    %v3169 = vadd.f32 %v2867, %v2868
    %3170 = vadd.xlane.f32.xlu0 %v3169
    %v3171 = vpop.xlane.xlu0 %3170
    %v3172 = vadd.f32 %v2869, %v2870
    %3173 = vadd.xlane.f32.xlu0 %v3172
    %v3174 = vpop.xlane.xlu0 %3173
    %v3175 = vadd.f32 %v2871, %v2872
    %3176 = vadd.xlane.f32.xlu0 %v3175
    %v3177 = vpop.xlane.xlu0 %3176
    %v3178 = vadd.f32 %v2873, %v2874
    %3179 = vadd.xlane.f32.xlu0 %v3178
    %v3180 = vpop.xlane.xlu0 %3179
    %v3181 = vadd.f32 %v2875, %v2876
    %3182 = vadd.xlane.f32.xlu0 %v3181
    %v3183 = vpop.xlane.xlu0 %3182
    %v3184 = vadd.f32 %v2877, %v2878
    %3185 = vadd.xlane.f32.xlu0 %v3184
    %v3186 = vpop.xlane.xlu0 %3185
    %v3187 = vadd.f32 %v2879, %v2880
    %3188 = vadd.xlane.f32.xlu0 %v3187
    %v3189 = vpop.xlane.xlu0 %3188
    %v3190 = vadd.f32 %v2881, %v2882
    %3191 = vadd.xlane.f32.xlu0 %v3190
    %v3192 = vpop.xlane.xlu0 %3191
    %v3193 = vadd.f32 %v2883, %v2884
    %3194 = vadd.xlane.f32.xlu0 %v3193
    %v3195 = vpop.xlane.xlu0 %3194
    %v3196 = vadd.f32 %v2885, %v2886
    %3197 = vadd.xlane.f32.xlu0 %v3196
    %v3198 = vpop.xlane.xlu0 %3197
    %v3199 = vadd.f32 %v2887, %v2888
    %3200 = vadd.xlane.f32.xlu0 %v3199
    %v3201 = vpop.xlane.xlu0 %3200
    %v3202 = vadd.f32 %v2889, %v2890
    %3203 = vadd.xlane.f32.xlu0 %v3202
    %v3204 = vpop.xlane.xlu0 %3203
    %v3205 = vadd.f32 %v2891, %v2892
    %3206 = vadd.xlane.f32.xlu0 %v3205
    %v3207 = vpop.xlane.xlu0 %3206
    %v3208 = vadd.f32 %v2893, %v2894
    %3209 = vadd.xlane.f32.xlu0 %v3208
    %v3210 = vpop.xlane.xlu0 %3209
    %v3211 = vadd.f32 %v2895, %v2896
    %3212 = vadd.xlane.f32.xlu0 %v3211
    %v3213 = vpop.xlane.xlu0 %3212
    %v3214 = vadd.f32 %v2897, %v2898
    %3215 = vadd.xlane.f32.xlu0 %v3214
    %v3216 = vpop.xlane.xlu0 %3215
    %v3217 = vadd.f32 %v2899, %v2900
    %3218 = vadd.xlane.f32.xlu0 %v3217
    %v3219 = vpop.xlane.xlu0 %3218
    %v3220 = vadd.f32 %v2901, %v2902
    %3221 = vadd.xlane.f32.xlu0 %v3220
    %v3222 = vpop.xlane.xlu0 %3221
    %v3223 = vadd.f32 %v2903, %v2904
    %3224 = vadd.xlane.f32.xlu0 %v3223
    %v3225 = vpop.xlane.xlu0 %3224
    %v3226 = vadd.f32 %v2905, %v2906
    %3227 = vadd.xlane.f32.xlu0 %v3226
    %v3228 = vpop.xlane.xlu0 %3227
    %v3229 = vadd.f32 %v2907, %v2908
    %3230 = vadd.xlane.f32.xlu0 %v3229
    %v3231 = vpop.xlane.xlu0 %3230
    %v3232 = vadd.f32 %v2909, %v2910
    %3233 = vadd.xlane.f32.xlu0 %v3232
    %v3234 = vpop.xlane.xlu0 %3233
    %v3235 = vadd.f32 %v2911, %v2912
    %3236 = vadd.xlane.f32.xlu0 %v3235
    %v3237 = vpop.xlane.xlu0 %3236
    %v3238 = vadd.f32 %v2913, %v2914
    %3239 = vadd.xlane.f32.xlu0 %v3238
    %v3240 = vpop.xlane.xlu0 %3239
    %v3241 = vadd.f32 %v2915, %v2916
    %3242 = vadd.xlane.f32.xlu0 %v3241
    %v3243 = vpop.xlane.xlu0 %3242
    %v3244 = vadd.f32 %v2917, %v2918
    %3245 = vadd.xlane.f32.xlu0 %v3244
    %v3246 = vpop.xlane.xlu0 %3245
    %v3247 = vadd.f32 %v2919, %v2920
    %3248 = vadd.xlane.f32.xlu0 %v3247
    %v3249 = vpop.xlane.xlu0 %3248
    %v3250 = vadd.f32 %v2921, %v2922
    %3251 = vadd.xlane.f32.xlu0 %v3250
    %v3252 = vpop.xlane.xlu0 %3251
    %v3253 = vadd.f32 %v2923, %v2924
    %3254 = vadd.xlane.f32.xlu0 %v3253
    %v3255 = vpop.xlane.xlu0 %3254
    %v3256 = vadd.f32 %v2925, %v2926
    %3257 = vadd.xlane.f32.xlu0 %v3256
    %v3258 = vpop.xlane.xlu0 %3257
    %v3259 = vadd.f32 %v2927, %v2928
    %3260 = vadd.xlane.f32.xlu0 %v3259
    %v3261 = vpop.xlane.xlu0 %3260
    %v3262 = vadd.f32 %v2929, %v2930
    %3263 = vadd.xlane.f32.xlu0 %v3262
    %v3264 = vpop.xlane.xlu0 %3263
    %v3265 = vadd.f32 %v2931, %v2932
    %3266 = vadd.xlane.f32.xlu0 %v3265
    %v3267 = vpop.xlane.xlu0 %3266
    %v3268 = vadd.f32 %v2933, %v2934
    %3269 = vadd.xlane.f32.xlu0 %v3268
    %v3270 = vpop.xlane.xlu0 %3269
    %v3271 = vadd.f32 %v2935, %v2936
    %3272 = vadd.xlane.f32.xlu0 %v3271
    %v3273 = vpop.xlane.xlu0 %3272
    %v3274 = vadd.f32 %v2937, %v2938
    %3275 = vadd.xlane.f32.xlu0 %v3274
    %v3276 = vpop.xlane.xlu0 %3275
    %v3277 = vadd.f32 %v2939, %v2940
    %3278 = vadd.xlane.f32.xlu0 %v3277
    %v3279 = vpop.xlane.xlu0 %3278
    %v3280 = vadd.f32 %v2941, %v2942
    %3281 = vadd.xlane.f32.xlu0 %v3280
    %v3282 = vpop.xlane.xlu0 %3281
    %v3283 = vadd.f32 %v2943, %v2944
    %3284 = vadd.xlane.f32.xlu0 %v3283
    %v3285 = vpop.xlane.xlu0 %3284
    %v3286 = vadd.f32 %v2945, %v2946
    %3287 = vadd.xlane.f32.xlu0 %v3286
    %v3288 = vpop.xlane.xlu0 %3287
    %v3289 = vadd.f32 %v2947, %v2948
    %3290 = vadd.xlane.f32.xlu0 %v3289
    %v3291 = vpop.xlane.xlu0 %3290
    %v3292 = vadd.f32 %v2949, %v2950
    %3293 = vadd.xlane.f32.xlu0 %v3292
    %v3294 = vpop.xlane.xlu0 %3293
    %v3295 = vadd.f32 %v2951, %v2952
    %3296 = vadd.xlane.f32.xlu0 %v3295
    %v3297 = vpop.xlane.xlu0 %3296
    %v3298 = vadd.f32 %v2953, %v2954
    %3299 = vadd.xlane.f32.xlu0 %v3298
    %v3300 = vpop.xlane.xlu0 %3299
    %v3301 = vadd.f32 %v2955, %v2956
    %3302 = vadd.xlane.f32.xlu0 %v3301
    %v3303 = vpop.xlane.xlu0 %3302
    %v3304 = vadd.f32 %v2957, %v2958
    %3305 = vadd.xlane.f32.xlu0 %v3304
    %v3306 = vpop.xlane.xlu0 %3305
    %v3307 = vadd.f32 %v2959, %v2960
    %3308 = vadd.xlane.f32.xlu0 %v3307
    %v3309 = vpop.xlane.xlu0 %3308
    %v3310 = vadd.f32 %v2961, %v2962
    %3311 = vadd.xlane.f32.xlu0 %v3310
    %v3312 = vpop.xlane.xlu0 %3311
    %v3313 = vadd.f32 %v2963, %v2964
    %3314 = vadd.xlane.f32.xlu0 %v3313
    %v3315 = vpop.xlane.xlu0 %3314
    %v3316 = vadd.f32 %v2965, %v2966
    %3317 = vadd.xlane.f32.xlu0 %v3316
    %v3318 = vpop.xlane.xlu0 %3317
    %v3319 = vadd.f32 %v2967, %v2968
    %3320 = vadd.xlane.f32.xlu0 %v3319
    %v3321 = vpop.xlane.xlu0 %3320
    %v3322 = vadd.f32 %v2969, %v2970
    %3323 = vadd.xlane.f32.xlu0 %v3322
    %v3324 = vpop.xlane.xlu0 %3323
    %v3325 = vadd.f32 %v2971, %v2972
    %3326 = vadd.xlane.f32.xlu0 %v3325
    %v3327 = vpop.xlane.xlu0 %3326
    %v3328 = vadd.f32 %v2973, %v2974
    %3329 = vadd.xlane.f32.xlu0 %v3328
    %v3330 = vpop.xlane.xlu0 %3329
    %v3331 = vadd.f32 %v2975, %v2976
    %3332 = vadd.xlane.f32.xlu0 %v3331
    %v3333 = vpop.xlane.xlu0 %3332
    %v3334 = vadd.f32 %v2977, %v2978
    %3335 = vadd.xlane.f32.xlu0 %v3334
    %v3336 = vpop.xlane.xlu0 %3335
    %v3337 = vadd.f32 %v2979, %v2980
    %3338 = vadd.xlane.f32.xlu0 %v3337
    %v3339 = vpop.xlane.xlu0 %3338
    %v3340 = vadd.f32 %v2981, %v2982
    %3341 = vadd.xlane.f32.xlu0 %v3340
    %v3342 = vpop.xlane.xlu0 %3341
    %v3343 = vadd.f32 %v2983, %v2984
    %3344 = vadd.xlane.f32.xlu0 %v3343
    %v3345 = vpop.xlane.xlu0 %3344
    %v3346 = vadd.f32 %v2985, %v2986
    %3347 = vadd.xlane.f32.xlu0 %v3346
    %v3348 = vpop.xlane.xlu0 %3347
    %v3349 = vadd.f32 %v2987, %v2988
    %3350 = vadd.xlane.f32.xlu0 %v3349
    %v3351 = vpop.xlane.xlu0 %3350
    %v3352 = vadd.f32 %v2989, %v2990
    %3353 = vadd.xlane.f32.xlu0 %v3352
    %v3354 = vpop.xlane.xlu0 %3353
    %v3355 = vadd.f32 %v2991, %v2992
    %3356 = vadd.xlane.f32.xlu0 %v3355
    %v3357 = vpop.xlane.xlu0 %3356
    %v3358 = vadd.f32 %v2993, %v2994
    %3359 = vadd.xlane.f32.xlu0 %v3358
    %v3360 = vpop.xlane.xlu0 %3359
    %v3361 = vadd.f32 %v2995, %v2996
    %3362 = vadd.xlane.f32.xlu0 %v3361
    %v3363 = vpop.xlane.xlu0 %3362
    %v3364 = vadd.f32 %v2997, %v2998
    %3365 = vadd.xlane.f32.xlu0 %v3364
    %v3366 = vpop.xlane.xlu0 %3365
    %v3367 = vadd.f32 %v2999, %v3000
    %3368 = vadd.xlane.f32.xlu0 %v3367
    %v3369 = vpop.xlane.xlu0 %3368
    %v3370 = vadd.f32 %v3001, %v3002
    %3371 = vadd.xlane.f32.xlu0 %v3370
    %v3372 = vpop.xlane.xlu0 %3371
    %v3373 = vadd.f32 %v3003, %v3004
    %3374 = vadd.xlane.f32.xlu0 %v3373
    %v3375 = vpop.xlane.xlu0 %3374
    %v3376 = vadd.f32 %v3005, %v3006
    %3377 = vadd.xlane.f32.xlu0 %v3376
    %v3378 = vpop.xlane.xlu0 %3377
    %v3379 = vadd.f32 %v3007, %v3008
    %3380 = vadd.xlane.f32.xlu0 %v3379
    %v3381 = vpop.xlane.xlu0 %3380
    %v3382 = vadd.f32 %v3009, %v3010
    %3383 = vadd.xlane.f32.xlu0 %v3382
    %v3384 = vpop.xlane.xlu0 %3383
    %v3385 = vadd.f32 %v3011, %v3012
    %3386 = vadd.xlane.f32.xlu0 %v3385
    %v3387 = vpop.xlane.xlu0 %3386
    %v3388 = vadd.f32 %v3013, %v3014
    %3389 = vadd.xlane.f32.xlu0 %v3388
    %v3390 = vpop.xlane.xlu0 %3389
    %v3391 = vadd.f32 %v3015, %v3016
    %3392 = vadd.xlane.f32.xlu0 %v3391
    %v3393 = vpop.xlane.xlu0 %3392
    %v3394 = vadd.f32 %v3017, %v3018
    %3395 = vadd.xlane.f32.xlu0 %v3394
    %v3396 = vpop.xlane.xlu0 %3395
    %v3397 = vadd.f32 %v3019, %v3020
    %3398 = vadd.xlane.f32.xlu0 %v3397
    %v3399 = vpop.xlane.xlu0 %3398
    %v3400 = vadd.f32 %v3021, %v3022
    %3401 = vadd.xlane.f32.xlu0 %v3400
    %v3402 = vpop.xlane.xlu0 %3401
    %v3403 = vadd.f32 %v3023, %v3024
    %3404 = vadd.xlane.f32.xlu0 %v3403
    %v3405 = vpop.xlane.xlu0 %3404
    %v3406 = vadd.f32 %v3025, %v3026
    %3407 = vadd.xlane.f32.xlu0 %v3406
    %v3408 = vpop.xlane.xlu0 %3407
    %v3409 = vadd.f32 %v3027, %v3028
    %3410 = vadd.xlane.f32.xlu0 %v3409
    %v3411 = vpop.xlane.xlu0 %3410
    %v3412 = vadd.f32 %v3029, %v3030
    %3413 = vadd.xlane.f32.xlu0 %v3412
    %v3414 = vpop.xlane.xlu0 %3413
    %v3543 = vlaneseq
    %v3544 = vand.u32 %v3543, 127
    %v3545 = vperm.slane %v3033, %v3544
    %v3546 = vadd.s32 %v3544, 4294967288
    %v3547 = vperm.slane %v3036, %v3546
    %vm3548 = vcmask 130112
    %v3549 = vsel %vm3548, %v3547, %v3545
    %v3550 = vadd.s32 %v3544, 4294967280
    %v3551 = vperm.slane %v3039, %v3550
    %vm3552 = vcmask 195712
    %v3553 = vsel %vm3552, %v3551, %v3549
    %v3554 = vadd.s32 %v3544, 4294967272
    %v3555 = vperm.slane %v3042, %v3554
    %vm3556 = vcmask 261312
    %v3557 = vsel %vm3556, %v3555, %v3553
    %v3558 = vadd.s32 %v3544, 4294967264
    %v3559 = vperm.slane %v3045, %v3558
    %vm3560 = vcmask 326912
    %v3561 = vsel %vm3560, %v3559, %v3557
    %v3562 = vadd.s32 %v3544, 4294967256
    %v3563 = vperm.slane %v3048, %v3562
    %vm3564 = vcmask 392512
    %v3565 = vsel %vm3564, %v3563, %v3561
    %v3566 = vadd.s32 %v3544, 4294967248
    %v3567 = vperm.slane %v3051, %v3566
    %vm3568 = vcmask 458112
    %v3569 = vsel %vm3568, %v3567, %v3565
    %v3570 = vadd.s32 %v3544, 4294967240
    %v3571 = vperm.slane %v3054, %v3570
    %vm3572 = vcmask 523712
    %v3573 = vsel %vm3572, %v3571, %v3569
    %v3574 = vadd.s32 %v3544, 4294967232
    %v3575 = vperm.slane %v3057, %v3574
    %vm3576 = vcmask 589312
    %v3577 = vsel %vm3576, %v3575, %v3573
    %v3578 = vadd.s32 %v3544, 4294967224
    %v3579 = vperm.slane %v3060, %v3578
    %vm3580 = vcmask 654912
    %v3581 = vsel %vm3580, %v3579, %v3577
    %v3582 = vadd.s32 %v3544, 4294967216
    %v3583 = vperm.slane %v3063, %v3582
    %vm3584 = vcmask 720512
    %v3585 = vsel %vm3584, %v3583, %v3581
    %v3586 = vadd.s32 %v3544, 4294967208
    %v3587 = vperm.slane %v3066, %v3586
    %vm3588 = vcmask 786112
    %v3589 = vsel %vm3588, %v3587, %v3585
    %v3590 = vadd.s32 %v3544, 4294967200
    %v3591 = vperm.slane %v3069, %v3590
    %vm3592 = vcmask 851712
    %v3593 = vsel %vm3592, %v3591, %v3589
    %v3594 = vadd.s32 %v3544, 4294967192
    %v3595 = vperm.slane %v3072, %v3594
    %vm3596 = vcmask 917312
    %v3597 = vsel %vm3596, %v3595, %v3593
    %v3598 = vadd.s32 %v3544, 4294967184
    %v3599 = vperm.slane %v3075, %v3598
    %vm3600 = vcmask 982912
    %v3601 = vsel %vm3600, %v3599, %v3597
    %v3602 = vadd.s32 %v3544, 4294967176
    %v3603 = vperm.slane %v3078, %v3602
    %vm3604 = vcmask 1048512
    %v3605 = vsel %vm3604, %v3603, %v3601
    %v3606 = vperm.slane %v3081, %v3544
    %v3607 = vperm.slane %v3084, %v3546
    %v3608 = vsel %vm3548, %v3607, %v3606
    %v3609 = vperm.slane %v3087, %v3550
    %v3610 = vsel %vm3552, %v3609, %v3608
    %v3611 = vperm.slane %v3090, %v3554
    %v3612 = vsel %vm3556, %v3611, %v3610
    %v3613 = vperm.slane %v3093, %v3558
    %v3614 = vsel %vm3560, %v3613, %v3612
    %v3615 = vperm.slane %v3096, %v3562
    %v3616 = vsel %vm3564, %v3615, %v3614
    %v3617 = vperm.slane %v3099, %v3566
    %v3618 = vsel %vm3568, %v3617, %v3616
    %v3619 = vperm.slane %v3102, %v3570
    %v3620 = vsel %vm3572, %v3619, %v3618
    %v3621 = vperm.slane %v3105, %v3574
    %v3622 = vsel %vm3576, %v3621, %v3620
    %v3623 = vperm.slane %v3108, %v3578
    %v3624 = vsel %vm3580, %v3623, %v3622
    %v3625 = vperm.slane %v3111, %v3582
    %v3626 = vsel %vm3584, %v3625, %v3624
    %v3627 = vperm.slane %v3114, %v3586
    %v3628 = vsel %vm3588, %v3627, %v3626
    %v3629 = vperm.slane %v3117, %v3590
    %v3630 = vsel %vm3592, %v3629, %v3628
    %v3631 = vperm.slane %v3120, %v3594
    %v3632 = vsel %vm3596, %v3631, %v3630
    %v3633 = vperm.slane %v3123, %v3598
    %v3634 = vsel %vm3600, %v3633, %v3632
    %v3635 = vperm.slane %v3126, %v3602
    %v3636 = vsel %vm3604, %v3635, %v3634
    %v3637 = vperm.slane %v3129, %v3544
    %v3638 = vperm.slane %v3132, %v3546
    %v3639 = vsel %vm3548, %v3638, %v3637
    %v3640 = vperm.slane %v3135, %v3550
    %v3641 = vsel %vm3552, %v3640, %v3639
    %v3642 = vperm.slane %v3138, %v3554
    %v3643 = vsel %vm3556, %v3642, %v3641
    %v3644 = vperm.slane %v3141, %v3558
    %v3645 = vsel %vm3560, %v3644, %v3643
    %v3646 = vperm.slane %v3144, %v3562
    %v3647 = vsel %vm3564, %v3646, %v3645
    %v3648 = vperm.slane %v3147, %v3566
    %v3649 = vsel %vm3568, %v3648, %v3647
    %v3650 = vperm.slane %v3150, %v3570
    %v3651 = vsel %vm3572, %v3650, %v3649
    %v3652 = vperm.slane %v3153, %v3574
    %v3653 = vsel %vm3576, %v3652, %v3651
    %v3654 = vperm.slane %v3156, %v3578
    %v3655 = vsel %vm3580, %v3654, %v3653
    %v3656 = vperm.slane %v3159, %v3582
    %v3657 = vsel %vm3584, %v3656, %v3655
    %v3658 = vperm.slane %v3162, %v3586
    %v3659 = vsel %vm3588, %v3658, %v3657
    %v3660 = vperm.slane %v3165, %v3590
    %v3661 = vsel %vm3592, %v3660, %v3659
    %v3662 = vperm.slane %v3168, %v3594
    %v3663 = vsel %vm3596, %v3662, %v3661
    %v3664 = vperm.slane %v3171, %v3598
    %v3665 = vsel %vm3600, %v3664, %v3663
    %v3666 = vperm.slane %v3174, %v3602
    %v3667 = vsel %vm3604, %v3666, %v3665
    %v3668 = vperm.slane %v3177, %v3544
    %v3669 = vperm.slane %v3180, %v3546
    %v3670 = vsel %vm3548, %v3669, %v3668
    %v3671 = vperm.slane %v3183, %v3550
    %v3672 = vsel %vm3552, %v3671, %v3670
    %v3673 = vperm.slane %v3186, %v3554
    %v3674 = vsel %vm3556, %v3673, %v3672
    %v3675 = vperm.slane %v3189, %v3558
    %v3676 = vsel %vm3560, %v3675, %v3674
    %v3677 = vperm.slane %v3192, %v3562
    %v3678 = vsel %vm3564, %v3677, %v3676
    %v3679 = vperm.slane %v3195, %v3566
    %v3680 = vsel %vm3568, %v3679, %v3678
    %v3681 = vperm.slane %v3198, %v3570
    %v3682 = vsel %vm3572, %v3681, %v3680
    %v3683 = vperm.slane %v3201, %v3574
    %v3684 = vsel %vm3576, %v3683, %v3682
    %v3685 = vperm.slane %v3204, %v3578
    %v3686 = vsel %vm3580, %v3685, %v3684
    %v3687 = vperm.slane %v3207, %v3582
    %v3688 = vsel %vm3584, %v3687, %v3686
    %v3689 = vperm.slane %v3210, %v3586
    %v3690 = vsel %vm3588, %v3689, %v3688
    %v3691 = vperm.slane %v3213, %v3590
    %v3692 = vsel %vm3592, %v3691, %v3690
    %v3693 = vperm.slane %v3216, %v3594
    %v3694 = vsel %vm3596, %v3693, %v3692
    %v3695 = vperm.slane %v3219, %v3598
    %v3696 = vsel %vm3600, %v3695, %v3694
    %v3697 = vperm.slane %v3222, %v3602
    %v3698 = vsel %vm3604, %v3697, %v3696
    %v3699 = vperm.slane %v3225, %v3544
    %v3700 = vperm.slane %v3228, %v3546
    %v3701 = vsel %vm3548, %v3700, %v3699
    %v3702 = vperm.slane %v3231, %v3550
    %v3703 = vsel %vm3552, %v3702, %v3701
    %v3704 = vperm.slane %v3234, %v3554
    %v3705 = vsel %vm3556, %v3704, %v3703
    %v3706 = vperm.slane %v3237, %v3558
    %v3707 = vsel %vm3560, %v3706, %v3705
    %v3708 = vperm.slane %v3240, %v3562
    %v3709 = vsel %vm3564, %v3708, %v3707
    %v3710 = vperm.slane %v3243, %v3566
    %v3711 = vsel %vm3568, %v3710, %v3709
    %v3712 = vperm.slane %v3246, %v3570
    %v3713 = vsel %vm3572, %v3712, %v3711
    %v3714 = vperm.slane %v3249, %v3574
    %v3715 = vsel %vm3576, %v3714, %v3713
    %v3716 = vperm.slane %v3252, %v3578
    %v3717 = vsel %vm3580, %v3716, %v3715
    %v3718 = vperm.slane %v3255, %v3582
    %v3719 = vsel %vm3584, %v3718, %v3717
    %v3720 = vperm.slane %v3258, %v3586
    %v3721 = vsel %vm3588, %v3720, %v3719
    %v3722 = vperm.slane %v3261, %v3590
    %v3723 = vsel %vm3592, %v3722, %v3721
    %v3724 = vperm.slane %v3264, %v3594
    %v3725 = vsel %vm3596, %v3724, %v3723
    %v3726 = vperm.slane %v3267, %v3598
    %v3727 = vsel %vm3600, %v3726, %v3725
    %v3728 = vperm.slane %v3270, %v3602
    %v3729 = vsel %vm3604, %v3728, %v3727
    %v3730 = vperm.slane %v3273, %v3544
    %v3731 = vperm.slane %v3276, %v3546
    %v3732 = vsel %vm3548, %v3731, %v3730
    %v3733 = vperm.slane %v3279, %v3550
    %v3734 = vsel %vm3552, %v3733, %v3732
    %v3735 = vperm.slane %v3282, %v3554
    %v3736 = vsel %vm3556, %v3735, %v3734
    %v3737 = vperm.slane %v3285, %v3558
    %v3738 = vsel %vm3560, %v3737, %v3736
    %v3739 = vperm.slane %v3288, %v3562
    %v3740 = vsel %vm3564, %v3739, %v3738
    %v3741 = vperm.slane %v3291, %v3566
    %v3742 = vsel %vm3568, %v3741, %v3740
    %v3743 = vperm.slane %v3294, %v3570
    %v3744 = vsel %vm3572, %v3743, %v3742
    %v3745 = vperm.slane %v3297, %v3574
    %v3746 = vsel %vm3576, %v3745, %v3744
    %v3747 = vperm.slane %v3300, %v3578
    %v3748 = vsel %vm3580, %v3747, %v3746
    %v3749 = vperm.slane %v3303, %v3582
    %v3750 = vsel %vm3584, %v3749, %v3748
    %v3751 = vperm.slane %v3306, %v3586
    %v3752 = vsel %vm3588, %v3751, %v3750
    %v3753 = vperm.slane %v3309, %v3590
    %v3754 = vsel %vm3592, %v3753, %v3752
    %v3755 = vperm.slane %v3312, %v3594
    %v3756 = vsel %vm3596, %v3755, %v3754
    %v3757 = vperm.slane %v3315, %v3598
    %v3758 = vsel %vm3600, %v3757, %v3756
    %v3759 = vperm.slane %v3318, %v3602
    %v3760 = vsel %vm3604, %v3759, %v3758
    %v3761 = vperm.slane %v3321, %v3544
    %v3762 = vperm.slane %v3324, %v3546
    %v3763 = vsel %vm3548, %v3762, %v3761
    %v3764 = vperm.slane %v3327, %v3550
    %v3765 = vsel %vm3552, %v3764, %v3763
    %v3766 = vperm.slane %v3330, %v3554
    %v3767 = vsel %vm3556, %v3766, %v3765
    %v3768 = vperm.slane %v3333, %v3558
    %v3769 = vsel %vm3560, %v3768, %v3767
    %v3770 = vperm.slane %v3336, %v3562
    %v3771 = vsel %vm3564, %v3770, %v3769
    %v3772 = vperm.slane %v3339, %v3566
    %v3773 = vsel %vm3568, %v3772, %v3771
    %v3774 = vperm.slane %v3342, %v3570
    %v3775 = vsel %vm3572, %v3774, %v3773
    %v3776 = vperm.slane %v3345, %v3574
    %v3777 = vsel %vm3576, %v3776, %v3775
    %v3778 = vperm.slane %v3348, %v3578
    %v3779 = vsel %vm3580, %v3778, %v3777
    %v3780 = vperm.slane %v3351, %v3582
    %v3781 = vsel %vm3584, %v3780, %v3779
    %v3782 = vperm.slane %v3354, %v3586
    %v3783 = vsel %vm3588, %v3782, %v3781
    %v3784 = vperm.slane %v3357, %v3590
    %v3785 = vsel %vm3592, %v3784, %v3783
    %v3786 = vperm.slane %v3360, %v3594
    %v3787 = vsel %vm3596, %v3786, %v3785
    %v3788 = vperm.slane %v3363, %v3598
    %v3789 = vsel %vm3600, %v3788, %v3787
    %v3790 = vperm.slane %v3366, %v3602
    %v3791 = vsel %vm3604, %v3790, %v3789
    %v3792 = vperm.slane %v3369, %v3544
    %v3793 = vperm.slane %v3372, %v3546
    %v3794 = vsel %vm3548, %v3793, %v3792
    %v3795 = vperm.slane %v3375, %v3550
    %v3796 = vsel %vm3552, %v3795, %v3794
    %v3797 = vperm.slane %v3378, %v3554
    %v3798 = vsel %vm3556, %v3797, %v3796
    %v3799 = vperm.slane %v3381, %v3558
    %v3800 = vsel %vm3560, %v3799, %v3798
    %v3801 = vperm.slane %v3384, %v3562
    %v3802 = vsel %vm3564, %v3801, %v3800
    %v3803 = vperm.slane %v3387, %v3566
    %v3804 = vsel %vm3568, %v3803, %v3802
    %v3805 = vperm.slane %v3390, %v3570
    %v3806 = vsel %vm3572, %v3805, %v3804
    %v3807 = vperm.slane %v3393, %v3574
    %v3808 = vsel %vm3576, %v3807, %v3806
    %v3809 = vperm.slane %v3396, %v3578
    %v3810 = vsel %vm3580, %v3809, %v3808
    %v3811 = vperm.slane %v3399, %v3582
    %v3812 = vsel %vm3584, %v3811, %v3810
    %v3813 = vperm.slane %v3402, %v3586
    %v3814 = vsel %vm3588, %v3813, %v3812
    %v3815 = vperm.slane %v3405, %v3590
    %v3816 = vsel %vm3592, %v3815, %v3814
    %v3817 = vperm.slane %v3408, %v3594
    %v3818 = vsel %vm3596, %v3817, %v3816
    %v3819 = vperm.slane %v3411, %v3598
    %v3820 = vsel %vm3600, %v3819, %v3818
    %v3821 = vperm.slane %v3414, %v3602
    %v3822 = vsel %vm3604, %v3821, %v3820
    %v3823 = vsel %vm673, %v3636, %v3605
    %v3824 = vsel %vm676, %v3667, %v3823
    %v3825 = vsel %vm679, %v3698, %v3824
    %v3826 = vsel %vm682, %v3729, %v3825
    %v3827 = vsel %vm685, %v3760, %v3826
    %v3828 = vsel %vm688, %v3791, %v3827
    %vm3829 = vcmask 1047559
    %v3830 = vsel %vm3829, %v3822, %v3828
    %v3832 = vadd.f32 %v2774, %v3830
    %3833 = vst [vmem:[#allocation2] sm:$0xff] %v3832
    // Predicated region
    $region46: #{tpu_custom_call.1} parent=1 // pred_check
      %p3834 = pneg %p85
    $region47: #{tpu_custom_call.1} parent=1 // pred_check_branch
      %3836 = sbr.rel (%p3834) target = $region49
    $region48: #{tpu_custom_call.1} parent=1 // pred_region
      %v3837 = vld [vmem:[#allocation2] sm:$0xff]
      %v3838 = vmul.f32 %v3837, 0.86732507
      %v3839 = vrot.slane %v3838, 4
      %v3840 = vadd.f32 %v3838, %v3839
      %v3841 = vrot.slane %v3840, 2
      %v3842 = vadd.f32 %v3840, %v3841
      %v3843 = vrot.slane %v3842, 1
      %v3844 = vadd.f32 %v3842, %v3843
      %v3845 = vrcp.pop 8.0
      %v3846 = vmul.f32 8.0, %v3845
      %v3847 = vsub.f32 1.0, %v3846
      %v3848 = vmul.f32 %v3845, %v3847
      %v3849 = vadd.f32 %v3845, %v3848
      %vm3850 = vweird.f32 %v3845
      %v3851 = vsel %vm3850, %v3845, %v3849
      %v3852 = vmul.f32 %v3844, %v3851
      %v3853 = vsub.f32 %v3838, %v3852
      %v3854 = vmul.f32 %v3853, %v3853
      %v3855 = vrot.slane %v3854, 4
      %v3856 = vadd.f32 %v3854, %v3855
      %v3857 = vrot.slane %v3856, 2
      %v3858 = vadd.f32 %v3856, %v3857
      %v3859 = vrot.slane %v3858, 1
      %v3860 = vadd.f32 %v3858, %v3859
      %v3861 = vmul.f32 %v3860, %v3851
      %v3862 = vadd.f32 %v3861, 1e-05
      %v3863 = vrsqrt.pop %v3862
      %v3864 = vmul.f32 %v3863, %v3862
      %v3865 = vmul.f32 %v3864, %v3863
      %v3866 = vmul.f32 0.5, %v3865
      %v3867 = vsub.f32 1.5, %v3866
      %v3868 = vmul.f32 %v3863, %v3867
      %vm3869 = vweird.f32 %v3862
      %vm3870 = vweird.f32 %v3863
      %vm3871 = vmor %vm3869, %vm3870
      %v3872 = vsel %vm3871, %v3863, %v3868
      %v3873 = vmul.f32 %v3853, %v3872
      %v3874 = vld [vmem:[%s4] sm:$0x1]
      %v3876 = vperm.slane %v3874, 0
      %v3878 = vmul.f32 %v3873, %v3876
      %v3879 = vld [vmem:[%s5] sm:$0x1]
      %v3881 = vperm.slane %v3879, 0
      %v3883 = vadd.f32 %v3878, %v3881
      %3884 = vst [vmem:[#allocation11] sm:$0xff] %v3883
    $region49: #{tpu_custom_call.1} parent=1 // pred_fallthru
      _
    // Predicated region
    $region50: #{tpu_custom_call.1} parent=1 // pred_check
      _
    $region51: #{tpu_custom_call.1} parent=1 // pred_check_branch
      %3886 = sbr.rel (0) target = $region53
    $region52: #{tpu_custom_call.1} parent=1 // pred_region
      %3888 = vsyncadd [#allocation5], 0
      %s3890 = sshll.u32 [#allocation11], 4
      %s3891 = int_to_ptr.vmem [resolvable:$true] %s3890
      %s3892 = sshll.u32 %s6, 4
      %s3893 = int_to_ptr.hbm [resolvable:$true] %s3892
      %3895 = dma.vmem_to_hbm [thread:$0]  %s3891, 128, %s3893, [#allocation5]
    $region53: #{tpu_custom_call.1} parent=1 // pred_fallthru
      _
    // Predicated region
    $region54: #{tpu_custom_call.1} parent=1 // pred_check
      _
    $region55: #{tpu_custom_call.1} parent=1 // pred_check_branch
      %3897 = sbr.rel (0) target = $region57
    $region56: #{tpu_custom_call.1} parent=1 // pred_region
      %3899 = dma.done [#allocation5], 128
    $region57: #{tpu_custom_call.1} parent=1 // pred_fallthru
      _
    %3900 = vsyncpa [#allocation4], 1
    %3901 = vsyncpa [#allocation7], 1
    %3902 = vsyncpa [#allocation10], 1
    %3903 = vsyncpa [#allocation5], 1

</llo_original>
